<compile_context>
chip_gen: v6e
topology: v6e:2x2x1
jax: 0.10.0
libtpu: 0.0.40
codegen_flags: <defaults>
</compile_context>

<pallas_src>
import functools

import jax
import jax.numpy as jnp
from jax import lax
from jax.experimental import pallas as pl
from jax.experimental.pallas import tpu as pltpu


# ----------------------------------------------------------------------------
# Fused kernel: projections + masked attention (all heads) + quirk merge + w_o
# ----------------------------------------------------------------------------
def _mha_fused_kernel(xq_ref, xk_ref, xv_ref,
                      wq_ref, bq_ref,
                      wk_ref, bk_ref,
                      wv_ref, bv_ref,
                      wo_ref, bo_ref,
                      o_ref,
                      *, batch, seq, num_heads, head_dim):
    B, S, H, dh = batch, seq, num_heads, head_dim
    BS = B * S
    HBS = H * BS

    # x @ W.T expressed as dot_general contracting the LAST axis of both
    # operands (the MXU consumes the transposed operand natively).
    dn_t = (((1,), (1,)), ((), ()))

    # ---- Full-width projections: one (BS, D) x (D, D) MXU matmul each. ----
    q = lax.dot_general(xq_ref[...], wq_ref[...], dn_t,
                        preferred_element_type=jnp.float32) + bq_ref[...]
    k = lax.dot_general(xk_ref[...], wk_ref[...], dn_t,
                        preferred_element_type=jnp.float32) + bk_ref[...]
    v = lax.dot_general(xv_ref[...], wv_ref[...], dn_t,
                        preferred_element_type=jnp.float32) + bv_ref[...]

    # Strict upper-triangular causal mask (== torch.triu(ones, diagonal=1)).
    row = lax.broadcasted_iota(jnp.int32, (S, S), 0)
    col = lax.broadcasted_iota(jnp.int32, (S, S), 1)
    masked = col > row
    neg_big = jnp.float32(-1e30)    # finite: diagonal never masked, no NaN risk

    # ---- Per-(head, batch) masked attention; blocks kept in (h, b, s) order
    #      (the flat layout that torch's transpose(0,1).contiguous() produces).
    ctx_blocks = []
    for h in range(H):
        for b in range(B):
            qs = q[b * S:(b + 1) * S, h * dh:(h + 1) * dh]      # (S, dh)
            ks = k[b * S:(b + 1) * S, h * dh:(h + 1) * dh]
            vs = v[b * S:(b + 1) * S, h * dh:(h + 1) * dh]
            # scores = q @ k^T  (NOT scaled by sqrt(dh): matches the torch code)
            sc = lax.dot_general(qs, ks, dn_t,
                                 preferred_element_type=jnp.float32)
            sc = jnp.where(masked, neg_big, sc)
            m = jnp.max(sc, axis=-1, keepdims=True)
            e = jnp.exp(sc - m)
            denom = jnp.sum(e, axis=-1, keepdims=True)
            inv = pl.reciprocal(denom, approx=True)              # EUP slot
            inv = inv * (2.0 - denom * inv)                      # Newton -> ~f32 exact
            p = e * inv
            ctx_blocks.append(jnp.dot(p, vs,
                                      preferred_element_type=jnp.float32))
    ctx_all = jnp.concatenate(ctx_blocks, axis=0)                # (H*B*S, dh)

    # ---- torch merge quirk: the flat (H, B, S, dh) buffer viewed as (B*S, D).
    # Column block c of that view is data[t, c*dh:(c+1)*dh] = ctx_all[t*H + c].
    # Gather via exact 0/1 selection matmuls (MXU) instead of value reshapes.
    t_idx = lax.broadcasted_iota(jnp.int32, (BS, HBS), 0)
    r_idx = lax.broadcasted_iota(jnp.int32, (BS, HBS), 1)
    base = r_idx - t_idx * H
    data_blocks = [
        jnp.dot((base == c).astype(jnp.float32), ctx_all,
                preferred_element_type=jnp.float32)
        for c in range(H)
    ]
    data = jnp.concatenate(data_blocks, axis=1)                  # (BS, D)

    # ---- Output projection. ----
    out = lax.dot_general(data, wo_ref[...], dn_t,
                          preferred_element_type=jnp.float32) + bo_ref[...]
    o_ref[...] = out.astype(o_ref.dtype)


# ----------------------------------------------------------------------------
# Wrapper: free host-side reshapes + one pallas_call
# ----------------------------------------------------------------------------
@functools.partial(jax.jit, static_argnames=("num_heads",))
def masked_mha_forward(q, k, v, params, *, num_heads):
    B, S, D = q.shape
    H = num_heads
    dh = D // H
    BS = B * S

    # Free reshapes (no transposes).
    xq = q.reshape(BS, D)
    xk = k.reshape(BS, D)
    xv = v.reshape(BS, D)
    bq = params["b_q"].reshape(1, D)
    bk = params["b_k"].reshape(1, D)
    bv = params["b_v"].reshape(1, D)
    bo = params["b_o"].reshape(1, D)

    kernel = functools.partial(_mha_fused_kernel,
                               batch=B, seq=S, num_heads=H, head_dim=dh)

    x_spec = pl.BlockSpec((BS, D), lambda i: (0, 0))
    w_spec = pl.BlockSpec((D, D), lambda i: (0, 0))
    b_spec = pl.BlockSpec((1, D), lambda i: (0, 0))
    o_spec = pl.BlockSpec((BS, D), lambda i: (0, 0))

    out = pl.pallas_call(
        kernel,
        out_shape=jax.ShapeDtypeStruct((BS, D), jnp.float32),
        grid=(1,),
        in_specs=[x_spec, x_spec, x_spec,
                  w_spec, b_spec, w_spec, b_spec, w_spec, b_spec,
                  w_spec, b_spec],
        out_specs=o_spec,
        compiler_params=pltpu.CompilerParams(
            dimension_semantics=("arbitrary",)),
    )(xq, xk, xv,
      params["w_q"], bq, params["w_k"], bk, params["w_v"], bv,
      params["w_o"], bo)

    # The final `.view(B, S, -1)` of the quirk-merged buffer (free reshape).
    return out.reshape(B, S, D)


# ----------------------------------------------------------------------------
# Pure-JAX reference (mirrors the PyTorch forward, quirks included)
# ----------------------------------------------------------------------------
def masked_mha_reference(q, k, v, params, num_heads):
    B, S, D = q.shape
    H = num_heads
    dh = D // H
    hp = lax.Precision.HIGHEST

    def lin(x, w, b):
        return jnp.einsum("...i,oi->...o", x, w, precision=hp) + b

    query = lin(q, params["w_q"], params["b_q"])
    key = lin(k, params["w_k"], params["b_k"])
    value = lin(v, params["w_v"], params["b_v"])

    def split(x):
        return jnp.transpose(x.reshape(B, S, H, dh), (0, 2, 1, 3))

    query, key, value = split(query), split(key), split(value)
    scores = jnp.einsum("bhqd,bhkd->bhqk", query, key, precision=hp)   # no scaling
    mask = jnp.triu(jnp.ones((S, S)), k=1)[None, None]
    scores = jnp.where(mask == 1, -jnp.inf, scores)
    probs = jax.nn.softmax(scores, axis=-1)
    data = jnp.einsum("bhqk,bhkd->bhqd", probs, value, precision=hp)
    data = jnp.transpose(data, (1, 0, 2, 3)).reshape(B, S, D)          # torch quirk
    return lin(data, params["w_o"], params["b_o"])


# ----------------------------------------------------------------------------
if __name__ == "__main__":
    # Small, TPU-friendly shapes consistent with the module:
    B, S, D, H = 2, 16, 128, 4          # d_model=128, num_heads=4, head_dim=32
    key0 = jax.random.PRNGKey(0)
    ks = jax.random.split(key0, 12)

    scale = 1.0 / jnp.sqrt(jnp.float32(D))
    params = {
        "w_q": jax.random.normal(ks[0], (D, D), jnp.float32) * scale,
        "b_q": jax.random.normal(ks[1], (D,), jnp.float32) * 0.01,
        "w_k": jax.random.normal(ks[2], (D, D), jnp.float32) * scale,
        "b_k": jax.random.normal(ks[3], (D,), jnp.float32) * 0.01,
        "w_v": jax.random.normal(ks[4], (D, D), jnp.float32) * scale,
        "b_v": jax.random.normal(ks[5], (D,), jnp.float32) * 0.01,
        "w_o": jax.random.normal(ks[6], (D, D), jnp.float32) * scale,
        "b_o": jax.random.normal(ks[7], (D,), jnp.float32) * 0.01,
    }

    q = jax.random.normal(ks[8], (B, S, D), jnp.float32)
    k = jax.random.normal(ks[9], (B, S, D), jnp.float32)
    v = jax.random.normal(ks[10], (B, S, D), jnp.float32)

    out = masked_mha_forward(q, k, v, params, num_heads=H)
    out = jax.block_until_ready(out)

    ref = masked_mha_reference(q, k, v, params, H)
    assert out.shape == (B, S, D)
    assert jnp.allclose(out, ref, atol=1e-3, rtol=1e-3), "mismatch vs reference"

    print("KERNEL_OK")
</pallas_src>

<mosaic_0001>
module attributes {stable_mosaic.version = 11 : i64} {
  func.func @_mha_fused_kernel(%arg0: i32, %arg1: memref<32x128xf32, #tpu.memory_space<vmem>>, %arg2: memref<32x128xf32, #tpu.memory_space<vmem>>, %arg3: memref<32x128xf32, #tpu.memory_space<vmem>>, %arg4: memref<128x128xf32, #tpu.memory_space<vmem>>, %arg5: memref<1x128xf32, #tpu.memory_space<vmem>>, %arg6: memref<128x128xf32, #tpu.memory_space<vmem>>, %arg7: memref<1x128xf32, #tpu.memory_space<vmem>>, %arg8: memref<128x128xf32, #tpu.memory_space<vmem>>, %arg9: memref<1x128xf32, #tpu.memory_space<vmem>>, %arg10: memref<128x128xf32, #tpu.memory_space<vmem>>, %arg11: memref<1x128xf32, #tpu.memory_space<vmem>>, %arg12: memref<32x128xf32, #tpu.memory_space<vmem>>) attributes {dimension_semantics = [#tpu.dimension_semantics<arbitrary>], iteration_bounds = array<i64: 1>, scalar_prefetch = 0 : i64, scratch_operands = 0 : i64, tpu.core_type = #tpu.core_type<tc>, window_params = [{pipeline_mode = #tpu.pipeline_mode<synchronous>, transform_indices = @transform_0, window_bounds = array<i64: 32, 128>}, {pipeline_mode = #tpu.pipeline_mode<synchronous>, transform_indices = @transform_1, window_bounds = array<i64: 32, 128>}, {pipeline_mode = #tpu.pipeline_mode<synchronous>, transform_indices = @transform_2, window_bounds = array<i64: 32, 128>}, {pipeline_mode = #tpu.pipeline_mode<synchronous>, transform_indices = @transform_3, window_bounds = array<i64: 128, 128>}, {pipeline_mode = #tpu.pipeline_mode<synchronous>, transform_indices = @transform_4, window_bounds = array<i64: 1, 128>}, {pipeline_mode = #tpu.pipeline_mode<synchronous>, transform_indices = @transform_5, window_bounds = array<i64: 128, 128>}, {pipeline_mode = #tpu.pipeline_mode<synchronous>, transform_indices = @transform_6, window_bounds = array<i64: 1, 128>}, {pipeline_mode = #tpu.pipeline_mode<synchronous>, transform_indices = @transform_7, window_bounds = array<i64: 128, 128>}, {pipeline_mode = #tpu.pipeline_mode<synchronous>, transform_indices = @transform_8, window_bounds = array<i64: 1, 128>}, {pipeline_mode = #tpu.pipeline_mode<synchronous>, transform_indices = @transform_9, window_bounds = array<i64: 128, 128>}, {pipeline_mode = #tpu.pipeline_mode<synchronous>, transform_indices = @transform_10, window_bounds = array<i64: 1, 128>}, {pipeline_mode = #tpu.pipeline_mode<synchronous>, transform_indices = @transform_11, window_bounds = array<i64: 32, 128>}]} {
    %c0 = arith.constant 0 : index
    %c0_0 = arith.constant 0 : index
    %0 = vector.load %arg1[%c0, %c0_0] : memref<32x128xf32, #tpu.memory_space<vmem>>, vector<32x128xf32>
    %c0_1 = arith.constant 0 : index
    %c0_2 = arith.constant 0 : index
    %1 = vector.load %arg4[%c0_1, %c0_2] : memref<128x128xf32, #tpu.memory_space<vmem>>, vector<128x128xf32>
    %cst = arith.constant dense<0.000000e+00> : vector<32x128xf32>
    %2 = tpu.matmul %0, %1, %cst {dimension_numbers = #tpu.dot_dimension_numbers<[1], [1], [0], [0], [0, 0, 1, 0], [], []>} : vector<32x128xf32>, vector<128x128xf32>, vector<32x128xf32> -> vector<32x128xf32>
    %c0_3 = arith.constant 0 : index
    %c0_4 = arith.constant 0 : index
    %3 = vector.load %arg5[%c0_3, %c0_4] : memref<1x128xf32, #tpu.memory_space<vmem>>, vector<1x128xf32>
    %4 = vector.broadcast %3 : vector<1x128xf32> to vector<32x128xf32>
    %5 = arith.addf %2, %4 : vector<32x128xf32>
    %c0_5 = arith.constant 0 : index
    %c0_6 = arith.constant 0 : index
    %6 = vector.load %arg2[%c0_5, %c0_6] : memref<32x128xf32, #tpu.memory_space<vmem>>, vector<32x128xf32>
    %c0_7 = arith.constant 0 : index
    %c0_8 = arith.constant 0 : index
    %7 = vector.load %arg6[%c0_7, %c0_8] : memref<128x128xf32, #tpu.memory_space<vmem>>, vector<128x128xf32>
    %cst_9 = arith.constant dense<0.000000e+00> : vector<32x128xf32>
    %8 = tpu.matmul %6, %7, %cst_9 {dimension_numbers = #tpu.dot_dimension_numbers<[1], [1], [0], [0], [0, 0, 1, 0], [], []>} : vector<32x128xf32>, vector<128x128xf32>, vector<32x128xf32> -> vector<32x128xf32>
    %c0_10 = arith.constant 0 : index
    %c0_11 = arith.constant 0 : index
    %9 = vector.load %arg7[%c0_10, %c0_11] : memref<1x128xf32, #tpu.memory_space<vmem>>, vector<1x128xf32>
    %10 = vector.broadcast %9 : vector<1x128xf32> to vector<32x128xf32>
    %11 = arith.addf %8, %10 : vector<32x128xf32>
    %c0_12 = arith.constant 0 : index
    %c0_13 = arith.constant 0 : index
    %12 = vector.load %arg3[%c0_12, %c0_13] : memref<32x128xf32, #tpu.memory_space<vmem>>, vector<32x128xf32>
    %c0_14 = arith.constant 0 : index
    %c0_15 = arith.constant 0 : index
    %13 = vector.load %arg8[%c0_14, %c0_15] : memref<128x128xf32, #tpu.memory_space<vmem>>, vector<128x128xf32>
    %cst_16 = arith.constant dense<0.000000e+00> : vector<32x128xf32>
    %14 = tpu.matmul %12, %13, %cst_16 {dimension_numbers = #tpu.dot_dimension_numbers<[1], [1], [0], [0], [0, 0, 1, 0], [], []>} : vector<32x128xf32>, vector<128x128xf32>, vector<32x128xf32> -> vector<32x128xf32>
    %c0_17 = arith.constant 0 : index
    %c0_18 = arith.constant 0 : index
    %15 = vector.load %arg9[%c0_17, %c0_18] : memref<1x128xf32, #tpu.memory_space<vmem>>, vector<1x128xf32>
    %16 = vector.broadcast %15 : vector<1x128xf32> to vector<32x128xf32>
    %17 = arith.addf %14, %16 : vector<32x128xf32>
    %18 = tpu.iota {dimensions = array<i32: 0>} : vector<16x16xi32>
    %19 = tpu.iota {dimensions = array<i32: 1>} : vector<16x16xi32>
    %20 = arith.cmpi sgt, %19, %18 : vector<16x16xi32>
    %21 = vector.extract_strided_slice %5 {offsets = [0, 0], sizes = [16, 32], strides = [1, 1]} : vector<32x128xf32> to vector<16x32xf32>
    %22 = vector.extract_strided_slice %11 {offsets = [0, 0], sizes = [16, 32], strides = [1, 1]} : vector<32x128xf32> to vector<16x32xf32>
    %23 = vector.extract_strided_slice %17 {offsets = [0, 0], sizes = [16, 32], strides = [1, 1]} : vector<32x128xf32> to vector<16x32xf32>
    %cst_19 = arith.constant dense<0.000000e+00> : vector<16x16xf32>
    %24 = tpu.matmul %21, %22, %cst_19 {dimension_numbers = #tpu.dot_dimension_numbers<[1], [1], [0], [0], [0, 0, 1, 0], [], []>} : vector<16x32xf32>, vector<16x32xf32>, vector<16x16xf32> -> vector<16x16xf32>
    %cst_20 = arith.constant -1.000000e+30 : f32
    %25 = vector.broadcast %cst_20 : f32 to vector<16x16xf32>
    %26 = arith.select %20, %25, %24 : vector<16x16xi1>, vector<16x16xf32>
    %cst_21 = arith.constant dense<0xFF800000> : vector<16xf32>
    %27 = vector.multi_reduction <maximumf>, %26, %cst_21 [1] : vector<16x16xf32> to vector<16xf32>
    %28 = vector.shape_cast %27 : vector<16xf32> to vector<16x1xf32>
    %29 = vector.broadcast %28 : vector<16x1xf32> to vector<16x16xf32>
    %30 = arith.subf %26, %29 : vector<16x16xf32>
    %31 = math.exp %30 : vector<16x16xf32>
    %cst_22 = arith.constant dense<0.000000e+00> : vector<16xf32>
    %32 = vector.multi_reduction <add>, %31, %cst_22 [1] : vector<16x16xf32> to vector<16xf32>
    %33 = vector.shape_cast %32 : vector<16xf32> to vector<16x1xf32>
    %34 = tpu.reciprocal %33 {approx = true} : vector<16x1xf32> -> vector<16x1xf32>
    %35 = arith.mulf %33, %34 : vector<16x1xf32>
    %cst_23 = arith.constant 2.000000e+00 : f32
    %36 = vector.broadcast %cst_23 : f32 to vector<16x1xf32>
    %37 = arith.subf %36, %35 : vector<16x1xf32>
    %38 = arith.mulf %34, %37 : vector<16x1xf32>
    %39 = vector.broadcast %38 : vector<16x1xf32> to vector<16x16xf32>
    %40 = arith.mulf %31, %39 : vector<16x16xf32>
    %cst_24 = arith.constant dense<0.000000e+00> : vector<16x32xf32>
    %41 = tpu.matmul %40, %23, %cst_24 {dimension_numbers = #tpu.dot_dimension_numbers<[1], [0], [0], [1], [0, 0, 1, 1], [], []>} : vector<16x16xf32>, vector<16x32xf32>, vector<16x32xf32> -> vector<16x32xf32>
    %42 = vector.extract_strided_slice %5 {offsets = [16, 0], sizes = [16, 32], strides = [1, 1]} : vector<32x128xf32> to vector<16x32xf32>
    %43 = vector.extract_strided_slice %11 {offsets = [16, 0], sizes = [16, 32], strides = [1, 1]} : vector<32x128xf32> to vector<16x32xf32>
    %44 = vector.extract_strided_slice %17 {offsets = [16, 0], sizes = [16, 32], strides = [1, 1]} : vector<32x128xf32> to vector<16x32xf32>
    %cst_25 = arith.constant dense<0.000000e+00> : vector<16x16xf32>
    %45 = tpu.matmul %42, %43, %cst_25 {dimension_numbers = #tpu.dot_dimension_numbers<[1], [1], [0], [0], [0, 0, 1, 0], [], []>} : vector<16x32xf32>, vector<16x32xf32>, vector<16x16xf32> -> vector<16x16xf32>
    %cst_26 = arith.constant -1.000000e+30 : f32
    %46 = vector.broadcast %cst_26 : f32 to vector<16x16xf32>
    %47 = arith.select %20, %46, %45 : vector<16x16xi1>, vector<16x16xf32>
    %cst_27 = arith.constant dense<0xFF800000> : vector<16xf32>
    %48 = vector.multi_reduction <maximumf>, %47, %cst_27 [1] : vector<16x16xf32> to vector<16xf32>
    %49 = vector.shape_cast %48 : vector<16xf32> to vector<16x1xf32>
    %50 = vector.broadcast %49 : vector<16x1xf32> to vector<16x16xf32>
    %51 = arith.subf %47, %50 : vector<16x16xf32>
    %52 = math.exp %51 : vector<16x16xf32>
    %cst_28 = arith.constant dense<0.000000e+00> : vector<16xf32>
    %53 = vector.multi_reduction <add>, %52, %cst_28 [1] : vector<16x16xf32> to vector<16xf32>
    %54 = vector.shape_cast %53 : vector<16xf32> to vector<16x1xf32>
    %55 = tpu.reciprocal %54 {approx = true} : vector<16x1xf32> -> vector<16x1xf32>
    %56 = arith.mulf %54, %55 : vector<16x1xf32>
    %cst_29 = arith.constant 2.000000e+00 : f32
    %57 = vector.broadcast %cst_29 : f32 to vector<16x1xf32>
    %58 = arith.subf %57, %56 : vector<16x1xf32>
    %59 = arith.mulf %55, %58 : vector<16x1xf32>
    %60 = vector.broadcast %59 : vector<16x1xf32> to vector<16x16xf32>
    %61 = arith.mulf %52, %60 : vector<16x16xf32>
    %cst_30 = arith.constant dense<0.000000e+00> : vector<16x32xf32>
    %62 = tpu.matmul %61, %44, %cst_30 {dimension_numbers = #tpu.dot_dimension_numbers<[1], [0], [0], [1], [0, 0, 1, 1], [], []>} : vector<16x16xf32>, vector<16x32xf32>, vector<16x32xf32> -> vector<16x32xf32>
    %63 = vector.extract_strided_slice %5 {offsets = [0, 32], sizes = [16, 32], strides = [1, 1]} : vector<32x128xf32> to vector<16x32xf32>
    %64 = vector.extract_strided_slice %11 {offsets = [0, 32], sizes = [16, 32], strides = [1, 1]} : vector<32x128xf32> to vector<16x32xf32>
    %65 = vector.extract_strided_slice %17 {offsets = [0, 32], sizes = [16, 32], strides = [1, 1]} : vector<32x128xf32> to vector<16x32xf32>
    %cst_31 = arith.constant dense<0.000000e+00> : vector<16x16xf32>
    %66 = tpu.matmul %63, %64, %cst_31 {dimension_numbers = #tpu.dot_dimension_numbers<[1], [1], [0], [0], [0, 0, 1, 0], [], []>} : vector<16x32xf32>, vector<16x32xf32>, vector<16x16xf32> -> vector<16x16xf32>
    %cst_32 = arith.constant -1.000000e+30 : f32
    %67 = vector.broadcast %cst_32 : f32 to vector<16x16xf32>
    %68 = arith.select %20, %67, %66 : vector<16x16xi1>, vector<16x16xf32>
    %cst_33 = arith.constant dense<0xFF800000> : vector<16xf32>
    %69 = vector.multi_reduction <maximumf>, %68, %cst_33 [1] : vector<16x16xf32> to vector<16xf32>
    %70 = vector.shape_cast %69 : vector<16xf32> to vector<16x1xf32>
    %71 = vector.broadcast %70 : vector<16x1xf32> to vector<16x16xf32>
    %72 = arith.subf %68, %71 : vector<16x16xf32>
    %73 = math.exp %72 : vector<16x16xf32>
    %cst_34 = arith.constant dense<0.000000e+00> : vector<16xf32>
    %74 = vector.multi_reduction <add>, %73, %cst_34 [1] : vector<16x16xf32> to vector<16xf32>
    %75 = vector.shape_cast %74 : vector<16xf32> to vector<16x1xf32>
    %76 = tpu.reciprocal %75 {approx = true} : vector<16x1xf32> -> vector<16x1xf32>
    %77 = arith.mulf %75, %76 : vector<16x1xf32>
    %cst_35 = arith.constant 2.000000e+00 : f32
    %78 = vector.broadcast %cst_35 : f32 to vector<16x1xf32>
    %79 = arith.subf %78, %77 : vector<16x1xf32>
    %80 = arith.mulf %76, %79 : vector<16x1xf32>
    %81 = vector.broadcast %80 : vector<16x1xf32> to vector<16x16xf32>
    %82 = arith.mulf %73, %81 : vector<16x16xf32>
    %cst_36 = arith.constant dense<0.000000e+00> : vector<16x32xf32>
    %83 = tpu.matmul %82, %65, %cst_36 {dimension_numbers = #tpu.dot_dimension_numbers<[1], [0], [0], [1], [0, 0, 1, 1], [], []>} : vector<16x16xf32>, vector<16x32xf32>, vector<16x32xf32> -> vector<16x32xf32>
    %84 = vector.extract_strided_slice %5 {offsets = [16, 32], sizes = [16, 32], strides = [1, 1]} : vector<32x128xf32> to vector<16x32xf32>
    %85 = vector.extract_strided_slice %11 {offsets = [16, 32], sizes = [16, 32], strides = [1, 1]} : vector<32x128xf32> to vector<16x32xf32>
    %86 = vector.extract_strided_slice %17 {offsets = [16, 32], sizes = [16, 32], strides = [1, 1]} : vector<32x128xf32> to vector<16x32xf32>
    %cst_37 = arith.constant dense<0.000000e+00> : vector<16x16xf32>
    %87 = tpu.matmul %84, %85, %cst_37 {dimension_numbers = #tpu.dot_dimension_numbers<[1], [1], [0], [0], [0, 0, 1, 0], [], []>} : vector<16x32xf32>, vector<16x32xf32>, vector<16x16xf32> -> vector<16x16xf32>
    %cst_38 = arith.constant -1.000000e+30 : f32
    %88 = vector.broadcast %cst_38 : f32 to vector<16x16xf32>
    %89 = arith.select %20, %88, %87 : vector<16x16xi1>, vector<16x16xf32>
    %cst_39 = arith.constant dense<0xFF800000> : vector<16xf32>
    %90 = vector.multi_reduction <maximumf>, %89, %cst_39 [1] : vector<16x16xf32> to vector<16xf32>
    %91 = vector.shape_cast %90 : vector<16xf32> to vector<16x1xf32>
    %92 = vector.broadcast %91 : vector<16x1xf32> to vector<16x16xf32>
    %93 = arith.subf %89, %92 : vector<16x16xf32>
    %94 = math.exp %93 : vector<16x16xf32>
    %cst_40 = arith.constant dense<0.000000e+00> : vector<16xf32>
    %95 = vector.multi_reduction <add>, %94, %cst_40 [1] : vector<16x16xf32> to vector<16xf32>
    %96 = vector.shape_cast %95 : vector<16xf32> to vector<16x1xf32>
    %97 = tpu.reciprocal %96 {approx = true} : vector<16x1xf32> -> vector<16x1xf32>
    %98 = arith.mulf %96, %97 : vector<16x1xf32>
    %cst_41 = arith.constant 2.000000e+00 : f32
    %99 = vector.broadcast %cst_41 : f32 to vector<16x1xf32>
    %100 = arith.subf %99, %98 : vector<16x1xf32>
    %101 = arith.mulf %97, %100 : vector<16x1xf32>
    %102 = vector.broadcast %101 : vector<16x1xf32> to vector<16x16xf32>
    %103 = arith.mulf %94, %102 : vector<16x16xf32>
    %cst_42 = arith.constant dense<0.000000e+00> : vector<16x32xf32>
    %104 = tpu.matmul %103, %86, %cst_42 {dimension_numbers = #tpu.dot_dimension_numbers<[1], [0], [0], [1], [0, 0, 1, 1], [], []>} : vector<16x16xf32>, vector<16x32xf32>, vector<16x32xf32> -> vector<16x32xf32>
    %105 = vector.extract_strided_slice %5 {offsets = [0, 64], sizes = [16, 32], strides = [1, 1]} : vector<32x128xf32> to vector<16x32xf32>
    %106 = vector.extract_strided_slice %11 {offsets = [0, 64], sizes = [16, 32], strides = [1, 1]} : vector<32x128xf32> to vector<16x32xf32>
    %107 = vector.extract_strided_slice %17 {offsets = [0, 64], sizes = [16, 32], strides = [1, 1]} : vector<32x128xf32> to vector<16x32xf32>
    %cst_43 = arith.constant dense<0.000000e+00> : vector<16x16xf32>
    %108 = tpu.matmul %105, %106, %cst_43 {dimension_numbers = #tpu.dot_dimension_numbers<[1], [1], [0], [0], [0, 0, 1, 0], [], []>} : vector<16x32xf32>, vector<16x32xf32>, vector<16x16xf32> -> vector<16x16xf32>
    %cst_44 = arith.constant -1.000000e+30 : f32
    %109 = vector.broadcast %cst_44 : f32 to vector<16x16xf32>
    %110 = arith.select %20, %109, %108 : vector<16x16xi1>, vector<16x16xf32>
    %cst_45 = arith.constant dense<0xFF800000> : vector<16xf32>
    %111 = vector.multi_reduction <maximumf>, %110, %cst_45 [1] : vector<16x16xf32> to vector<16xf32>
    %112 = vector.shape_cast %111 : vector<16xf32> to vector<16x1xf32>
    %113 = vector.broadcast %112 : vector<16x1xf32> to vector<16x16xf32>
    %114 = arith.subf %110, %113 : vector<16x16xf32>
    %115 = math.exp %114 : vector<16x16xf32>
    %cst_46 = arith.constant dense<0.000000e+00> : vector<16xf32>
    %116 = vector.multi_reduction <add>, %115, %cst_46 [1] : vector<16x16xf32> to vector<16xf32>
    %117 = vector.shape_cast %116 : vector<16xf32> to vector<16x1xf32>
    %118 = tpu.reciprocal %117 {approx = true} : vector<16x1xf32> -> vector<16x1xf32>
    %119 = arith.mulf %117, %118 : vector<16x1xf32>
    %cst_47 = arith.constant 2.000000e+00 : f32
    %120 = vector.broadcast %cst_47 : f32 to vector<16x1xf32>
    %121 = arith.subf %120, %119 : vector<16x1xf32>
    %122 = arith.mulf %118, %121 : vector<16x1xf32>
    %123 = vector.broadcast %122 : vector<16x1xf32> to vector<16x16xf32>
    %124 = arith.mulf %115, %123 : vector<16x16xf32>
    %cst_48 = arith.constant dense<0.000000e+00> : vector<16x32xf32>
    %125 = tpu.matmul %124, %107, %cst_48 {dimension_numbers = #tpu.dot_dimension_numbers<[1], [0], [0], [1], [0, 0, 1, 1], [], []>} : vector<16x16xf32>, vector<16x32xf32>, vector<16x32xf32> -> vector<16x32xf32>
    %126 = vector.extract_strided_slice %5 {offsets = [16, 64], sizes = [16, 32], strides = [1, 1]} : vector<32x128xf32> to vector<16x32xf32>
    %127 = vector.extract_strided_slice %11 {offsets = [16, 64], sizes = [16, 32], strides = [1, 1]} : vector<32x128xf32> to vector<16x32xf32>
    %128 = vector.extract_strided_slice %17 {offsets = [16, 64], sizes = [16, 32], strides = [1, 1]} : vector<32x128xf32> to vector<16x32xf32>
    %cst_49 = arith.constant dense<0.000000e+00> : vector<16x16xf32>
    %129 = tpu.matmul %126, %127, %cst_49 {dimension_numbers = #tpu.dot_dimension_numbers<[1], [1], [0], [0], [0, 0, 1, 0], [], []>} : vector<16x32xf32>, vector<16x32xf32>, vector<16x16xf32> -> vector<16x16xf32>
    %cst_50 = arith.constant -1.000000e+30 : f32
    %130 = vector.broadcast %cst_50 : f32 to vector<16x16xf32>
    %131 = arith.select %20, %130, %129 : vector<16x16xi1>, vector<16x16xf32>
    %cst_51 = arith.constant dense<0xFF800000> : vector<16xf32>
    %132 = vector.multi_reduction <maximumf>, %131, %cst_51 [1] : vector<16x16xf32> to vector<16xf32>
    %133 = vector.shape_cast %132 : vector<16xf32> to vector<16x1xf32>
    %134 = vector.broadcast %133 : vector<16x1xf32> to vector<16x16xf32>
    %135 = arith.subf %131, %134 : vector<16x16xf32>
    %136 = math.exp %135 : vector<16x16xf32>
    %cst_52 = arith.constant dense<0.000000e+00> : vector<16xf32>
    %137 = vector.multi_reduction <add>, %136, %cst_52 [1] : vector<16x16xf32> to vector<16xf32>
    %138 = vector.shape_cast %137 : vector<16xf32> to vector<16x1xf32>
    %139 = tpu.reciprocal %138 {approx = true} : vector<16x1xf32> -> vector<16x1xf32>
    %140 = arith.mulf %138, %139 : vector<16x1xf32>
    %cst_53 = arith.constant 2.000000e+00 : f32
    %141 = vector.broadcast %cst_53 : f32 to vector<16x1xf32>
    %142 = arith.subf %141, %140 : vector<16x1xf32>
    %143 = arith.mulf %139, %142 : vector<16x1xf32>
    %144 = vector.broadcast %143 : vector<16x1xf32> to vector<16x16xf32>
    %145 = arith.mulf %136, %144 : vector<16x16xf32>
    %cst_54 = arith.constant dense<0.000000e+00> : vector<16x32xf32>
    %146 = tpu.matmul %145, %128, %cst_54 {dimension_numbers = #tpu.dot_dimension_numbers<[1], [0], [0], [1], [0, 0, 1, 1], [], []>} : vector<16x16xf32>, vector<16x32xf32>, vector<16x32xf32> -> vector<16x32xf32>
    %147 = vector.extract_strided_slice %5 {offsets = [0, 96], sizes = [16, 32], strides = [1, 1]} : vector<32x128xf32> to vector<16x32xf32>
    %148 = vector.extract_strided_slice %11 {offsets = [0, 96], sizes = [16, 32], strides = [1, 1]} : vector<32x128xf32> to vector<16x32xf32>
    %149 = vector.extract_strided_slice %17 {offsets = [0, 96], sizes = [16, 32], strides = [1, 1]} : vector<32x128xf32> to vector<16x32xf32>
    %cst_55 = arith.constant dense<0.000000e+00> : vector<16x16xf32>
    %150 = tpu.matmul %147, %148, %cst_55 {dimension_numbers = #tpu.dot_dimension_numbers<[1], [1], [0], [0], [0, 0, 1, 0], [], []>} : vector<16x32xf32>, vector<16x32xf32>, vector<16x16xf32> -> vector<16x16xf32>
    %cst_56 = arith.constant -1.000000e+30 : f32
    %151 = vector.broadcast %cst_56 : f32 to vector<16x16xf32>
    %152 = arith.select %20, %151, %150 : vector<16x16xi1>, vector<16x16xf32>
    %cst_57 = arith.constant dense<0xFF800000> : vector<16xf32>
    %153 = vector.multi_reduction <maximumf>, %152, %cst_57 [1] : vector<16x16xf32> to vector<16xf32>
    %154 = vector.shape_cast %153 : vector<16xf32> to vector<16x1xf32>
    %155 = vector.broadcast %154 : vector<16x1xf32> to vector<16x16xf32>
    %156 = arith.subf %152, %155 : vector<16x16xf32>
    %157 = math.exp %156 : vector<16x16xf32>
    %cst_58 = arith.constant dense<0.000000e+00> : vector<16xf32>
    %158 = vector.multi_reduction <add>, %157, %cst_58 [1] : vector<16x16xf32> to vector<16xf32>
    %159 = vector.shape_cast %158 : vector<16xf32> to vector<16x1xf32>
    %160 = tpu.reciprocal %159 {approx = true} : vector<16x1xf32> -> vector<16x1xf32>
    %161 = arith.mulf %159, %160 : vector<16x1xf32>
    %cst_59 = arith.constant 2.000000e+00 : f32
    %162 = vector.broadcast %cst_59 : f32 to vector<16x1xf32>
    %163 = arith.subf %162, %161 : vector<16x1xf32>
    %164 = arith.mulf %160, %163 : vector<16x1xf32>
    %165 = vector.broadcast %164 : vector<16x1xf32> to vector<16x16xf32>
    %166 = arith.mulf %157, %165 : vector<16x16xf32>
    %cst_60 = arith.constant dense<0.000000e+00> : vector<16x32xf32>
    %167 = tpu.matmul %166, %149, %cst_60 {dimension_numbers = #tpu.dot_dimension_numbers<[1], [0], [0], [1], [0, 0, 1, 1], [], []>} : vector<16x16xf32>, vector<16x32xf32>, vector<16x32xf32> -> vector<16x32xf32>
    %168 = vector.extract_strided_slice %5 {offsets = [16, 96], sizes = [16, 32], strides = [1, 1]} : vector<32x128xf32> to vector<16x32xf32>
    %169 = vector.extract_strided_slice %11 {offsets = [16, 96], sizes = [16, 32], strides = [1, 1]} : vector<32x128xf32> to vector<16x32xf32>
    %170 = vector.extract_strided_slice %17 {offsets = [16, 96], sizes = [16, 32], strides = [1, 1]} : vector<32x128xf32> to vector<16x32xf32>
    %cst_61 = arith.constant dense<0.000000e+00> : vector<16x16xf32>
    %171 = tpu.matmul %168, %169, %cst_61 {dimension_numbers = #tpu.dot_dimension_numbers<[1], [1], [0], [0], [0, 0, 1, 0], [], []>} : vector<16x32xf32>, vector<16x32xf32>, vector<16x16xf32> -> vector<16x16xf32>
    %cst_62 = arith.constant -1.000000e+30 : f32
    %172 = vector.broadcast %cst_62 : f32 to vector<16x16xf32>
    %173 = arith.select %20, %172, %171 : vector<16x16xi1>, vector<16x16xf32>
    %cst_63 = arith.constant dense<0xFF800000> : vector<16xf32>
    %174 = vector.multi_reduction <maximumf>, %173, %cst_63 [1] : vector<16x16xf32> to vector<16xf32>
    %175 = vector.shape_cast %174 : vector<16xf32> to vector<16x1xf32>
    %176 = vector.broadcast %175 : vector<16x1xf32> to vector<16x16xf32>
    %177 = arith.subf %173, %176 : vector<16x16xf32>
    %178 = math.exp %177 : vector<16x16xf32>
    %cst_64 = arith.constant dense<0.000000e+00> : vector<16xf32>
    %179 = vector.multi_reduction <add>, %178, %cst_64 [1] : vector<16x16xf32> to vector<16xf32>
    %180 = vector.shape_cast %179 : vector<16xf32> to vector<16x1xf32>
    %181 = tpu.reciprocal %180 {approx = true} : vector<16x1xf32> -> vector<16x1xf32>
    %182 = arith.mulf %180, %181 : vector<16x1xf32>
    %cst_65 = arith.constant 2.000000e+00 : f32
    %183 = vector.broadcast %cst_65 : f32 to vector<16x1xf32>
    %184 = arith.subf %183, %182 : vector<16x1xf32>
    %185 = arith.mulf %181, %184 : vector<16x1xf32>
    %186 = vector.broadcast %185 : vector<16x1xf32> to vector<16x16xf32>
    %187 = arith.mulf %178, %186 : vector<16x16xf32>
    %cst_66 = arith.constant dense<0.000000e+00> : vector<16x32xf32>
    %188 = tpu.matmul %187, %170, %cst_66 {dimension_numbers = #tpu.dot_dimension_numbers<[1], [0], [0], [1], [0, 0, 1, 1], [], []>} : vector<16x16xf32>, vector<16x32xf32>, vector<16x32xf32> -> vector<16x32xf32>
    %189 = tpu.concatenate %41, %62, %83, %104, %125, %146, %167, %188 in 0 : vector<16x32xf32>, vector<16x32xf32>, vector<16x32xf32>, vector<16x32xf32>, vector<16x32xf32>, vector<16x32xf32>, vector<16x32xf32>, vector<16x32xf32> -> vector<128x32xf32>
    %190 = tpu.iota {dimensions = array<i32: 0>} : vector<32x128xi32>
    %191 = tpu.iota {dimensions = array<i32: 1>} : vector<32x128xi32>
    %c4_i32 = arith.constant 4 : i32
    %192 = vector.broadcast %c4_i32 : i32 to vector<32x128xi32>
    %193 = arith.muli %190, %192 : vector<32x128xi32>
    %194 = arith.subi %191, %193 : vector<32x128xi32>
    %c0_i32 = arith.constant 0 : i32
    %195 = vector.broadcast %c0_i32 : i32 to vector<32x128xi32>
    %196 = arith.cmpi eq, %194, %195 : vector<32x128xi32>
    %197 = arith.extui %196 : vector<32x128xi1> to vector<32x128xi32>
    %198 = arith.sitofp %197 : vector<32x128xi32> to vector<32x128xf32>
    %cst_67 = arith.constant dense<0.000000e+00> : vector<32x32xf32>
    %199 = tpu.matmul %198, %189, %cst_67 {dimension_numbers = #tpu.dot_dimension_numbers<[1], [0], [0], [1], [0, 0, 1, 1], [], []>} : vector<32x128xf32>, vector<128x32xf32>, vector<32x32xf32> -> vector<32x32xf32>
    %c1_i32 = arith.constant 1 : i32
    %200 = vector.broadcast %c1_i32 : i32 to vector<32x128xi32>
    %201 = arith.cmpi eq, %194, %200 : vector<32x128xi32>
    %202 = arith.extui %201 : vector<32x128xi1> to vector<32x128xi32>
    %203 = arith.sitofp %202 : vector<32x128xi32> to vector<32x128xf32>
    %cst_68 = arith.constant dense<0.000000e+00> : vector<32x32xf32>
    %204 = tpu.matmul %203, %189, %cst_68 {dimension_numbers = #tpu.dot_dimension_numbers<[1], [0], [0], [1], [0, 0, 1, 1], [], []>} : vector<32x128xf32>, vector<128x32xf32>, vector<32x32xf32> -> vector<32x32xf32>
    %c2_i32 = arith.constant 2 : i32
    %205 = vector.broadcast %c2_i32 : i32 to vector<32x128xi32>
    %206 = arith.cmpi eq, %194, %205 : vector<32x128xi32>
    %207 = arith.extui %206 : vector<32x128xi1> to vector<32x128xi32>
    %208 = arith.sitofp %207 : vector<32x128xi32> to vector<32x128xf32>
    %cst_69 = arith.constant dense<0.000000e+00> : vector<32x32xf32>
    %209 = tpu.matmul %208, %189, %cst_69 {dimension_numbers = #tpu.dot_dimension_numbers<[1], [0], [0], [1], [0, 0, 1, 1], [], []>} : vector<32x128xf32>, vector<128x32xf32>, vector<32x32xf32> -> vector<32x32xf32>
    %c3_i32 = arith.constant 3 : i32
    %210 = vector.broadcast %c3_i32 : i32 to vector<32x128xi32>
    %211 = arith.cmpi eq, %194, %210 : vector<32x128xi32>
    %212 = arith.extui %211 : vector<32x128xi1> to vector<32x128xi32>
    %213 = arith.sitofp %212 : vector<32x128xi32> to vector<32x128xf32>
    %cst_70 = arith.constant dense<0.000000e+00> : vector<32x32xf32>
    %214 = tpu.matmul %213, %189, %cst_70 {dimension_numbers = #tpu.dot_dimension_numbers<[1], [0], [0], [1], [0, 0, 1, 1], [], []>} : vector<32x128xf32>, vector<128x32xf32>, vector<32x32xf32> -> vector<32x32xf32>
    %215 = tpu.concatenate %199, %204, %209, %214 in 1 : vector<32x32xf32>, vector<32x32xf32>, vector<32x32xf32>, vector<32x32xf32> -> vector<32x128xf32>
    %c0_71 = arith.constant 0 : index
    %c0_72 = arith.constant 0 : index
    %216 = vector.load %arg10[%c0_71, %c0_72] : memref<128x128xf32, #tpu.memory_space<vmem>>, vector<128x128xf32>
    %cst_73 = arith.constant dense<0.000000e+00> : vector<32x128xf32>
    %217 = tpu.matmul %215, %216, %cst_73 {dimension_numbers = #tpu.dot_dimension_numbers<[1], [1], [0], [0], [0, 0, 1, 0], [], []>} : vector<32x128xf32>, vector<128x128xf32>, vector<32x128xf32> -> vector<32x128xf32>
    %c0_74 = arith.constant 0 : index
    %c0_75 = arith.constant 0 : index
    %218 = vector.load %arg11[%c0_74, %c0_75] : memref<1x128xf32, #tpu.memory_space<vmem>>, vector<1x128xf32>
    %219 = vector.broadcast %218 : vector<1x128xf32> to vector<32x128xf32>
    %220 = arith.addf %217, %219 : vector<32x128xf32>
    %c0_76 = arith.constant 0 : index
    %c0_77 = arith.constant 0 : index
    %221 = vector.load %arg12[%c0_76, %c0_77] : memref<32x128xf32, #tpu.memory_space<vmem>>, vector<32x128xf32>
    tpu.vector_store %arg12[%c0_76, %c0_77], %220 {strides = array<i32>} : memref<32x128xf32, #tpu.memory_space<vmem>>, vector<32x128xf32>,
    return
  }
  func.func @transform_0(%arg0: i32) -> (i32, i32) {
    %c0_i32 = arith.constant 0 : i32
    %c0_i32_0 = arith.constant 0 : i32
    %c0_i32_1 = arith.constant 0 : i32
    return %c0_i32, %c0_i32_0 : i32, i32
  }
  func.func @transform_1(%arg0: i32) -> (i32, i32) {
    %c0_i32 = arith.constant 0 : i32
    %c0_i32_0 = arith.constant 0 : i32
    %c0_i32_1 = arith.constant 0 : i32
    return %c0_i32, %c0_i32_0 : i32, i32
  }
  func.func @transform_2(%arg0: i32) -> (i32, i32) {
    %c0_i32 = arith.constant 0 : i32
    %c0_i32_0 = arith.constant 0 : i32
    %c0_i32_1 = arith.constant 0 : i32
    return %c0_i32, %c0_i32_0 : i32, i32
  }
  func.func @transform_3(%arg0: i32) -> (i32, i32) {
    %c0_i32 = arith.constant 0 : i32
    %c0_i32_0 = arith.constant 0 : i32
    %c0_i32_1 = arith.constant 0 : i32
    return %c0_i32, %c0_i32_0 : i32, i32
  }
  func.func @transform_4(%arg0: i32) -> (i32, i32) {
    %c0_i32 = arith.constant 0 : i32
    %c0_i32_0 = arith.constant 0 : i32
    %c0_i32_1 = arith.constant 0 : i32
    return %c0_i32, %c0_i32_0 : i32, i32
  }
  func.func @transform_5(%arg0: i32) -> (i32, i32) {
    %c0_i32 = arith.constant 0 : i32
    %c0_i32_0 = arith.constant 0 : i32
    %c0_i32_1 = arith.constant 0 : i32
    return %c0_i32, %c0_i32_0 : i32, i32
  }
  func.func @transform_6(%arg0: i32) -> (i32, i32) {
    %c0_i32 = arith.constant 0 : i32
    %c0_i32_0 = arith.constant 0 : i32
    %c0_i32_1 = arith.constant 0 : i32
    return %c0_i32, %c0_i32_0 : i32, i32
  }
  func.func @transform_7(%arg0: i32) -> (i32, i32) {
    %c0_i32 = arith.constant 0 : i32
    %c0_i32_0 = arith.constant 0 : i32
    %c0_i32_1 = arith.constant 0 : i32
    return %c0_i32, %c0_i32_0 : i32, i32
  }
  func.func @transform_8(%arg0: i32) -> (i32, i32) {
    %c0_i32 = arith.constant 0 : i32
    %c0_i32_0 = arith.constant 0 : i32
    %c0_i32_1 = arith.constant 0 : i32
    return %c0_i32, %c0_i32_0 : i32, i32
  }
  func.func @transform_9(%arg0: i32) -> (i32, i32) {
    %c0_i32 = arith.constant 0 : i32
    %c0_i32_0 = arith.constant 0 : i32
    %c0_i32_1 = arith.constant 0 : i32
    return %c0_i32, %c0_i32_0 : i32, i32
  }
  func.func @transform_10(%arg0: i32) -> (i32, i32) {
    %c0_i32 = arith.constant 0 : i32
    %c0_i32_0 = arith.constant 0 : i32
    %c0_i32_1 = arith.constant 0 : i32
    return %c0_i32, %c0_i32_0 : i32, i32
  }
  func.func @transform_11(%arg0: i32) -> (i32, i32) {
    %c0_i32 = arith.constant 0 : i32
    %c0_i32_0 = arith.constant 0 : i32
    %c0_i32_1 = arith.constant 0 : i32
    return %c0_i32, %c0_i32_0 : i32, i32
  }
}

</mosaic_0001>

<llo_original>
// kernel: masked_mha_forward.1
$region0: #{masked_mha_forward.1}
  #allocation0 [shape = 'u32[]', space=smem, size = 0x4, offset = 0x4, fixed_abs, tag = 'smem constant byte address 0x4 - core index']
  #allocation1 [shape = 'u32[144,128]{1,0:T(1,128)}', space=vmem, size = 0x12000, scoped, tag = 'internal scratch']
  %s0 = inlined_call_operand.hbm [shape: f32[32,128], index: 0, kind: input, shape index: {}]
  %s1 = inlined_call_operand.hbm [shape: f32[32,128], index: 1, kind: input, shape index: {}]
  %s2 = inlined_call_operand.hbm [shape: f32[32,128], index: 2, kind: input, shape index: {}]
  %s3 = inlined_call_operand.hbm [shape: f32[128,128], index: 3, kind: input, shape index: {}]
  %s4 = inlined_call_operand.vmem [shape: f32[1,128], index: 4, kind: input, shape index: {}]
  %s5 = inlined_call_operand.hbm [shape: f32[128,128], index: 5, kind: input, shape index: {}]
  %s6 = inlined_call_operand.vmem [shape: f32[1,128], index: 6, kind: input, shape index: {}]
  %s7 = inlined_call_operand.hbm [shape: f32[128,128], index: 7, kind: input, shape index: {}]
  %s8 = inlined_call_operand.vmem [shape: f32[1,128], index: 8, kind: input, shape index: {}]
  %s9 = inlined_call_operand.hbm [shape: f32[128,128], index: 9, kind: input, shape index: {}]
  %s10 = inlined_call_operand.vmem [shape: f32[1,128], index: 10, kind: input, shape index: {}]
  %s11 = inlined_call_operand.hbm [shape: f32[32,128], index: 11, kind: output, shape index: {}]
  %s12 = sld [smem:[#allocation0]]
  $region82: #{masked_mha_forward.1} parent=0
    _
  %s14 = ssub.s32 1, %s12
  %s15 = scalar_select 0, %s14, %s12
  $region1: #{masked_mha_forward.1} parent=0
    #allocation2 [shape = 'u8[16384]{0}', space=vmem, size = 0x4000, scoped, tag = 'input window, operand 0, single buffered']
    #allocation3 [shape = 's32[1]{0}', space=sflag, size = 0x4, scoped, tag = 'scoped memory for masked_mha_forward.1']
    #allocation4 [shape = 's32[1]{0}', space=sflag, size = 0x4, scoped, tag = 'scoped memory for masked_mha_forward.1']
    #allocation5 [shape = 'u8[16384]{0}', space=vmem, size = 0x4000, scoped, tag = 'input window, operand 1, single buffered']
    #allocation6 [shape = 's32[1]{0}', space=sflag, size = 0x4, scoped, tag = 'scoped memory for masked_mha_forward.1']
    #allocation7 [shape = 'u8[16384]{0}', space=vmem, size = 0x4000, scoped, tag = 'input window, operand 2, single buffered']
    #allocation8 [shape = 'u8[65536]{0}', space=vmem, size = 0x10000, scoped, tag = 'input window, operand 3, single buffered']
    #allocation9 [shape = 's32[1]{0}', space=sflag, size = 0x4, scoped, tag = 'scoped memory for masked_mha_forward.1']
    #allocation10 [shape = 'u8[65536]{0}', space=vmem, size = 0x10000, scoped, tag = 'input window, operand 5, single buffered']
    #allocation11 [shape = 'u8[65536]{0}', space=vmem, size = 0x10000, scoped, tag = 'input window, operand 7, single buffered']
    #allocation12 [shape = 's32[1]{0}', space=sflag, size = 0x4, scoped, tag = 'scoped memory for masked_mha_forward.1']
    #allocation13 [shape = 'u8[65536]{0}', space=vmem, size = 0x10000, scoped, tag = 'input window, operand 9, single buffered']
    #allocation14 [shape = 'u8[16384]{0}', space=vmem, size = 0x4000, scoped, tag = 'output window, operand 0, single buffered']
    %16 = vsyncpa [#allocation3], 0
    %17 = vsyncpa [#allocation6], 0
    %18 = vsyncpa [#allocation9], 0
    %19 = vsyncpa [#allocation12], 0
    %20 = vsyncpa [#allocation4], 0
    // Predicated region
    $region2: #{masked_mha_forward.1} parent=1 // pred_check
      _
    $region3: #{masked_mha_forward.1} parent=1 // pred_check_branch
      %22 = sbr.rel (0) target = $region5
    $region4: #{masked_mha_forward.1} parent=1 // pred_region
      %s24 = ssub.s32 512, 512
      %25 = vsyncadd [#allocation3], %s24
      %s26 = sshll.u32 [#allocation2], 4
      %s27 = int_to_ptr.vmem [resolvable:$true] %s26
      %32 = dma.hbm_to_vmem [thread:$0]  %s0, 512, %s27, [#allocation3], 128, 128, 8
    $region5: #{masked_mha_forward.1} parent=1 // pred_fallthru
      _
    // Predicated region
    $region6: #{masked_mha_forward.1} parent=1 // pred_check
      _
    $region7: #{masked_mha_forward.1} parent=1 // pred_check_branch
      %34 = sbr.rel (0) target = $region9
    $region8: #{masked_mha_forward.1} parent=1 // pred_region
      %s36 = ssub.s32 512, 512
      %37 = vsyncadd [#allocation6], %s36
      %s38 = sshll.u32 [#allocation5], 4
      %s39 = int_to_ptr.vmem [resolvable:$true] %s38
      %44 = dma.hbm_to_vmem [thread:$0]  %s1, 512, %s39, [#allocation6], 128, 128, 8
    $region9: #{masked_mha_forward.1} parent=1 // pred_fallthru
      _
    // Predicated region
    $region10: #{masked_mha_forward.1} parent=1 // pred_check
      _
    $region11: #{masked_mha_forward.1} parent=1 // pred_check_branch
      %46 = sbr.rel (0) target = $region13
    $region12: #{masked_mha_forward.1} parent=1 // pred_region
      %s48 = ssub.s32 512, 512
      %49 = vsyncadd [#allocation6], %s48
      %s50 = sshll.u32 [#allocation7], 4
      %s51 = int_to_ptr.vmem [resolvable:$true] %s50
      %56 = dma.hbm_to_vmem [thread:$0]  %s2, 512, %s51, [#allocation6], 128, 128, 8
    $region13: #{masked_mha_forward.1} parent=1 // pred_fallthru
      _
    // Predicated region
    $region14: #{masked_mha_forward.1} parent=1 // pred_check
      _
    $region15: #{masked_mha_forward.1} parent=1 // pred_check_branch
      %58 = sbr.rel (0) target = $region17
    $region16: #{masked_mha_forward.1} parent=1 // pred_region
      %s60 = ssub.s32 2048, 2048
      %61 = vsyncadd [#allocation9], %s60
      %s62 = sshll.u32 [#allocation8], 4
      %s63 = int_to_ptr.vmem [resolvable:$true] %s62
      %68 = dma.hbm_to_vmem [thread:$0]  %s3, 2048, %s63, [#allocation9], 128, 128, 8
    $region17: #{masked_mha_forward.1} parent=1 // pred_fallthru
      _
    // Predicated region
    $region18: #{masked_mha_forward.1} parent=1 // pred_check
      _
    $region19: #{masked_mha_forward.1} parent=1 // pred_check_branch
      %70 = sbr.rel (0) target = $region21
    $region20: #{masked_mha_forward.1} parent=1 // pred_region
      _
    $region21: #{masked_mha_forward.1} parent=1 // pred_fallthru
      _
    // Predicated region
    $region22: #{masked_mha_forward.1} parent=1 // pred_check
      _
    $region23: #{masked_mha_forward.1} parent=1 // pred_check_branch
      %72 = sbr.rel (0) target = $region25
    $region24: #{masked_mha_forward.1} parent=1 // pred_region
      %s74 = ssub.s32 2048, 2048
      %75 = vsyncadd [#allocation9], %s74
      %s76 = sshll.u32 [#allocation10], 4
      %s77 = int_to_ptr.vmem [resolvable:$true] %s76
      %82 = dma.hbm_to_vmem [thread:$0]  %s5, 2048, %s77, [#allocation9], 128, 128, 8
    $region25: #{masked_mha_forward.1} parent=1 // pred_fallthru
      _
    // Predicated region
    $region26: #{masked_mha_forward.1} parent=1 // pred_check
      _
    $region27: #{masked_mha_forward.1} parent=1 // pred_check_branch
      %84 = sbr.rel (0) target = $region29
    $region28: #{masked_mha_forward.1} parent=1 // pred_region
      _
    $region29: #{masked_mha_forward.1} parent=1 // pred_fallthru
      _
    // Predicated region
    $region30: #{masked_mha_forward.1} parent=1 // pred_check
      _
    $region31: #{masked_mha_forward.1} parent=1 // pred_check_branch
      %86 = sbr.rel (0) target = $region33
    $region32: #{masked_mha_forward.1} parent=1 // pred_region
      %s88 = ssub.s32 2048, 2048
      %89 = vsyncadd [#allocation12], %s88
      %s90 = sshll.u32 [#allocation11], 4
      %s91 = int_to_ptr.vmem [resolvable:$true] %s90
      %96 = dma.hbm_to_vmem [thread:$0]  %s7, 2048, %s91, [#allocation12], 128, 128, 8
    $region33: #{masked_mha_forward.1} parent=1 // pred_fallthru
      _
    // Predicated region
    $region34: #{masked_mha_forward.1} parent=1 // pred_check
      _
    $region35: #{masked_mha_forward.1} parent=1 // pred_check_branch
      %98 = sbr.rel (0) target = $region37
    $region36: #{masked_mha_forward.1} parent=1 // pred_region
      _
    $region37: #{masked_mha_forward.1} parent=1 // pred_fallthru
      _
    // Predicated region
    $region38: #{masked_mha_forward.1} parent=1 // pred_check
      _
    $region39: #{masked_mha_forward.1} parent=1 // pred_check_branch
      %100 = sbr.rel (0) target = $region41
    $region40: #{masked_mha_forward.1} parent=1 // pred_region
      %s102 = ssub.s32 2048, 2048
      %103 = vsyncadd [#allocation12], %s102
      %s104 = sshll.u32 [#allocation13], 4
      %s105 = int_to_ptr.vmem [resolvable:$true] %s104
      %110 = dma.hbm_to_vmem [thread:$0]  %s9, 2048, %s105, [#allocation12], 128, 128, 8
    $region41: #{masked_mha_forward.1} parent=1 // pred_fallthru
      _
    // Predicated region
    $region42: #{masked_mha_forward.1} parent=1 // pred_check
      _
    $region43: #{masked_mha_forward.1} parent=1 // pred_check_branch
      %112 = sbr.rel (0) target = $region45
    $region44: #{masked_mha_forward.1} parent=1 // pred_region
      _
    $region45: #{masked_mha_forward.1} parent=1 // pred_fallthru
      _
    // Predicated region
    $region46: #{masked_mha_forward.1} parent=1 // pred_check
      _
    $region47: #{masked_mha_forward.1} parent=1 // pred_check_branch
      %114 = sbr.rel (0) target = $region49
    $region48: #{masked_mha_forward.1} parent=1 // pred_region
      %115 = dma.done [#allocation3], 512
    $region49: #{masked_mha_forward.1} parent=1 // pred_fallthru
      _
    // Predicated region
    $region50: #{masked_mha_forward.1} parent=1 // pred_check
      _
    $region51: #{masked_mha_forward.1} parent=1 // pred_check_branch
      %117 = sbr.rel (0) target = $region53
    $region52: #{masked_mha_forward.1} parent=1 // pred_region
      %118 = dma.done [#allocation6], 512
    $region53: #{masked_mha_forward.1} parent=1 // pred_fallthru
      _
    // Predicated region
    $region54: #{masked_mha_forward.1} parent=1 // pred_check
      _
    $region55: #{masked_mha_forward.1} parent=1 // pred_check_branch
      %120 = sbr.rel (0) target = $region57
    $region56: #{masked_mha_forward.1} parent=1 // pred_region
      %121 = dma.done [#allocation6], 512
    $region57: #{masked_mha_forward.1} parent=1 // pred_fallthru
      _
    // Predicated region
    $region58: #{masked_mha_forward.1} parent=1 // pred_check
      _
    $region59: #{masked_mha_forward.1} parent=1 // pred_check_branch
      %123 = sbr.rel (0) target = $region61
    $region60: #{masked_mha_forward.1} parent=1 // pred_region
      %124 = dma.done [#allocation9], 2048
    $region61: #{masked_mha_forward.1} parent=1 // pred_fallthru
      _
    // Predicated region
    $region62: #{masked_mha_forward.1} parent=1 // pred_check
      _
    $region63: #{masked_mha_forward.1} parent=1 // pred_check_branch
      %126 = sbr.rel (0) target = $region65
    $region64: #{masked_mha_forward.1} parent=1 // pred_region
      %127 = dma.done [#allocation9], 2048
    $region65: #{masked_mha_forward.1} parent=1 // pred_fallthru
      _
    // Predicated region
    $region66: #{masked_mha_forward.1} parent=1 // pred_check
      _
    $region67: #{masked_mha_forward.1} parent=1 // pred_check_branch
      %129 = sbr.rel (0) target = $region69
    $region68: #{masked_mha_forward.1} parent=1 // pred_region
      %130 = dma.done [#allocation12], 2048
    $region69: #{masked_mha_forward.1} parent=1 // pred_fallthru
      _
    // Predicated region
    $region70: #{masked_mha_forward.1} parent=1 // pred_check
      _
    $region71: #{masked_mha_forward.1} parent=1 // pred_check_branch
      %132 = sbr.rel (0) target = $region73
    $region72: #{masked_mha_forward.1} parent=1 // pred_region
      %133 = dma.done [#allocation12], 2048
    $region73: #{masked_mha_forward.1} parent=1 // pred_fallthru
      _
    %v134 = vld [vmem:[#allocation2] sm:$0xff]
    %v135 = vld [vmem:[#allocation2 + $0x8] sm:$0xff]
    %v136 = vld [vmem:[#allocation2 + $0x10] sm:$0xff]
    %v137 = vld [vmem:[#allocation2 + $0x18] sm:$0xff]
    %v138 = vld [vmem:[#allocation8] sm:$0xff]
    %v139 = vld [vmem:[#allocation8 + $0x8] sm:$0xff]
    %v140 = vld [vmem:[#allocation8 + $0x10] sm:$0xff]
    %v141 = vld [vmem:[#allocation8 + $0x18] sm:$0xff]
    %v142 = vld [vmem:[#allocation8 + $0x20] sm:$0xff]
    %v143 = vld [vmem:[#allocation8 + $0x28] sm:$0xff]
    %v144 = vld [vmem:[#allocation8 + $0x30] sm:$0xff]
    %v145 = vld [vmem:[#allocation8 + $0x38] sm:$0xff]
    %v146 = vld [vmem:[#allocation8 + $0x40] sm:$0xff]
    %v147 = vld [vmem:[#allocation8 + $0x48] sm:$0xff]
    %v148 = vld [vmem:[#allocation8 + $0x50] sm:$0xff]
    %v149 = vld [vmem:[#allocation8 + $0x58] sm:$0xff]
    %v150 = vld [vmem:[#allocation8 + $0x60] sm:$0xff]
    %v151 = vld [vmem:[#allocation8 + $0x68] sm:$0xff]
    %v152 = vld [vmem:[#allocation8 + $0x70] sm:$0xff]
    %v153 = vld [vmem:[#allocation8 + $0x78] sm:$0xff]
    %v154 = vld [vmem:[%s4] sm:$0x1]
    %v156 = vlaneseq
    %v157 = vshrl.u32 %v156, 7
    %v158 = vsub.s32 0, %v157
    %v159 = vrot.slane %v154, %v158
    %161 = vmatprep.subr.mxu0 0.0
    %162 = vmatpush1.xpose.msra.mxu0 %v153
    %163 = vmatprep.subr.mxu0 0.0
    %164 = vmatpush1.xpose.msra.mxu0 %v152
    %165 = vmatprep.subr.mxu0 0.0
    %166 = vmatpush1.xpose.msra.mxu0 %v151
    %167 = vmatprep.subr.mxu0 0.0
    %168 = vmatpush1.xpose.msra.mxu0 %v150
    %169 = vmatprep.subr.mxu0 0.0
    %170 = vmatpush1.xpose.msra.mxu0 %v149
    %171 = vmatprep.subr.mxu0 0.0
    %172 = vmatpush1.xpose.msra.mxu0 %v148
    %173 = vmatprep.subr.mxu0 0.0
    %174 = vmatpush1.xpose.msra.mxu0 %v147
    %175 = vmatprep.subr.mxu0 0.0
    %176 = vmatpush1.xpose.msra.mxu0 %v146
    %177 = vmatprep.subr.mxu0 0.0
    %178 = vmatpush1.xpose.msra.mxu0 %v145
    %179 = vmatprep.subr.mxu0 0.0
    %180 = vmatpush1.xpose.msra.mxu0 %v144
    %181 = vmatprep.subr.mxu0 0.0
    %182 = vmatpush1.xpose.msra.mxu0 %v143
    %183 = vmatprep.subr.mxu0 0.0
    %184 = vmatpush1.xpose.msra.mxu0 %v142
    %185 = vmatprep.subr.mxu0 0.0
    %186 = vmatpush1.xpose.msra.mxu0 %v141
    %187 = vmatprep.subr.mxu0 0.0
    %188 = vmatpush1.xpose.msra.mxu0 %v140
    %189 = vmatprep.subr.mxu0 0.0
    %190 = vmatpush1.xpose.msra.mxu0 %v139
    %191 = vmatprep.subr.mxu0 0.0
    %192 = vmatpush1.xpose.msra.mxu0 %v138
    %193 = vmatprep.subr.mxu0 0.0
    %194 = vmatpush2.xpose.msra.mxu0 0.0
    %195 = vmatprep.subr.mxu0 0.0
    %196 = vmatpush2.xpose.msra.mxu0 0.0
    %197 = vmatprep.subr.mxu0 0.0
    %198 = vmatpush2.xpose.msra.mxu0 0.0
    %199 = vmatprep.subr.mxu0 0.0
    %200 = vmatpush2.xpose.msra.mxu0 0.0
    %201 = vmatprep.subr.mxu0 0.0
    %202 = vmatpush2.xpose.msra.mxu0 0.0
    %203 = vmatprep.subr.mxu0 0.0
    %204 = vmatpush2.xpose.msra.mxu0 0.0
    %205 = vmatprep.subr.mxu0 0.0
    %206 = vmatpush2.xpose.msra.mxu0 0.0
    %207 = vmatprep.subr.mxu0 0.0
    %208 = vmatpush2.xpose.msra.mxu0 0.0
    %209 = vmatprep.subr.mxu0 0.0
    %210 = vmatpush2.xpose.msra.mxu0 0.0
    %211 = vmatprep.subr.mxu0 0.0
    %212 = vmatpush2.xpose.msra.mxu0 0.0
    %213 = vmatprep.subr.mxu0 0.0
    %214 = vmatpush2.xpose.msra.mxu0 0.0
    %215 = vmatprep.subr.mxu0 0.0
    %216 = vmatpush2.xpose.msra.mxu0 0.0
    %217 = vmatprep.subr.mxu0 0.0
    %218 = vmatpush2.xpose.msra.mxu0 0.0
    %219 = vmatprep.subr.mxu0 0.0
    %220 = vmatpush2.xpose.msra.mxu0 0.0
    %221 = vmatprep.subr.mxu0 0.0
    %222 = vmatpush2.xpose.msra.mxu0 0.0
    %223 = vmatprep.subr.mxu0 0.0
    %224 = vmatpush2.xpose.msra.mxu0 0.0
    %225 = vmatprep.mubr.f32.mxu0 0.0
    %226 = vmatmul.mubr.f32.gmra.mxu0 %v134
    %v227 = vpop.f32.mrf.mxu0
    %v228 = vadd.f32 %v159, %v227
    %v229 = vpop.f32.mrf.mxu0
    %230 = vmatprep.mubr.f32.mxu0 0.0
    %231 = vmatmul.mubr.f32.gmra.mxu0 %v135
    %v232 = vpop.f32.mrf.mxu0
    %v233 = vadd.f32 %v159, %v232
    %v234 = vpop.f32.mrf.mxu0
    %235 = vmatprep.mubr.f32.mxu0 0.0
    %236 = vmatmul.mubr.f32.gmra.mxu0 %v136
    %v237 = vpop.f32.mrf.mxu0
    %v238 = vadd.f32 %v159, %v237
    %v239 = vpop.f32.mrf.mxu0
    %240 = vmatprep.mubr.f32.mxu0 0.0
    %241 = vmatmul.mubr.f32.gmra.mxu0 %v137
    %v242 = vpop.f32.mrf.mxu0
    %v243 = vadd.f32 %v159, %v242
    %v244 = vpop.f32.mrf.mxu0
    %245 = vdwg.mxu0
    %v246 = vld [vmem:[#allocation5] sm:$0xff]
    %v247 = vld [vmem:[#allocation5 + $0x8] sm:$0xff]
    %v248 = vld [vmem:[#allocation5 + $0x10] sm:$0xff]
    %v249 = vld [vmem:[#allocation5 + $0x18] sm:$0xff]
    %v250 = vld [vmem:[#allocation10] sm:$0xff]
    %v251 = vld [vmem:[#allocation10 + $0x8] sm:$0xff]
    %v252 = vld [vmem:[#allocation10 + $0x10] sm:$0xff]
    %v253 = vld [vmem:[#allocation10 + $0x18] sm:$0xff]
    %v254 = vld [vmem:[#allocation10 + $0x20] sm:$0xff]
    %v255 = vld [vmem:[#allocation10 + $0x28] sm:$0xff]
    %v256 = vld [vmem:[#allocation10 + $0x30] sm:$0xff]
    %v257 = vld [vmem:[#allocation10 + $0x38] sm:$0xff]
    %v258 = vld [vmem:[#allocation10 + $0x40] sm:$0xff]
    %v259 = vld [vmem:[#allocation10 + $0x48] sm:$0xff]
    %v260 = vld [vmem:[#allocation10 + $0x50] sm:$0xff]
    %v261 = vld [vmem:[#allocation10 + $0x58] sm:$0xff]
    %v262 = vld [vmem:[#allocation10 + $0x60] sm:$0xff]
    %v263 = vld [vmem:[#allocation10 + $0x68] sm:$0xff]
    %v264 = vld [vmem:[#allocation10 + $0x70] sm:$0xff]
    %v265 = vld [vmem:[#allocation10 + $0x78] sm:$0xff]
    %v266 = vld [vmem:[%s6] sm:$0x1]
    %v268 = vlaneseq
    %v269 = vshrl.u32 %v268, 7
    %v270 = vsub.s32 0, %v269
    %v271 = vrot.slane %v266, %v270
    %273 = vmatprep.subr.mxu0 0.0
    %274 = vmatpush1.xpose.msra.mxu0 %v265
    %275 = vmatprep.subr.mxu0 0.0
    %276 = vmatpush1.xpose.msra.mxu0 %v264
    %277 = vmatprep.subr.mxu0 0.0
    %278 = vmatpush1.xpose.msra.mxu0 %v263
    %279 = vmatprep.subr.mxu0 0.0
    %280 = vmatpush1.xpose.msra.mxu0 %v262
    %281 = vmatprep.subr.mxu0 0.0
    %282 = vmatpush1.xpose.msra.mxu0 %v261
    %283 = vmatprep.subr.mxu0 0.0
    %284 = vmatpush1.xpose.msra.mxu0 %v260
    %285 = vmatprep.subr.mxu0 0.0
    %286 = vmatpush1.xpose.msra.mxu0 %v259
    %287 = vmatprep.subr.mxu0 0.0
    %288 = vmatpush1.xpose.msra.mxu0 %v258
    %289 = vmatprep.subr.mxu0 0.0
    %290 = vmatpush1.xpose.msra.mxu0 %v257
    %291 = vmatprep.subr.mxu0 0.0
    %292 = vmatpush1.xpose.msra.mxu0 %v256
    %293 = vmatprep.subr.mxu0 0.0
    %294 = vmatpush1.xpose.msra.mxu0 %v255
    %295 = vmatprep.subr.mxu0 0.0
    %296 = vmatpush1.xpose.msra.mxu0 %v254
    %297 = vmatprep.subr.mxu0 0.0
    %298 = vmatpush1.xpose.msra.mxu0 %v253
    %299 = vmatprep.subr.mxu0 0.0
    %300 = vmatpush1.xpose.msra.mxu0 %v252
    %301 = vmatprep.subr.mxu0 0.0
    %302 = vmatpush1.xpose.msra.mxu0 %v251
    %303 = vmatprep.subr.mxu0 0.0
    %304 = vmatpush1.xpose.msra.mxu0 %v250
    %305 = vmatprep.subr.mxu0 0.0
    %306 = vmatpush2.xpose.msra.mxu0 0.0
    %307 = vmatprep.subr.mxu0 0.0
    %308 = vmatpush2.xpose.msra.mxu0 0.0
    %309 = vmatprep.subr.mxu0 0.0
    %310 = vmatpush2.xpose.msra.mxu0 0.0
    %311 = vmatprep.subr.mxu0 0.0
    %312 = vmatpush2.xpose.msra.mxu0 0.0
    %313 = vmatprep.subr.mxu0 0.0
    %314 = vmatpush2.xpose.msra.mxu0 0.0
    %315 = vmatprep.subr.mxu0 0.0
    %316 = vmatpush2.xpose.msra.mxu0 0.0
    %317 = vmatprep.subr.mxu0 0.0
    %318 = vmatpush2.xpose.msra.mxu0 0.0
    %319 = vmatprep.subr.mxu0 0.0
    %320 = vmatpush2.xpose.msra.mxu0 0.0
    %321 = vmatprep.subr.mxu0 0.0
    %322 = vmatpush2.xpose.msra.mxu0 0.0
    %323 = vmatprep.subr.mxu0 0.0
    %324 = vmatpush2.xpose.msra.mxu0 0.0
    %325 = vmatprep.subr.mxu0 0.0
    %326 = vmatpush2.xpose.msra.mxu0 0.0
    %327 = vmatprep.subr.mxu0 0.0
    %328 = vmatpush2.xpose.msra.mxu0 0.0
    %329 = vmatprep.subr.mxu0 0.0
    %330 = vmatpush2.xpose.msra.mxu0 0.0
    %331 = vmatprep.subr.mxu0 0.0
    %332 = vmatpush2.xpose.msra.mxu0 0.0
    %333 = vmatprep.subr.mxu0 0.0
    %334 = vmatpush2.xpose.msra.mxu0 0.0
    %335 = vmatprep.subr.mxu0 0.0
    %336 = vmatpush2.xpose.msra.mxu0 0.0
    %337 = vmatprep.mubr.f32.mxu0 0.0
    %338 = vmatmul.mubr.f32.gmra.mxu0 %v246
    %v339 = vpop.f32.mrf.mxu0
    %v340 = vadd.f32 %v271, %v339
    %v341 = vpop.f32.mrf.mxu0
    %342 = vmatprep.mubr.f32.mxu0 0.0
    %343 = vmatmul.mubr.f32.gmra.mxu0 %v247
    %v344 = vpop.f32.mrf.mxu0
    %v345 = vadd.f32 %v271, %v344
    %v346 = vpop.f32.mrf.mxu0
    %347 = vmatprep.mubr.f32.mxu0 0.0
    %348 = vmatmul.mubr.f32.gmra.mxu0 %v248
    %v349 = vpop.f32.mrf.mxu0
    %v350 = vadd.f32 %v271, %v349
    %v351 = vpop.f32.mrf.mxu0
    %352 = vmatprep.mubr.f32.mxu0 0.0
    %353 = vmatmul.mubr.f32.gmra.mxu0 %v249
    %v354 = vpop.f32.mrf.mxu0
    %v355 = vadd.f32 %v271, %v354
    %v356 = vpop.f32.mrf.mxu0
    %357 = vdwg.mxu0
    %v358 = vld [vmem:[#allocation7] sm:$0xff]
    %v359 = vld [vmem:[#allocation7 + $0x8] sm:$0xff]
    %v360 = vld [vmem:[#allocation7 + $0x10] sm:$0xff]
    %v361 = vld [vmem:[#allocation7 + $0x18] sm:$0xff]
    %v362 = vld [vmem:[#allocation11] sm:$0xff]
    %v363 = vld [vmem:[#allocation11 + $0x8] sm:$0xff]
    %v364 = vld [vmem:[#allocation11 + $0x10] sm:$0xff]
    %v365 = vld [vmem:[#allocation11 + $0x18] sm:$0xff]
    %v366 = vld [vmem:[#allocation11 + $0x20] sm:$0xff]
    %v367 = vld [vmem:[#allocation11 + $0x28] sm:$0xff]
    %v368 = vld [vmem:[#allocation11 + $0x30] sm:$0xff]
    %v369 = vld [vmem:[#allocation11 + $0x38] sm:$0xff]
    %v370 = vld [vmem:[#allocation11 + $0x40] sm:$0xff]
    %v371 = vld [vmem:[#allocation11 + $0x48] sm:$0xff]
    %v372 = vld [vmem:[#allocation11 + $0x50] sm:$0xff]
    %v373 = vld [vmem:[#allocation11 + $0x58] sm:$0xff]
    %v374 = vld [vmem:[#allocation11 + $0x60] sm:$0xff]
    %v375 = vld [vmem:[#allocation11 + $0x68] sm:$0xff]
    %v376 = vld [vmem:[#allocation11 + $0x70] sm:$0xff]
    %v377 = vld [vmem:[#allocation11 + $0x78] sm:$0xff]
    %v378 = vld [vmem:[%s8] sm:$0x1]
    %v380 = vlaneseq
    %v381 = vshrl.u32 %v380, 7
    %v382 = vsub.s32 0, %v381
    %v383 = vrot.slane %v378, %v382
    %385 = vmatprep.subr.mxu0 0.0
    %386 = vmatpush1.xpose.msra.mxu0 %v377
    %387 = vmatprep.subr.mxu0 0.0
    %388 = vmatpush1.xpose.msra.mxu0 %v376
    %389 = vmatprep.subr.mxu0 0.0
    %390 = vmatpush1.xpose.msra.mxu0 %v375
    %391 = vmatprep.subr.mxu0 0.0
    %392 = vmatpush1.xpose.msra.mxu0 %v374
    %393 = vmatprep.subr.mxu0 0.0
    %394 = vmatpush1.xpose.msra.mxu0 %v373
    %395 = vmatprep.subr.mxu0 0.0
    %396 = vmatpush1.xpose.msra.mxu0 %v372
    %397 = vmatprep.subr.mxu0 0.0
    %398 = vmatpush1.xpose.msra.mxu0 %v371
    %399 = vmatprep.subr.mxu0 0.0
    %400 = vmatpush1.xpose.msra.mxu0 %v370
    %401 = vmatprep.subr.mxu0 0.0
    %402 = vmatpush1.xpose.msra.mxu0 %v369
    %403 = vmatprep.subr.mxu0 0.0
    %404 = vmatpush1.xpose.msra.mxu0 %v368
    %405 = vmatprep.subr.mxu0 0.0
    %406 = vmatpush1.xpose.msra.mxu0 %v367
    %407 = vmatprep.subr.mxu0 0.0
    %408 = vmatpush1.xpose.msra.mxu0 %v366
    %409 = vmatprep.subr.mxu0 0.0
    %410 = vmatpush1.xpose.msra.mxu0 %v365
    %411 = vmatprep.subr.mxu0 0.0
    %412 = vmatpush1.xpose.msra.mxu0 %v364
    %413 = vmatprep.subr.mxu0 0.0
    %414 = vmatpush1.xpose.msra.mxu0 %v363
    %415 = vmatprep.subr.mxu0 0.0
    %416 = vmatpush1.xpose.msra.mxu0 %v362
    %417 = vmatprep.subr.mxu0 0.0
    %418 = vmatpush2.xpose.msra.mxu0 0.0
    %419 = vmatprep.subr.mxu0 0.0
    %420 = vmatpush2.xpose.msra.mxu0 0.0
    %421 = vmatprep.subr.mxu0 0.0
    %422 = vmatpush2.xpose.msra.mxu0 0.0
    %423 = vmatprep.subr.mxu0 0.0
    %424 = vmatpush2.xpose.msra.mxu0 0.0
    %425 = vmatprep.subr.mxu0 0.0
    %426 = vmatpush2.xpose.msra.mxu0 0.0
    %427 = vmatprep.subr.mxu0 0.0
    %428 = vmatpush2.xpose.msra.mxu0 0.0
    %429 = vmatprep.subr.mxu0 0.0
    %430 = vmatpush2.xpose.msra.mxu0 0.0
    %431 = vmatprep.subr.mxu0 0.0
    %432 = vmatpush2.xpose.msra.mxu0 0.0
    %433 = vmatprep.subr.mxu0 0.0
    %434 = vmatpush2.xpose.msra.mxu0 0.0
    %435 = vmatprep.subr.mxu0 0.0
    %436 = vmatpush2.xpose.msra.mxu0 0.0
    %437 = vmatprep.subr.mxu0 0.0
    %438 = vmatpush2.xpose.msra.mxu0 0.0
    %439 = vmatprep.subr.mxu0 0.0
    %440 = vmatpush2.xpose.msra.mxu0 0.0
    %441 = vmatprep.subr.mxu0 0.0
    %442 = vmatpush2.xpose.msra.mxu0 0.0
    %443 = vmatprep.subr.mxu0 0.0
    %444 = vmatpush2.xpose.msra.mxu0 0.0
    %445 = vmatprep.subr.mxu0 0.0
    %446 = vmatpush2.xpose.msra.mxu0 0.0
    %447 = vmatprep.subr.mxu0 0.0
    %448 = vmatpush2.xpose.msra.mxu0 0.0
    %449 = vmatprep.mubr.f32.mxu0 0.0
    %450 = vmatmul.mubr.f32.gmra.mxu0 %v358
    %v451 = vpop.f32.mrf.mxu0
    %v452 = vadd.f32 %v383, %v451
    %v453 = vpop.f32.mrf.mxu0
    %454 = vmatprep.mubr.f32.mxu0 0.0
    %455 = vmatmul.mubr.f32.gmra.mxu0 %v359
    %v456 = vpop.f32.mrf.mxu0
    %v457 = vadd.f32 %v383, %v456
    %v458 = vpop.f32.mrf.mxu0
    %459 = vmatprep.mubr.f32.mxu0 0.0
    %460 = vmatmul.mubr.f32.gmra.mxu0 %v360
    %v461 = vpop.f32.mrf.mxu0
    %v462 = vadd.f32 %v383, %v461
    %v463 = vpop.f32.mrf.mxu0
    %464 = vmatprep.mubr.f32.mxu0 0.0
    %465 = vmatmul.mubr.f32.gmra.mxu0 %v361
    %v466 = vpop.f32.mrf.mxu0
    %v467 = vadd.f32 %v383, %v466
    %v468 = vpop.f32.mrf.mxu0
    %469 = vdwg.mxu0
    %v470 = vlaneseq
    %v471 = vshrl.u32 %v470, 7
    %v472 = vadd.s32 %v471, 8
    %v473 = vlaneseq
    %v474 = vand.u32 %v473, 127
    %vm475 = vcmp.gt.s32.totalorder %v474, %v471
    %vm476 = vcmp.gt.s32.totalorder %v474, %v472
    %vm477 = vcmask 261120
    %v479 = vsel %vm477, %v228, 0
    %v482 = vsel %vm477, %v233, 0
    %v485 = vsel %vm477, %v340, 0
    %v488 = vsel %vm477, %v345, 0
    %490 = vmatprep.subr.mxu0 0.0
    %491 = vmatpush1.xpose.msra.mxu0 0.0
    %492 = vmatprep.subr.mxu0 0.0
    %493 = vmatpush1.xpose.msra.mxu0 0.0
    %494 = vmatprep.subr.mxu0 0.0
    %495 = vmatpush1.xpose.msra.mxu0 0.0
    %496 = vmatprep.subr.mxu0 0.0
    %497 = vmatpush1.xpose.msra.mxu0 0.0
    %498 = vmatprep.subr.mxu0 0.0
    %499 = vmatpush1.xpose.msra.mxu0 0.0
    %500 = vmatprep.subr.mxu0 0.0
    %501 = vmatpush1.xpose.msra.mxu0 0.0
    %502 = vmatprep.subr.mxu0 0.0
    %503 = vmatpush1.xpose.msra.mxu0 0.0
    %504 = vmatprep.subr.mxu0 0.0
    %505 = vmatpush1.xpose.msra.mxu0 0.0
    %506 = vmatprep.subr.mxu0 0.0
    %507 = vmatpush1.xpose.msra.mxu0 0.0
    %508 = vmatprep.subr.mxu0 0.0
    %509 = vmatpush1.xpose.msra.mxu0 0.0
    %510 = vmatprep.subr.mxu0 0.0
    %511 = vmatpush1.xpose.msra.mxu0 0.0
    %512 = vmatprep.subr.mxu0 0.0
    %513 = vmatpush1.xpose.msra.mxu0 0.0
    %514 = vmatprep.subr.mxu0 0.0
    %515 = vmatpush1.xpose.msra.mxu0 0.0
    %516 = vmatprep.subr.mxu0 0.0
    %517 = vmatpush1.xpose.msra.mxu0 0.0
    %518 = vmatprep.subr.mxu0 0.0
    %519 = vmatpush1.xpose.msra.mxu0 %v488
    %520 = vmatprep.subr.mxu0 0.0
    %521 = vmatpush1.xpose.msra.mxu0 %v485
    %522 = vmatprep.subr.mxu0 0.0
    %523 = vmatpush2.xpose.msra.mxu0 0.0
    %524 = vmatprep.subr.mxu0 0.0
    %525 = vmatpush2.xpose.msra.mxu0 0.0
    %526 = vmatprep.subr.mxu0 0.0
    %527 = vmatpush2.xpose.msra.mxu0 0.0
    %528 = vmatprep.subr.mxu0 0.0
    %529 = vmatpush2.xpose.msra.mxu0 0.0
    %530 = vmatprep.subr.mxu0 0.0
    %531 = vmatpush2.xpose.msra.mxu0 0.0
    %532 = vmatprep.subr.mxu0 0.0
    %533 = vmatpush2.xpose.msra.mxu0 0.0
    %534 = vmatprep.subr.mxu0 0.0
    %535 = vmatpush2.xpose.msra.mxu0 0.0
    %536 = vmatprep.subr.mxu0 0.0
    %537 = vmatpush2.xpose.msra.mxu0 0.0
    %538 = vmatprep.subr.mxu0 0.0
    %539 = vmatpush2.xpose.msra.mxu0 0.0
    %540 = vmatprep.subr.mxu0 0.0
    %541 = vmatpush2.xpose.msra.mxu0 0.0
    %542 = vmatprep.subr.mxu0 0.0
    %543 = vmatpush2.xpose.msra.mxu0 0.0
    %544 = vmatprep.subr.mxu0 0.0
    %545 = vmatpush2.xpose.msra.mxu0 0.0
    %546 = vmatprep.subr.mxu0 0.0
    %547 = vmatpush2.xpose.msra.mxu0 0.0
    %548 = vmatprep.subr.mxu0 0.0
    %549 = vmatpush2.xpose.msra.mxu0 0.0
    %550 = vmatprep.subr.mxu0 0.0
    %551 = vmatpush2.xpose.msra.mxu0 0.0
    %552 = vmatprep.subr.mxu0 0.0
    %553 = vmatpush2.xpose.msra.mxu0 0.0
    %554 = vmatprep.mubr.f32.mxu0 0.0
    %555 = vmatmul.mubr.f32.gmra.mxu0 %v479
    %v556 = vpop.f32.mrf.mxu0
    %v557 = vadd.f32 0.0, %v556
    %v558 = vpop.f32.mrf.mxu0
    %559 = vmatprep.mubr.f32.mxu0 0.0
    %560 = vmatmul.mubr.f32.gmra.mxu0 %v482
    %v561 = vpop.f32.mrf.mxu0
    %v562 = vadd.f32 0.0, %v561
    %v563 = vpop.f32.mrf.mxu0
    %564 = vdwg.mxu0
    %v565 = vsel %vm475, -1e+30, %v557
    %v566 = vsel %vm476, -1e+30, %v562
    %vm567 = vcmask 130048
    %v568 = vsel %vm567, %v565, -inf
    %569 = vmax.xlane.f32.xlu0 %v568
    %v570 = vpop.xlane.xlu0 %569
    %v571 = vsel %vm567, %v566, -inf
    %572 = vmax.xlane.f32.xlu0 %v571
    %v573 = vpop.xlane.xlu0 %572
    %v574 = vsub.f32 %v565, %v570
    %v575 = vsub.f32 %v566, %v573
    %v576 = vmul.f32 %v574, 1.442695
    %v577 = vpow.pop %v576
    %v578 = vmul.f32 %v575, 1.442695
    %v579 = vpow.pop %v578
    %v580 = vsel %vm567, %v577, 0.0
    %581 = vadd.xlane.f32.xlu0 %v580
    %v582 = vpop.xlane.xlu0 %581
    %v583 = vsel %vm567, %v579, 0.0
    %584 = vadd.xlane.f32.xlu0 %v583
    %v585 = vpop.xlane.xlu0 %584
    %v586 = vrcp.pop %v582
    %v587 = vrcp.pop %v585
    %v588 = vmul.f32 %v582, %v586
    %v589 = vmul.f32 %v585, %v587
    %v590 = vsub.f32 2.0, %v588
    %v591 = vsub.f32 2.0, %v589
    %v592 = vmul.f32 %v586, %v590
    %v593 = vmul.f32 %v587, %v591
    %v594 = vmul.f32 %v577, %v592
    %v595 = vmul.f32 %v579, %v593
    %v597 = vsel %vm567, %v594, 0
    %v600 = vsel %vm567, %v595, 0
    %602 = vmatprep.subr.mxu0 0.0
    %603 = vmatpush1.msra.mxu0 0.0
    %604 = vmatprep.subr.mxu0 0.0
    %605 = vmatpush1.msra.mxu0 0.0
    %606 = vmatprep.subr.mxu0 0.0
    %607 = vmatpush1.msra.mxu0 0.0
    %608 = vmatprep.subr.mxu0 0.0
    %609 = vmatpush1.msra.mxu0 0.0
    %610 = vmatprep.subr.mxu0 0.0
    %611 = vmatpush1.msra.mxu0 0.0
    %612 = vmatprep.subr.mxu0 0.0
    %613 = vmatpush1.msra.mxu0 0.0
    %614 = vmatprep.subr.mxu0 0.0
    %615 = vmatpush1.msra.mxu0 0.0
    %616 = vmatprep.subr.mxu0 0.0
    %617 = vmatpush1.msra.mxu0 0.0
    %618 = vmatprep.subr.mxu0 0.0
    %619 = vmatpush1.msra.mxu0 0.0
    %620 = vmatprep.subr.mxu0 0.0
    %621 = vmatpush1.msra.mxu0 0.0
    %622 = vmatprep.subr.mxu0 0.0
    %623 = vmatpush1.msra.mxu0 0.0
    %624 = vmatprep.subr.mxu0 0.0
    %625 = vmatpush1.msra.mxu0 0.0
    %626 = vmatprep.subr.mxu0 0.0
    %627 = vmatpush1.msra.mxu0 0.0
    %628 = vmatprep.subr.mxu0 0.0
    %629 = vmatpush1.msra.mxu0 0.0
    %630 = vmatprep.subr.mxu0 0.0
    %631 = vmatpush1.msra.mxu0 %v457
    %632 = vmatprep.subr.mxu0 0.0
    %633 = vmatpush1.msra.mxu0 %v452
    %634 = vmatprep.subr.mxu0 0.0
    %635 = vmatpush2.msra.mxu0 0.0
    %636 = vmatprep.subr.mxu0 0.0
    %637 = vmatpush2.msra.mxu0 0.0
    %638 = vmatprep.subr.mxu0 0.0
    %639 = vmatpush2.msra.mxu0 0.0
    %640 = vmatprep.subr.mxu0 0.0
    %641 = vmatpush2.msra.mxu0 0.0
    %642 = vmatprep.subr.mxu0 0.0
    %643 = vmatpush2.msra.mxu0 0.0
    %644 = vmatprep.subr.mxu0 0.0
    %645 = vmatpush2.msra.mxu0 0.0
    %646 = vmatprep.subr.mxu0 0.0
    %647 = vmatpush2.msra.mxu0 0.0
    %648 = vmatprep.subr.mxu0 0.0
    %649 = vmatpush2.msra.mxu0 0.0
    %650 = vmatprep.subr.mxu0 0.0
    %651 = vmatpush2.msra.mxu0 0.0
    %652 = vmatprep.subr.mxu0 0.0
    %653 = vmatpush2.msra.mxu0 0.0
    %654 = vmatprep.subr.mxu0 0.0
    %655 = vmatpush2.msra.mxu0 0.0
    %656 = vmatprep.subr.mxu0 0.0
    %657 = vmatpush2.msra.mxu0 0.0
    %658 = vmatprep.subr.mxu0 0.0
    %659 = vmatpush2.msra.mxu0 0.0
    %660 = vmatprep.subr.mxu0 0.0
    %661 = vmatpush2.msra.mxu0 0.0
    %662 = vmatprep.subr.mxu0 0.0
    %663 = vmatpush2.msra.mxu0 0.0
    %664 = vmatprep.subr.mxu0 0.0
    %665 = vmatpush2.msra.mxu0 0.0
    %666 = vmatprep.mubr.f32.mxu0 0.0
    %667 = vmatmul.mubr.f32.gmra.mxu0 %v597
    %v668 = vpop.f32.mrf.mxu0
    %v669 = vadd.f32 0.0, %v668
    %v670 = vpop.f32.mrf.mxu0
    %671 = vmatprep.mubr.f32.mxu0 0.0
    %672 = vmatmul.mubr.f32.gmra.mxu0 %v600
    %v673 = vpop.f32.mrf.mxu0
    %v674 = vadd.f32 0.0, %v673
    %v675 = vpop.f32.mrf.mxu0
    %676 = vdwg.mxu0
    %v678 = vsel %vm477, %v238, 0
    %v681 = vsel %vm477, %v243, 0
    %v684 = vsel %vm477, %v350, 0
    %v687 = vsel %vm477, %v355, 0
    %689 = vmatprep.subr.mxu0 0.0
    %690 = vmatpush1.xpose.msra.mxu0 0.0
    %691 = vmatprep.subr.mxu0 0.0
    %692 = vmatpush1.xpose.msra.mxu0 0.0
    %693 = vmatprep.subr.mxu0 0.0
    %694 = vmatpush1.xpose.msra.mxu0 0.0
    %695 = vmatprep.subr.mxu0 0.0
    %696 = vmatpush1.xpose.msra.mxu0 0.0
    %697 = vmatprep.subr.mxu0 0.0
    %698 = vmatpush1.xpose.msra.mxu0 0.0
    %699 = vmatprep.subr.mxu0 0.0
    %700 = vmatpush1.xpose.msra.mxu0 0.0
    %701 = vmatprep.subr.mxu0 0.0
    %702 = vmatpush1.xpose.msra.mxu0 0.0
    %703 = vmatprep.subr.mxu0 0.0
    %704 = vmatpush1.xpose.msra.mxu0 0.0
    %705 = vmatprep.subr.mxu0 0.0
    %706 = vmatpush1.xpose.msra.mxu0 0.0
    %707 = vmatprep.subr.mxu0 0.0
    %708 = vmatpush1.xpose.msra.mxu0 0.0
    %709 = vmatprep.subr.mxu0 0.0
    %710 = vmatpush1.xpose.msra.mxu0 0.0
    %711 = vmatprep.subr.mxu0 0.0
    %712 = vmatpush1.xpose.msra.mxu0 0.0
    %713 = vmatprep.subr.mxu0 0.0
    %714 = vmatpush1.xpose.msra.mxu0 0.0
    %715 = vmatprep.subr.mxu0 0.0
    %716 = vmatpush1.xpose.msra.mxu0 0.0
    %717 = vmatprep.subr.mxu0 0.0
    %718 = vmatpush1.xpose.msra.mxu0 %v687
    %719 = vmatprep.subr.mxu0 0.0
    %720 = vmatpush1.xpose.msra.mxu0 %v684
    %721 = vmatprep.subr.mxu0 0.0
    %722 = vmatpush2.xpose.msra.mxu0 0.0
    %723 = vmatprep.subr.mxu0 0.0
    %724 = vmatpush2.xpose.msra.mxu0 0.0
    %725 = vmatprep.subr.mxu0 0.0
    %726 = vmatpush2.xpose.msra.mxu0 0.0
    %727 = vmatprep.subr.mxu0 0.0
    %728 = vmatpush2.xpose.msra.mxu0 0.0
    %729 = vmatprep.subr.mxu0 0.0
    %730 = vmatpush2.xpose.msra.mxu0 0.0
    %731 = vmatprep.subr.mxu0 0.0
    %732 = vmatpush2.xpose.msra.mxu0 0.0
    %733 = vmatprep.subr.mxu0 0.0
    %734 = vmatpush2.xpose.msra.mxu0 0.0
    %735 = vmatprep.subr.mxu0 0.0
    %736 = vmatpush2.xpose.msra.mxu0 0.0
    %737 = vmatprep.subr.mxu0 0.0
    %738 = vmatpush2.xpose.msra.mxu0 0.0
    %739 = vmatprep.subr.mxu0 0.0
    %740 = vmatpush2.xpose.msra.mxu0 0.0
    %741 = vmatprep.subr.mxu0 0.0
    %742 = vmatpush2.xpose.msra.mxu0 0.0
    %743 = vmatprep.subr.mxu0 0.0
    %744 = vmatpush2.xpose.msra.mxu0 0.0
    %745 = vmatprep.subr.mxu0 0.0
    %746 = vmatpush2.xpose.msra.mxu0 0.0
    %747 = vmatprep.subr.mxu0 0.0
    %748 = vmatpush2.xpose.msra.mxu0 0.0
    %749 = vmatprep.subr.mxu0 0.0
    %750 = vmatpush2.xpose.msra.mxu0 0.0
    %751 = vmatprep.subr.mxu0 0.0
    %752 = vmatpush2.xpose.msra.mxu0 0.0
    %753 = vmatprep.mubr.f32.mxu0 0.0
    %754 = vmatmul.mubr.f32.gmra.mxu0 %v678
    %v755 = vpop.f32.mrf.mxu0
    %v756 = vadd.f32 0.0, %v755
    %v757 = vpop.f32.mrf.mxu0
    %758 = vmatprep.mubr.f32.mxu0 0.0
    %759 = vmatmul.mubr.f32.gmra.mxu0 %v681
    %v760 = vpop.f32.mrf.mxu0
    %v761 = vadd.f32 0.0, %v760
    %v762 = vpop.f32.mrf.mxu0
    %763 = vdwg.mxu0
    %v764 = vsel %vm475, -1e+30, %v756
    %v765 = vsel %vm476, -1e+30, %v761
    %v766 = vsel %vm567, %v764, -inf
    %767 = vmax.xlane.f32.xlu0 %v766
    %v768 = vpop.xlane.xlu0 %767
    %v769 = vsel %vm567, %v765, -inf
    %770 = vmax.xlane.f32.xlu0 %v769
    %v771 = vpop.xlane.xlu0 %770
    %v772 = vsub.f32 %v764, %v768
    %v773 = vsub.f32 %v765, %v771
    %v774 = vmul.f32 %v772, 1.442695
    %v775 = vpow.pop %v774
    %v776 = vmul.f32 %v773, 1.442695
    %v777 = vpow.pop %v776
    %v778 = vsel %vm567, %v775, 0.0
    %779 = vadd.xlane.f32.xlu0 %v778
    %v780 = vpop.xlane.xlu0 %779
    %v781 = vsel %vm567, %v777, 0.0
    %782 = vadd.xlane.f32.xlu0 %v781
    %v783 = vpop.xlane.xlu0 %782
    %v784 = vrcp.pop %v780
    %v785 = vrcp.pop %v783
    %v786 = vmul.f32 %v780, %v784
    %v787 = vmul.f32 %v783, %v785
    %v788 = vsub.f32 2.0, %v786
    %v789 = vsub.f32 2.0, %v787
    %v790 = vmul.f32 %v784, %v788
    %v791 = vmul.f32 %v785, %v789
    %v792 = vmul.f32 %v775, %v790
    %v793 = vmul.f32 %v777, %v791
    %v795 = vsel %vm567, %v792, 0
    %v798 = vsel %vm567, %v793, 0
    %800 = vmatprep.subr.mxu0 0.0
    %801 = vmatpush1.msra.mxu0 0.0
    %802 = vmatprep.subr.mxu0 0.0
    %803 = vmatpush1.msra.mxu0 0.0
    %804 = vmatprep.subr.mxu0 0.0
    %805 = vmatpush1.msra.mxu0 0.0
    %806 = vmatprep.subr.mxu0 0.0
    %807 = vmatpush1.msra.mxu0 0.0
    %808 = vmatprep.subr.mxu0 0.0
    %809 = vmatpush1.msra.mxu0 0.0
    %810 = vmatprep.subr.mxu0 0.0
    %811 = vmatpush1.msra.mxu0 0.0
    %812 = vmatprep.subr.mxu0 0.0
    %813 = vmatpush1.msra.mxu0 0.0
    %814 = vmatprep.subr.mxu0 0.0
    %815 = vmatpush1.msra.mxu0 0.0
    %816 = vmatprep.subr.mxu0 0.0
    %817 = vmatpush1.msra.mxu0 0.0
    %818 = vmatprep.subr.mxu0 0.0
    %819 = vmatpush1.msra.mxu0 0.0
    %820 = vmatprep.subr.mxu0 0.0
    %821 = vmatpush1.msra.mxu0 0.0
    %822 = vmatprep.subr.mxu0 0.0
    %823 = vmatpush1.msra.mxu0 0.0
    %824 = vmatprep.subr.mxu0 0.0
    %825 = vmatpush1.msra.mxu0 0.0
    %826 = vmatprep.subr.mxu0 0.0
    %827 = vmatpush1.msra.mxu0 0.0
    %828 = vmatprep.subr.mxu0 0.0
    %829 = vmatpush1.msra.mxu0 %v467
    %830 = vmatprep.subr.mxu0 0.0
    %831 = vmatpush1.msra.mxu0 %v462
    %832 = vmatprep.subr.mxu0 0.0
    %833 = vmatpush2.msra.mxu0 0.0
    %834 = vmatprep.subr.mxu0 0.0
    %835 = vmatpush2.msra.mxu0 0.0
    %836 = vmatprep.subr.mxu0 0.0
    %837 = vmatpush2.msra.mxu0 0.0
    %838 = vmatprep.subr.mxu0 0.0
    %839 = vmatpush2.msra.mxu0 0.0
    %840 = vmatprep.subr.mxu0 0.0
    %841 = vmatpush2.msra.mxu0 0.0
    %842 = vmatprep.subr.mxu0 0.0
    %843 = vmatpush2.msra.mxu0 0.0
    %844 = vmatprep.subr.mxu0 0.0
    %845 = vmatpush2.msra.mxu0 0.0
    %846 = vmatprep.subr.mxu0 0.0
    %847 = vmatpush2.msra.mxu0 0.0
    %848 = vmatprep.subr.mxu0 0.0
    %849 = vmatpush2.msra.mxu0 0.0
    %850 = vmatprep.subr.mxu0 0.0
    %851 = vmatpush2.msra.mxu0 0.0
    %852 = vmatprep.subr.mxu0 0.0
    %853 = vmatpush2.msra.mxu0 0.0
    %854 = vmatprep.subr.mxu0 0.0
    %855 = vmatpush2.msra.mxu0 0.0
    %856 = vmatprep.subr.mxu0 0.0
    %857 = vmatpush2.msra.mxu0 0.0
    %858 = vmatprep.subr.mxu0 0.0
    %859 = vmatpush2.msra.mxu0 0.0
    %860 = vmatprep.subr.mxu0 0.0
    %861 = vmatpush2.msra.mxu0 0.0
    %862 = vmatprep.subr.mxu0 0.0
    %863 = vmatpush2.msra.mxu0 0.0
    %864 = vmatprep.mubr.f32.mxu0 0.0
    %865 = vmatmul.mubr.f32.gmra.mxu0 %v795
    %v866 = vpop.f32.mrf.mxu0
    %v867 = vadd.f32 0.0, %v866
    %v868 = vpop.f32.mrf.mxu0
    %869 = vmatprep.mubr.f32.mxu0 0.0
    %870 = vmatmul.mubr.f32.gmra.mxu0 %v798
    %v871 = vpop.f32.mrf.mxu0
    %v872 = vadd.f32 0.0, %v871
    %v873 = vpop.f32.mrf.mxu0
    %874 = vdwg.mxu0
    %875 = vrot.lane.b32.xlu0 %v228, 96
    %v876 = vpop.permute.xlu0 %875
    %877 = vrot.lane.b32.xlu0 %v233, 96
    %v878 = vpop.permute.xlu0 %877
    %879 = vrot.lane.b32.xlu0 %v340, 96
    %v880 = vpop.permute.xlu0 %879
    %881 = vrot.lane.b32.xlu0 %v345, 96
    %v882 = vpop.permute.xlu0 %881
    %v883 = vsel %vm477, %v876, 0
    %v885 = vsel %vm477, %v878, 0
    %v887 = vsel %vm477, %v880, 0
    %v889 = vsel %vm477, %v882, 0
    %891 = vmatprep.subr.mxu0 0.0
    %892 = vmatpush1.xpose.msra.mxu0 0.0
    %893 = vmatprep.subr.mxu0 0.0
    %894 = vmatpush1.xpose.msra.mxu0 0.0
    %895 = vmatprep.subr.mxu0 0.0
    %896 = vmatpush1.xpose.msra.mxu0 0.0
    %897 = vmatprep.subr.mxu0 0.0
    %898 = vmatpush1.xpose.msra.mxu0 0.0
    %899 = vmatprep.subr.mxu0 0.0
    %900 = vmatpush1.xpose.msra.mxu0 0.0
    %901 = vmatprep.subr.mxu0 0.0
    %902 = vmatpush1.xpose.msra.mxu0 0.0
    %903 = vmatprep.subr.mxu0 0.0
    %904 = vmatpush1.xpose.msra.mxu0 0.0
    %905 = vmatprep.subr.mxu0 0.0
    %906 = vmatpush1.xpose.msra.mxu0 0.0
    %907 = vmatprep.subr.mxu0 0.0
    %908 = vmatpush1.xpose.msra.mxu0 0.0
    %909 = vmatprep.subr.mxu0 0.0
    %910 = vmatpush1.xpose.msra.mxu0 0.0
    %911 = vmatprep.subr.mxu0 0.0
    %912 = vmatpush1.xpose.msra.mxu0 0.0
    %913 = vmatprep.subr.mxu0 0.0
    %914 = vmatpush1.xpose.msra.mxu0 0.0
    %915 = vmatprep.subr.mxu0 0.0
    %916 = vmatpush1.xpose.msra.mxu0 0.0
    %917 = vmatprep.subr.mxu0 0.0
    %918 = vmatpush1.xpose.msra.mxu0 0.0
    %919 = vmatprep.subr.mxu0 0.0
    %920 = vmatpush1.xpose.msra.mxu0 %v889
    %921 = vmatprep.subr.mxu0 0.0
    %922 = vmatpush1.xpose.msra.mxu0 %v887
    %923 = vmatprep.subr.mxu0 0.0
    %924 = vmatpush2.xpose.msra.mxu0 0.0
    %925 = vmatprep.subr.mxu0 0.0
    %926 = vmatpush2.xpose.msra.mxu0 0.0
    %927 = vmatprep.subr.mxu0 0.0
    %928 = vmatpush2.xpose.msra.mxu0 0.0
    %929 = vmatprep.subr.mxu0 0.0
    %930 = vmatpush2.xpose.msra.mxu0 0.0
    %931 = vmatprep.subr.mxu0 0.0
    %932 = vmatpush2.xpose.msra.mxu0 0.0
    %933 = vmatprep.subr.mxu0 0.0
    %934 = vmatpush2.xpose.msra.mxu0 0.0
    %935 = vmatprep.subr.mxu0 0.0
    %936 = vmatpush2.xpose.msra.mxu0 0.0
    %937 = vmatprep.subr.mxu0 0.0
    %938 = vmatpush2.xpose.msra.mxu0 0.0
    %939 = vmatprep.subr.mxu0 0.0
    %940 = vmatpush2.xpose.msra.mxu0 0.0
    %941 = vmatprep.subr.mxu0 0.0
    %942 = vmatpush2.xpose.msra.mxu0 0.0
    %943 = vmatprep.subr.mxu0 0.0
    %944 = vmatpush2.xpose.msra.mxu0 0.0
    %945 = vmatprep.subr.mxu0 0.0
    %946 = vmatpush2.xpose.msra.mxu0 0.0
    %947 = vmatprep.subr.mxu0 0.0
    %948 = vmatpush2.xpose.msra.mxu0 0.0
    %949 = vmatprep.subr.mxu0 0.0
    %950 = vmatpush2.xpose.msra.mxu0 0.0
    %951 = vmatprep.subr.mxu0 0.0
    %952 = vmatpush2.xpose.msra.mxu0 0.0
    %953 = vmatprep.subr.mxu0 0.0
    %954 = vmatpush2.xpose.msra.mxu0 0.0
    %955 = vmatprep.mubr.f32.mxu0 0.0
    %956 = vmatmul.mubr.f32.gmra.mxu0 %v883
    %v957 = vpop.f32.mrf.mxu0
    %v958 = vadd.f32 0.0, %v957
    %v959 = vpop.f32.mrf.mxu0
    %960 = vmatprep.mubr.f32.mxu0 0.0
    %961 = vmatmul.mubr.f32.gmra.mxu0 %v885
    %v962 = vpop.f32.mrf.mxu0
    %v963 = vadd.f32 0.0, %v962
    %v964 = vpop.f32.mrf.mxu0
    %965 = vdwg.mxu0
    %v966 = vsel %vm475, -1e+30, %v958
    %v967 = vsel %vm476, -1e+30, %v963
    %v968 = vsel %vm567, %v966, -inf
    %969 = vmax.xlane.f32.xlu0 %v968
    %v970 = vpop.xlane.xlu0 %969
    %v971 = vsel %vm567, %v967, -inf
    %972 = vmax.xlane.f32.xlu0 %v971
    %v973 = vpop.xlane.xlu0 %972
    %v974 = vsub.f32 %v966, %v970
    %v975 = vsub.f32 %v967, %v973
    %v976 = vmul.f32 %v974, 1.442695
    %v977 = vpow.pop %v976
    %v978 = vmul.f32 %v975, 1.442695
    %v979 = vpow.pop %v978
    %v980 = vsel %vm567, %v977, 0.0
    %981 = vadd.xlane.f32.xlu0 %v980
    %v982 = vpop.xlane.xlu0 %981
    %v983 = vsel %vm567, %v979, 0.0
    %984 = vadd.xlane.f32.xlu0 %v983
    %v985 = vpop.xlane.xlu0 %984
    %v986 = vrcp.pop %v982
    %v987 = vrcp.pop %v985
    %v988 = vmul.f32 %v982, %v986
    %v989 = vmul.f32 %v985, %v987
    %v990 = vsub.f32 2.0, %v988
    %v991 = vsub.f32 2.0, %v989
    %v992 = vmul.f32 %v986, %v990
    %v993 = vmul.f32 %v987, %v991
    %v994 = vmul.f32 %v977, %v992
    %v995 = vmul.f32 %v979, %v993
    %998 = vrot.lane.b32.xlu0 %v452, 96
    %v999 = vpop.permute.xlu0 %998
    %1000 = vrot.lane.b32.xlu0 %v457, 96
    %v1001 = vpop.permute.xlu0 %1000
    %v1005 = vsel %vm567, %v994, 0
    %v1008 = vsel %vm567, %v995, 0
    %1010 = vmatprep.subr.mxu0 0.0
    %1011 = vmatpush1.msra.mxu0 0.0
    %1012 = vmatprep.subr.mxu0 0.0
    %1013 = vmatpush1.msra.mxu0 0.0
    %1014 = vmatprep.subr.mxu0 0.0
    %1015 = vmatpush1.msra.mxu0 0.0
    %1016 = vmatprep.subr.mxu0 0.0
    %1017 = vmatpush1.msra.mxu0 0.0
    %1018 = vmatprep.subr.mxu0 0.0
    %1019 = vmatpush1.msra.mxu0 0.0
    %1020 = vmatprep.subr.mxu0 0.0
    %1021 = vmatpush1.msra.mxu0 0.0
    %1022 = vmatprep.subr.mxu0 0.0
    %1023 = vmatpush1.msra.mxu0 0.0
    %1024 = vmatprep.subr.mxu0 0.0
    %1025 = vmatpush1.msra.mxu0 0.0
    %1026 = vmatprep.subr.mxu0 0.0
    %1027 = vmatpush1.msra.mxu0 0.0
    %1028 = vmatprep.subr.mxu0 0.0
    %1029 = vmatpush1.msra.mxu0 0.0
    %1030 = vmatprep.subr.mxu0 0.0
    %1031 = vmatpush1.msra.mxu0 0.0
    %1032 = vmatprep.subr.mxu0 0.0
    %1033 = vmatpush1.msra.mxu0 0.0
    %1034 = vmatprep.subr.mxu0 0.0
    %1035 = vmatpush1.msra.mxu0 0.0
    %1036 = vmatprep.subr.mxu0 0.0
    %1037 = vmatpush1.msra.mxu0 0.0
    %1038 = vmatprep.subr.mxu0 0.0
    %1039 = vmatpush1.msra.mxu0 %v1001
    %1040 = vmatprep.subr.mxu0 0.0
    %1041 = vmatpush1.msra.mxu0 %v999
    %1042 = vmatprep.subr.mxu0 0.0
    %1043 = vmatpush2.msra.mxu0 0.0
    %1044 = vmatprep.subr.mxu0 0.0
    %1045 = vmatpush2.msra.mxu0 0.0
    %1046 = vmatprep.subr.mxu0 0.0
    %1047 = vmatpush2.msra.mxu0 0.0
    %1048 = vmatprep.subr.mxu0 0.0
    %1049 = vmatpush2.msra.mxu0 0.0
    %1050 = vmatprep.subr.mxu0 0.0
    %1051 = vmatpush2.msra.mxu0 0.0
    %1052 = vmatprep.subr.mxu0 0.0
    %1053 = vmatpush2.msra.mxu0 0.0
    %1054 = vmatprep.subr.mxu0 0.0
    %1055 = vmatpush2.msra.mxu0 0.0
    %1056 = vmatprep.subr.mxu0 0.0
    %1057 = vmatpush2.msra.mxu0 0.0
    %1058 = vmatprep.subr.mxu0 0.0
    %1059 = vmatpush2.msra.mxu0 0.0
    %1060 = vmatprep.subr.mxu0 0.0
    %1061 = vmatpush2.msra.mxu0 0.0
    %1062 = vmatprep.subr.mxu0 0.0
    %1063 = vmatpush2.msra.mxu0 0.0
    %1064 = vmatprep.subr.mxu0 0.0
    %1065 = vmatpush2.msra.mxu0 0.0
    %1066 = vmatprep.subr.mxu0 0.0
    %1067 = vmatpush2.msra.mxu0 0.0
    %1068 = vmatprep.subr.mxu0 0.0
    %1069 = vmatpush2.msra.mxu0 0.0
    %1070 = vmatprep.subr.mxu0 0.0
    %1071 = vmatpush2.msra.mxu0 0.0
    %1072 = vmatprep.subr.mxu0 0.0
    %1073 = vmatpush2.msra.mxu0 0.0
    %1074 = vmatprep.mubr.f32.mxu0 0.0
    %1075 = vmatmul.mubr.f32.gmra.mxu0 %v1005
    %v1076 = vpop.f32.mrf.mxu0
    %v1077 = vadd.f32 0.0, %v1076
    %v1078 = vpop.f32.mrf.mxu0
    %1079 = vmatprep.mubr.f32.mxu0 0.0
    %1080 = vmatmul.mubr.f32.gmra.mxu0 %v1008
    %v1081 = vpop.f32.mrf.mxu0
    %v1082 = vadd.f32 0.0, %v1081
    %v1083 = vpop.f32.mrf.mxu0
    %1084 = vdwg.mxu0
    %1085 = vrot.lane.b32.xlu0 %v238, 96
    %v1086 = vpop.permute.xlu0 %1085
    %1087 = vrot.lane.b32.xlu0 %v243, 96
    %v1088 = vpop.permute.xlu0 %1087
    %1089 = vrot.lane.b32.xlu0 %v350, 96
    %v1090 = vpop.permute.xlu0 %1089
    %1091 = vrot.lane.b32.xlu0 %v355, 96
    %v1092 = vpop.permute.xlu0 %1091
    %v1093 = vsel %vm477, %v1086, 0
    %v1095 = vsel %vm477, %v1088, 0
    %v1097 = vsel %vm477, %v1090, 0
    %v1099 = vsel %vm477, %v1092, 0
    %1101 = vmatprep.subr.mxu0 0.0
    %1102 = vmatpush1.xpose.msra.mxu0 0.0
    %1103 = vmatprep.subr.mxu0 0.0
    %1104 = vmatpush1.xpose.msra.mxu0 0.0
    %1105 = vmatprep.subr.mxu0 0.0
    %1106 = vmatpush1.xpose.msra.mxu0 0.0
    %1107 = vmatprep.subr.mxu0 0.0
    %1108 = vmatpush1.xpose.msra.mxu0 0.0
    %1109 = vmatprep.subr.mxu0 0.0
    %1110 = vmatpush1.xpose.msra.mxu0 0.0
    %1111 = vmatprep.subr.mxu0 0.0
    %1112 = vmatpush1.xpose.msra.mxu0 0.0
    %1113 = vmatprep.subr.mxu0 0.0
    %1114 = vmatpush1.xpose.msra.mxu0 0.0
    %1115 = vmatprep.subr.mxu0 0.0
    %1116 = vmatpush1.xpose.msra.mxu0 0.0
    %1117 = vmatprep.subr.mxu0 0.0
    %1118 = vmatpush1.xpose.msra.mxu0 0.0
    %1119 = vmatprep.subr.mxu0 0.0
    %1120 = vmatpush1.xpose.msra.mxu0 0.0
    %1121 = vmatprep.subr.mxu0 0.0
    %1122 = vmatpush1.xpose.msra.mxu0 0.0
    %1123 = vmatprep.subr.mxu0 0.0
    %1124 = vmatpush1.xpose.msra.mxu0 0.0
    %1125 = vmatprep.subr.mxu0 0.0
    %1126 = vmatpush1.xpose.msra.mxu0 0.0
    %1127 = vmatprep.subr.mxu0 0.0
    %1128 = vmatpush1.xpose.msra.mxu0 0.0
    %1129 = vmatprep.subr.mxu0 0.0
    %1130 = vmatpush1.xpose.msra.mxu0 %v1099
    %1131 = vmatprep.subr.mxu0 0.0
    %1132 = vmatpush1.xpose.msra.mxu0 %v1097
    %1133 = vmatprep.subr.mxu0 0.0
    %1134 = vmatpush2.xpose.msra.mxu0 0.0
    %1135 = vmatprep.subr.mxu0 0.0
    %1136 = vmatpush2.xpose.msra.mxu0 0.0
    %1137 = vmatprep.subr.mxu0 0.0
    %1138 = vmatpush2.xpose.msra.mxu0 0.0
    %1139 = vmatprep.subr.mxu0 0.0
    %1140 = vmatpush2.xpose.msra.mxu0 0.0
    %1141 = vmatprep.subr.mxu0 0.0
    %1142 = vmatpush2.xpose.msra.mxu0 0.0
    %1143 = vmatprep.subr.mxu0 0.0
    %1144 = vmatpush2.xpose.msra.mxu0 0.0
    %1145 = vmatprep.subr.mxu0 0.0
    %1146 = vmatpush2.xpose.msra.mxu0 0.0
    %1147 = vmatprep.subr.mxu0 0.0
    %1148 = vmatpush2.xpose.msra.mxu0 0.0
    %1149 = vmatprep.subr.mxu0 0.0
    %1150 = vmatpush2.xpose.msra.mxu0 0.0
    %1151 = vmatprep.subr.mxu0 0.0
    %1152 = vmatpush2.xpose.msra.mxu0 0.0
    %1153 = vmatprep.subr.mxu0 0.0
    %1154 = vmatpush2.xpose.msra.mxu0 0.0
    %1155 = vmatprep.subr.mxu0 0.0
    %1156 = vmatpush2.xpose.msra.mxu0 0.0
    %1157 = vmatprep.subr.mxu0 0.0
    %1158 = vmatpush2.xpose.msra.mxu0 0.0
    %1159 = vmatprep.subr.mxu0 0.0
    %1160 = vmatpush2.xpose.msra.mxu0 0.0
    %1161 = vmatprep.subr.mxu0 0.0
    %1162 = vmatpush2.xpose.msra.mxu0 0.0
    %1163 = vmatprep.subr.mxu0 0.0
    %1164 = vmatpush2.xpose.msra.mxu0 0.0
    %1165 = vmatprep.mubr.f32.mxu0 0.0
    %1166 = vmatmul.mubr.f32.gmra.mxu0 %v1093
    %v1167 = vpop.f32.mrf.mxu0
    %v1168 = vadd.f32 0.0, %v1167
    %v1169 = vpop.f32.mrf.mxu0
    %1170 = vmatprep.mubr.f32.mxu0 0.0
    %1171 = vmatmul.mubr.f32.gmra.mxu0 %v1095
    %v1172 = vpop.f32.mrf.mxu0
    %v1173 = vadd.f32 0.0, %v1172
    %v1174 = vpop.f32.mrf.mxu0
    %1175 = vdwg.mxu0
    %v1176 = vsel %vm475, -1e+30, %v1168
    %v1177 = vsel %vm476, -1e+30, %v1173
    %v1178 = vsel %vm567, %v1176, -inf
    %1179 = vmax.xlane.f32.xlu0 %v1178
    %v1180 = vpop.xlane.xlu0 %1179
    %v1181 = vsel %vm567, %v1177, -inf
    %1182 = vmax.xlane.f32.xlu0 %v1181
    %v1183 = vpop.xlane.xlu0 %1182
    %v1184 = vsub.f32 %v1176, %v1180
    %v1185 = vsub.f32 %v1177, %v1183
    %v1186 = vmul.f32 %v1184, 1.442695
    %v1187 = vpow.pop %v1186
    %v1188 = vmul.f32 %v1185, 1.442695
    %v1189 = vpow.pop %v1188
    %v1190 = vsel %vm567, %v1187, 0.0
    %1191 = vadd.xlane.f32.xlu0 %v1190
    %v1192 = vpop.xlane.xlu0 %1191
    %v1193 = vsel %vm567, %v1189, 0.0
    %1194 = vadd.xlane.f32.xlu0 %v1193
    %v1195 = vpop.xlane.xlu0 %1194
    %v1196 = vrcp.pop %v1192
    %v1197 = vrcp.pop %v1195
    %v1198 = vmul.f32 %v1192, %v1196
    %v1199 = vmul.f32 %v1195, %v1197
    %v1200 = vsub.f32 2.0, %v1198
    %v1201 = vsub.f32 2.0, %v1199
    %v1202 = vmul.f32 %v1196, %v1200
    %v1203 = vmul.f32 %v1197, %v1201
    %v1204 = vmul.f32 %v1187, %v1202
    %v1205 = vmul.f32 %v1189, %v1203
    %1208 = vrot.lane.b32.xlu0 %v462, 96
    %v1209 = vpop.permute.xlu0 %1208
    %1210 = vrot.lane.b32.xlu0 %v467, 96
    %v1211 = vpop.permute.xlu0 %1210
    %v1215 = vsel %vm567, %v1204, 0
    %v1218 = vsel %vm567, %v1205, 0
    %1220 = vmatprep.subr.mxu0 0.0
    %1221 = vmatpush1.msra.mxu0 0.0
    %1222 = vmatprep.subr.mxu0 0.0
    %1223 = vmatpush1.msra.mxu0 0.0
    %1224 = vmatprep.subr.mxu0 0.0
    %1225 = vmatpush1.msra.mxu0 0.0
    %1226 = vmatprep.subr.mxu0 0.0
    %1227 = vmatpush1.msra.mxu0 0.0
    %1228 = vmatprep.subr.mxu0 0.0
    %1229 = vmatpush1.msra.mxu0 0.0
    %1230 = vmatprep.subr.mxu0 0.0
    %1231 = vmatpush1.msra.mxu0 0.0
    %1232 = vmatprep.subr.mxu0 0.0
    %1233 = vmatpush1.msra.mxu0 0.0
    %1234 = vmatprep.subr.mxu0 0.0
    %1235 = vmatpush1.msra.mxu0 0.0
    %1236 = vmatprep.subr.mxu0 0.0
    %1237 = vmatpush1.msra.mxu0 0.0
    %1238 = vmatprep.subr.mxu0 0.0
    %1239 = vmatpush1.msra.mxu0 0.0
    %1240 = vmatprep.subr.mxu0 0.0
    %1241 = vmatpush1.msra.mxu0 0.0
    %1242 = vmatprep.subr.mxu0 0.0
    %1243 = vmatpush1.msra.mxu0 0.0
    %1244 = vmatprep.subr.mxu0 0.0
    %1245 = vmatpush1.msra.mxu0 0.0
    %1246 = vmatprep.subr.mxu0 0.0
    %1247 = vmatpush1.msra.mxu0 0.0
    %1248 = vmatprep.subr.mxu0 0.0
    %1249 = vmatpush1.msra.mxu0 %v1211
    %1250 = vmatprep.subr.mxu0 0.0
    %1251 = vmatpush1.msra.mxu0 %v1209
    %1252 = vmatprep.subr.mxu0 0.0
    %1253 = vmatpush2.msra.mxu0 0.0
    %1254 = vmatprep.subr.mxu0 0.0
    %1255 = vmatpush2.msra.mxu0 0.0
    %1256 = vmatprep.subr.mxu0 0.0
    %1257 = vmatpush2.msra.mxu0 0.0
    %1258 = vmatprep.subr.mxu0 0.0
    %1259 = vmatpush2.msra.mxu0 0.0
    %1260 = vmatprep.subr.mxu0 0.0
    %1261 = vmatpush2.msra.mxu0 0.0
    %1262 = vmatprep.subr.mxu0 0.0
    %1263 = vmatpush2.msra.mxu0 0.0
    %1264 = vmatprep.subr.mxu0 0.0
    %1265 = vmatpush2.msra.mxu0 0.0
    %1266 = vmatprep.subr.mxu0 0.0
    %1267 = vmatpush2.msra.mxu0 0.0
    %1268 = vmatprep.subr.mxu0 0.0
    %1269 = vmatpush2.msra.mxu0 0.0
    %1270 = vmatprep.subr.mxu0 0.0
    %1271 = vmatpush2.msra.mxu0 0.0
    %1272 = vmatprep.subr.mxu0 0.0
    %1273 = vmatpush2.msra.mxu0 0.0
    %1274 = vmatprep.subr.mxu0 0.0
    %1275 = vmatpush2.msra.mxu0 0.0
    %1276 = vmatprep.subr.mxu0 0.0
    %1277 = vmatpush2.msra.mxu0 0.0
    %1278 = vmatprep.subr.mxu0 0.0
    %1279 = vmatpush2.msra.mxu0 0.0
    %1280 = vmatprep.subr.mxu0 0.0
    %1281 = vmatpush2.msra.mxu0 0.0
    %1282 = vmatprep.subr.mxu0 0.0
    %1283 = vmatpush2.msra.mxu0 0.0
    %1284 = vmatprep.mubr.f32.mxu0 0.0
    %1285 = vmatmul.mubr.f32.gmra.mxu0 %v1215
    %v1286 = vpop.f32.mrf.mxu0
    %v1287 = vadd.f32 0.0, %v1286
    %v1288 = vpop.f32.mrf.mxu0
    %1289 = vmatprep.mubr.f32.mxu0 0.0
    %1290 = vmatmul.mubr.f32.gmra.mxu0 %v1218
    %v1291 = vpop.f32.mrf.mxu0
    %v1292 = vadd.f32 0.0, %v1291
    %v1293 = vpop.f32.mrf.mxu0
    %1294 = vdwg.mxu0
    %1295 = vrot.lane.b32.xlu0 %v228, 64
    %v1296 = vpop.permute.xlu0 %1295
    %1297 = vrot.lane.b32.xlu0 %v233, 64
    %v1298 = vpop.permute.xlu0 %1297
    %1299 = vrot.lane.b32.xlu0 %v340, 64
    %v1300 = vpop.permute.xlu0 %1299
    %1301 = vrot.lane.b32.xlu0 %v345, 64
    %v1302 = vpop.permute.xlu0 %1301
    %v1303 = vsel %vm477, %v1296, 0
    %v1305 = vsel %vm477, %v1298, 0
    %v1307 = vsel %vm477, %v1300, 0
    %v1309 = vsel %vm477, %v1302, 0
    %1311 = vmatprep.subr.mxu0 0.0
    %1312 = vmatpush1.xpose.msra.mxu0 0.0
    %1313 = vmatprep.subr.mxu0 0.0
    %1314 = vmatpush1.xpose.msra.mxu0 0.0
    %1315 = vmatprep.subr.mxu0 0.0
    %1316 = vmatpush1.xpose.msra.mxu0 0.0
    %1317 = vmatprep.subr.mxu0 0.0
    %1318 = vmatpush1.xpose.msra.mxu0 0.0
    %1319 = vmatprep.subr.mxu0 0.0
    %1320 = vmatpush1.xpose.msra.mxu0 0.0
    %1321 = vmatprep.subr.mxu0 0.0
    %1322 = vmatpush1.xpose.msra.mxu0 0.0
    %1323 = vmatprep.subr.mxu0 0.0
    %1324 = vmatpush1.xpose.msra.mxu0 0.0
    %1325 = vmatprep.subr.mxu0 0.0
    %1326 = vmatpush1.xpose.msra.mxu0 0.0
    %1327 = vmatprep.subr.mxu0 0.0
    %1328 = vmatpush1.xpose.msra.mxu0 0.0
    %1329 = vmatprep.subr.mxu0 0.0
    %1330 = vmatpush1.xpose.msra.mxu0 0.0
    %1331 = vmatprep.subr.mxu0 0.0
    %1332 = vmatpush1.xpose.msra.mxu0 0.0
    %1333 = vmatprep.subr.mxu0 0.0
    %1334 = vmatpush1.xpose.msra.mxu0 0.0
    %1335 = vmatprep.subr.mxu0 0.0
    %1336 = vmatpush1.xpose.msra.mxu0 0.0
    %1337 = vmatprep.subr.mxu0 0.0
    %1338 = vmatpush1.xpose.msra.mxu0 0.0
    %1339 = vmatprep.subr.mxu0 0.0
    %1340 = vmatpush1.xpose.msra.mxu0 %v1309
    %1341 = vmatprep.subr.mxu0 0.0
    %1342 = vmatpush1.xpose.msra.mxu0 %v1307
    %1343 = vmatprep.subr.mxu0 0.0
    %1344 = vmatpush2.xpose.msra.mxu0 0.0
    %1345 = vmatprep.subr.mxu0 0.0
    %1346 = vmatpush2.xpose.msra.mxu0 0.0
    %1347 = vmatprep.subr.mxu0 0.0
    %1348 = vmatpush2.xpose.msra.mxu0 0.0
    %1349 = vmatprep.subr.mxu0 0.0
    %1350 = vmatpush2.xpose.msra.mxu0 0.0
    %1351 = vmatprep.subr.mxu0 0.0
    %1352 = vmatpush2.xpose.msra.mxu0 0.0
    %1353 = vmatprep.subr.mxu0 0.0
    %1354 = vmatpush2.xpose.msra.mxu0 0.0
    %1355 = vmatprep.subr.mxu0 0.0
    %1356 = vmatpush2.xpose.msra.mxu0 0.0
    %1357 = vmatprep.subr.mxu0 0.0
    %1358 = vmatpush2.xpose.msra.mxu0 0.0
    %1359 = vmatprep.subr.mxu0 0.0
    %1360 = vmatpush2.xpose.msra.mxu0 0.0
    %1361 = vmatprep.subr.mxu0 0.0
    %1362 = vmatpush2.xpose.msra.mxu0 0.0
    %1363 = vmatprep.subr.mxu0 0.0
    %1364 = vmatpush2.xpose.msra.mxu0 0.0
    %1365 = vmatprep.subr.mxu0 0.0
    %1366 = vmatpush2.xpose.msra.mxu0 0.0
    %1367 = vmatprep.subr.mxu0 0.0
    %1368 = vmatpush2.xpose.msra.mxu0 0.0
    %1369 = vmatprep.subr.mxu0 0.0
    %1370 = vmatpush2.xpose.msra.mxu0 0.0
    %1371 = vmatprep.subr.mxu0 0.0
    %1372 = vmatpush2.xpose.msra.mxu0 0.0
    %1373 = vmatprep.subr.mxu0 0.0
    %1374 = vmatpush2.xpose.msra.mxu0 0.0
    %1375 = vmatprep.mubr.f32.mxu0 0.0
    %1376 = vmatmul.mubr.f32.gmra.mxu0 %v1303
    %v1377 = vpop.f32.mrf.mxu0
    %v1378 = vadd.f32 0.0, %v1377
    %v1379 = vpop.f32.mrf.mxu0
    %1380 = vmatprep.mubr.f32.mxu0 0.0
    %1381 = vmatmul.mubr.f32.gmra.mxu0 %v1305
    %v1382 = vpop.f32.mrf.mxu0
    %v1383 = vadd.f32 0.0, %v1382
    %v1384 = vpop.f32.mrf.mxu0
    %1385 = vdwg.mxu0
    %v1386 = vsel %vm475, -1e+30, %v1378
    %v1387 = vsel %vm476, -1e+30, %v1383
    %v1388 = vsel %vm567, %v1386, -inf
    %1389 = vmax.xlane.f32.xlu0 %v1388
    %v1390 = vpop.xlane.xlu0 %1389
    %v1391 = vsel %vm567, %v1387, -inf
    %1392 = vmax.xlane.f32.xlu0 %v1391
    %v1393 = vpop.xlane.xlu0 %1392
    %v1394 = vsub.f32 %v1386, %v1390
    %v1395 = vsub.f32 %v1387, %v1393
    %v1396 = vmul.f32 %v1394, 1.442695
    %v1397 = vpow.pop %v1396
    %v1398 = vmul.f32 %v1395, 1.442695
    %v1399 = vpow.pop %v1398
    %v1400 = vsel %vm567, %v1397, 0.0
    %1401 = vadd.xlane.f32.xlu0 %v1400
    %v1402 = vpop.xlane.xlu0 %1401
    %v1403 = vsel %vm567, %v1399, 0.0
    %1404 = vadd.xlane.f32.xlu0 %v1403
    %v1405 = vpop.xlane.xlu0 %1404
    %v1406 = vrcp.pop %v1402
    %v1407 = vrcp.pop %v1405
    %v1408 = vmul.f32 %v1402, %v1406
    %v1409 = vmul.f32 %v1405, %v1407
    %v1410 = vsub.f32 2.0, %v1408
    %v1411 = vsub.f32 2.0, %v1409
    %v1412 = vmul.f32 %v1406, %v1410
    %v1413 = vmul.f32 %v1407, %v1411
    %v1414 = vmul.f32 %v1397, %v1412
    %v1415 = vmul.f32 %v1399, %v1413
    %1416 = vrot.lane.b32.xlu0 %v452, 64
    %v1417 = vpop.permute.xlu0 %1416
    %1418 = vrot.lane.b32.xlu0 %v457, 64
    %v1419 = vpop.permute.xlu0 %1418
    %v1423 = vsel %vm567, %v1414, 0
    %v1426 = vsel %vm567, %v1415, 0
    %1428 = vmatprep.subr.mxu0 0.0
    %1429 = vmatpush1.msra.mxu0 0.0
    %1430 = vmatprep.subr.mxu0 0.0
    %1431 = vmatpush1.msra.mxu0 0.0
    %1432 = vmatprep.subr.mxu0 0.0
    %1433 = vmatpush1.msra.mxu0 0.0
    %1434 = vmatprep.subr.mxu0 0.0
    %1435 = vmatpush1.msra.mxu0 0.0
    %1436 = vmatprep.subr.mxu0 0.0
    %1437 = vmatpush1.msra.mxu0 0.0
    %1438 = vmatprep.subr.mxu0 0.0
    %1439 = vmatpush1.msra.mxu0 0.0
    %1440 = vmatprep.subr.mxu0 0.0
    %1441 = vmatpush1.msra.mxu0 0.0
    %1442 = vmatprep.subr.mxu0 0.0
    %1443 = vmatpush1.msra.mxu0 0.0
    %1444 = vmatprep.subr.mxu0 0.0
    %1445 = vmatpush1.msra.mxu0 0.0
    %1446 = vmatprep.subr.mxu0 0.0
    %1447 = vmatpush1.msra.mxu0 0.0
    %1448 = vmatprep.subr.mxu0 0.0
    %1449 = vmatpush1.msra.mxu0 0.0
    %1450 = vmatprep.subr.mxu0 0.0
    %1451 = vmatpush1.msra.mxu0 0.0
    %1452 = vmatprep.subr.mxu0 0.0
    %1453 = vmatpush1.msra.mxu0 0.0
    %1454 = vmatprep.subr.mxu0 0.0
    %1455 = vmatpush1.msra.mxu0 0.0
    %1456 = vmatprep.subr.mxu0 0.0
    %1457 = vmatpush1.msra.mxu0 %v1419
    %1458 = vmatprep.subr.mxu0 0.0
    %1459 = vmatpush1.msra.mxu0 %v1417
    %1460 = vmatprep.subr.mxu0 0.0
    %1461 = vmatpush2.msra.mxu0 0.0
    %1462 = vmatprep.subr.mxu0 0.0
    %1463 = vmatpush2.msra.mxu0 0.0
    %1464 = vmatprep.subr.mxu0 0.0
    %1465 = vmatpush2.msra.mxu0 0.0
    %1466 = vmatprep.subr.mxu0 0.0
    %1467 = vmatpush2.msra.mxu0 0.0
    %1468 = vmatprep.subr.mxu0 0.0
    %1469 = vmatpush2.msra.mxu0 0.0
    %1470 = vmatprep.subr.mxu0 0.0
    %1471 = vmatpush2.msra.mxu0 0.0
    %1472 = vmatprep.subr.mxu0 0.0
    %1473 = vmatpush2.msra.mxu0 0.0
    %1474 = vmatprep.subr.mxu0 0.0
    %1475 = vmatpush2.msra.mxu0 0.0
    %1476 = vmatprep.subr.mxu0 0.0
    %1477 = vmatpush2.msra.mxu0 0.0
    %1478 = vmatprep.subr.mxu0 0.0
    %1479 = vmatpush2.msra.mxu0 0.0
    %1480 = vmatprep.subr.mxu0 0.0
    %1481 = vmatpush2.msra.mxu0 0.0
    %1482 = vmatprep.subr.mxu0 0.0
    %1483 = vmatpush2.msra.mxu0 0.0
    %1484 = vmatprep.subr.mxu0 0.0
    %1485 = vmatpush2.msra.mxu0 0.0
    %1486 = vmatprep.subr.mxu0 0.0
    %1487 = vmatpush2.msra.mxu0 0.0
    %1488 = vmatprep.subr.mxu0 0.0
    %1489 = vmatpush2.msra.mxu0 0.0
    %1490 = vmatprep.subr.mxu0 0.0
    %1491 = vmatpush2.msra.mxu0 0.0
    %1492 = vmatprep.mubr.f32.mxu0 0.0
    %1493 = vmatmul.mubr.f32.gmra.mxu0 %v1423
    %v1494 = vpop.f32.mrf.mxu0
    %v1495 = vadd.f32 0.0, %v1494
    %v1496 = vpop.f32.mrf.mxu0
    %1497 = vmatprep.mubr.f32.mxu0 0.0
    %1498 = vmatmul.mubr.f32.gmra.mxu0 %v1426
    %v1499 = vpop.f32.mrf.mxu0
    %v1500 = vadd.f32 0.0, %v1499
    %v1501 = vpop.f32.mrf.mxu0
    %1502 = vdwg.mxu0
    %1503 = vrot.lane.b32.xlu0 %v238, 64
    %v1504 = vpop.permute.xlu0 %1503
    %1505 = vrot.lane.b32.xlu0 %v243, 64
    %v1506 = vpop.permute.xlu0 %1505
    %1507 = vrot.lane.b32.xlu0 %v350, 64
    %v1508 = vpop.permute.xlu0 %1507
    %1509 = vrot.lane.b32.xlu0 %v355, 64
    %v1510 = vpop.permute.xlu0 %1509
    %v1511 = vsel %vm477, %v1504, 0
    %v1513 = vsel %vm477, %v1506, 0
    %v1515 = vsel %vm477, %v1508, 0
    %v1517 = vsel %vm477, %v1510, 0
    %1519 = vmatprep.subr.mxu0 0.0
    %1520 = vmatpush1.xpose.msra.mxu0 0.0
    %1521 = vmatprep.subr.mxu0 0.0
    %1522 = vmatpush1.xpose.msra.mxu0 0.0
    %1523 = vmatprep.subr.mxu0 0.0
    %1524 = vmatpush1.xpose.msra.mxu0 0.0
    %1525 = vmatprep.subr.mxu0 0.0
    %1526 = vmatpush1.xpose.msra.mxu0 0.0
    %1527 = vmatprep.subr.mxu0 0.0
    %1528 = vmatpush1.xpose.msra.mxu0 0.0
    %1529 = vmatprep.subr.mxu0 0.0
    %1530 = vmatpush1.xpose.msra.mxu0 0.0
    %1531 = vmatprep.subr.mxu0 0.0
    %1532 = vmatpush1.xpose.msra.mxu0 0.0
    %1533 = vmatprep.subr.mxu0 0.0
    %1534 = vmatpush1.xpose.msra.mxu0 0.0
    %1535 = vmatprep.subr.mxu0 0.0
    %1536 = vmatpush1.xpose.msra.mxu0 0.0
    %1537 = vmatprep.subr.mxu0 0.0
    %1538 = vmatpush1.xpose.msra.mxu0 0.0
    %1539 = vmatprep.subr.mxu0 0.0
    %1540 = vmatpush1.xpose.msra.mxu0 0.0
    %1541 = vmatprep.subr.mxu0 0.0
    %1542 = vmatpush1.xpose.msra.mxu0 0.0
    %1543 = vmatprep.subr.mxu0 0.0
    %1544 = vmatpush1.xpose.msra.mxu0 0.0
    %1545 = vmatprep.subr.mxu0 0.0
    %1546 = vmatpush1.xpose.msra.mxu0 0.0
    %1547 = vmatprep.subr.mxu0 0.0
    %1548 = vmatpush1.xpose.msra.mxu0 %v1517
    %1549 = vmatprep.subr.mxu0 0.0
    %1550 = vmatpush1.xpose.msra.mxu0 %v1515
    %1551 = vmatprep.subr.mxu0 0.0
    %1552 = vmatpush2.xpose.msra.mxu0 0.0
    %1553 = vmatprep.subr.mxu0 0.0
    %1554 = vmatpush2.xpose.msra.mxu0 0.0
    %1555 = vmatprep.subr.mxu0 0.0
    %1556 = vmatpush2.xpose.msra.mxu0 0.0
    %1557 = vmatprep.subr.mxu0 0.0
    %1558 = vmatpush2.xpose.msra.mxu0 0.0
    %1559 = vmatprep.subr.mxu0 0.0
    %1560 = vmatpush2.xpose.msra.mxu0 0.0
    %1561 = vmatprep.subr.mxu0 0.0
    %1562 = vmatpush2.xpose.msra.mxu0 0.0
    %1563 = vmatprep.subr.mxu0 0.0
    %1564 = vmatpush2.xpose.msra.mxu0 0.0
    %1565 = vmatprep.subr.mxu0 0.0
    %1566 = vmatpush2.xpose.msra.mxu0 0.0
    %1567 = vmatprep.subr.mxu0 0.0
    %1568 = vmatpush2.xpose.msra.mxu0 0.0
    %1569 = vmatprep.subr.mxu0 0.0
    %1570 = vmatpush2.xpose.msra.mxu0 0.0
    %1571 = vmatprep.subr.mxu0 0.0
    %1572 = vmatpush2.xpose.msra.mxu0 0.0
    %1573 = vmatprep.subr.mxu0 0.0
    %1574 = vmatpush2.xpose.msra.mxu0 0.0
    %1575 = vmatprep.subr.mxu0 0.0
    %1576 = vmatpush2.xpose.msra.mxu0 0.0
    %1577 = vmatprep.subr.mxu0 0.0
    %1578 = vmatpush2.xpose.msra.mxu0 0.0
    %1579 = vmatprep.subr.mxu0 0.0
    %1580 = vmatpush2.xpose.msra.mxu0 0.0
    %1581 = vmatprep.subr.mxu0 0.0
    %1582 = vmatpush2.xpose.msra.mxu0 0.0
    %1583 = vmatprep.mubr.f32.mxu0 0.0
    %1584 = vmatmul.mubr.f32.gmra.mxu0 %v1511
    %v1585 = vpop.f32.mrf.mxu0
    %v1586 = vadd.f32 0.0, %v1585
    %v1587 = vpop.f32.mrf.mxu0
    %1588 = vmatprep.mubr.f32.mxu0 0.0
    %1589 = vmatmul.mubr.f32.gmra.mxu0 %v1513
    %v1590 = vpop.f32.mrf.mxu0
    %v1591 = vadd.f32 0.0, %v1590
    %v1592 = vpop.f32.mrf.mxu0
    %1593 = vdwg.mxu0
    %v1594 = vsel %vm475, -1e+30, %v1586
    %v1595 = vsel %vm476, -1e+30, %v1591
    %v1596 = vsel %vm567, %v1594, -inf
    %1597 = vmax.xlane.f32.xlu0 %v1596
    %v1598 = vpop.xlane.xlu0 %1597
    %v1599 = vsel %vm567, %v1595, -inf
    %1600 = vmax.xlane.f32.xlu0 %v1599
    %v1601 = vpop.xlane.xlu0 %1600
    %v1602 = vsub.f32 %v1594, %v1598
    %v1603 = vsub.f32 %v1595, %v1601
    %v1604 = vmul.f32 %v1602, 1.442695
    %v1605 = vpow.pop %v1604
    %v1606 = vmul.f32 %v1603, 1.442695
    %v1607 = vpow.pop %v1606
    %v1608 = vsel %vm567, %v1605, 0.0
    %1609 = vadd.xlane.f32.xlu0 %v1608
    %v1610 = vpop.xlane.xlu0 %1609
    %v1611 = vsel %vm567, %v1607, 0.0
    %1612 = vadd.xlane.f32.xlu0 %v1611
    %v1613 = vpop.xlane.xlu0 %1612
    %v1614 = vrcp.pop %v1610
    %v1615 = vrcp.pop %v1613
    %v1616 = vmul.f32 %v1610, %v1614
    %v1617 = vmul.f32 %v1613, %v1615
    %v1618 = vsub.f32 2.0, %v1616
    %v1619 = vsub.f32 2.0, %v1617
    %v1620 = vmul.f32 %v1614, %v1618
    %v1621 = vmul.f32 %v1615, %v1619
    %v1622 = vmul.f32 %v1605, %v1620
    %v1623 = vmul.f32 %v1607, %v1621
    %1624 = vrot.lane.b32.xlu0 %v462, 64
    %v1625 = vpop.permute.xlu0 %1624
    %1626 = vrot.lane.b32.xlu0 %v467, 64
    %v1627 = vpop.permute.xlu0 %1626
    %v1631 = vsel %vm567, %v1622, 0
    %v1634 = vsel %vm567, %v1623, 0
    %1636 = vmatprep.subr.mxu0 0.0
    %1637 = vmatpush1.msra.mxu0 0.0
    %1638 = vmatprep.subr.mxu0 0.0
    %1639 = vmatpush1.msra.mxu0 0.0
    %1640 = vmatprep.subr.mxu0 0.0
    %1641 = vmatpush1.msra.mxu0 0.0
    %1642 = vmatprep.subr.mxu0 0.0
    %1643 = vmatpush1.msra.mxu0 0.0
    %1644 = vmatprep.subr.mxu0 0.0
    %1645 = vmatpush1.msra.mxu0 0.0
    %1646 = vmatprep.subr.mxu0 0.0
    %1647 = vmatpush1.msra.mxu0 0.0
    %1648 = vmatprep.subr.mxu0 0.0
    %1649 = vmatpush1.msra.mxu0 0.0
    %1650 = vmatprep.subr.mxu0 0.0
    %1651 = vmatpush1.msra.mxu0 0.0
    %1652 = vmatprep.subr.mxu0 0.0
    %1653 = vmatpush1.msra.mxu0 0.0
    %1654 = vmatprep.subr.mxu0 0.0
    %1655 = vmatpush1.msra.mxu0 0.0
    %1656 = vmatprep.subr.mxu0 0.0
    %1657 = vmatpush1.msra.mxu0 0.0
    %1658 = vmatprep.subr.mxu0 0.0
    %1659 = vmatpush1.msra.mxu0 0.0
    %1660 = vmatprep.subr.mxu0 0.0
    %1661 = vmatpush1.msra.mxu0 0.0
    %1662 = vmatprep.subr.mxu0 0.0
    %1663 = vmatpush1.msra.mxu0 0.0
    %1664 = vmatprep.subr.mxu0 0.0
    %1665 = vmatpush1.msra.mxu0 %v1627
    %1666 = vmatprep.subr.mxu0 0.0
    %1667 = vmatpush1.msra.mxu0 %v1625
    %1668 = vmatprep.subr.mxu0 0.0
    %1669 = vmatpush2.msra.mxu0 0.0
    %1670 = vmatprep.subr.mxu0 0.0
    %1671 = vmatpush2.msra.mxu0 0.0
    %1672 = vmatprep.subr.mxu0 0.0
    %1673 = vmatpush2.msra.mxu0 0.0
    %1674 = vmatprep.subr.mxu0 0.0
    %1675 = vmatpush2.msra.mxu0 0.0
    %1676 = vmatprep.subr.mxu0 0.0
    %1677 = vmatpush2.msra.mxu0 0.0
    %1678 = vmatprep.subr.mxu0 0.0
    %1679 = vmatpush2.msra.mxu0 0.0
    %1680 = vmatprep.subr.mxu0 0.0
    %1681 = vmatpush2.msra.mxu0 0.0
    %1682 = vmatprep.subr.mxu0 0.0
    %1683 = vmatpush2.msra.mxu0 0.0
    %1684 = vmatprep.subr.mxu0 0.0
    %1685 = vmatpush2.msra.mxu0 0.0
    %1686 = vmatprep.subr.mxu0 0.0
    %1687 = vmatpush2.msra.mxu0 0.0
    %1688 = vmatprep.subr.mxu0 0.0
    %1689 = vmatpush2.msra.mxu0 0.0
    %1690 = vmatprep.subr.mxu0 0.0
    %1691 = vmatpush2.msra.mxu0 0.0
    %1692 = vmatprep.subr.mxu0 0.0
    %1693 = vmatpush2.msra.mxu0 0.0
    %1694 = vmatprep.subr.mxu0 0.0
    %1695 = vmatpush2.msra.mxu0 0.0
    %1696 = vmatprep.subr.mxu0 0.0
    %1697 = vmatpush2.msra.mxu0 0.0
    %1698 = vmatprep.subr.mxu0 0.0
    %1699 = vmatpush2.msra.mxu0 0.0
    %1700 = vmatprep.mubr.f32.mxu0 0.0
    %1701 = vmatmul.mubr.f32.gmra.mxu0 %v1631
    %v1702 = vpop.f32.mrf.mxu0
    %v1703 = vadd.f32 0.0, %v1702
    %v1704 = vpop.f32.mrf.mxu0
    %1705 = vmatprep.mubr.f32.mxu0 0.0
    %1706 = vmatmul.mubr.f32.gmra.mxu0 %v1634
    %v1707 = vpop.f32.mrf.mxu0
    %v1708 = vadd.f32 0.0, %v1707
    %v1709 = vpop.f32.mrf.mxu0
    %1710 = vdwg.mxu0
    %1711 = vrot.lane.b32.xlu0 %v228, 32
    %v1712 = vpop.permute.xlu0 %1711
    %1713 = vrot.lane.b32.xlu0 %v233, 32
    %v1714 = vpop.permute.xlu0 %1713
    %1715 = vrot.lane.b32.xlu0 %v340, 32
    %v1716 = vpop.permute.xlu0 %1715
    %1717 = vrot.lane.b32.xlu0 %v345, 32
    %v1718 = vpop.permute.xlu0 %1717
    %v1719 = vsel %vm477, %v1712, 0
    %v1721 = vsel %vm477, %v1714, 0
    %v1723 = vsel %vm477, %v1716, 0
    %v1725 = vsel %vm477, %v1718, 0
    %1727 = vmatprep.subr.mxu0 0.0
    %1728 = vmatpush1.xpose.msra.mxu0 0.0
    %1729 = vmatprep.subr.mxu0 0.0
    %1730 = vmatpush1.xpose.msra.mxu0 0.0
    %1731 = vmatprep.subr.mxu0 0.0
    %1732 = vmatpush1.xpose.msra.mxu0 0.0
    %1733 = vmatprep.subr.mxu0 0.0
    %1734 = vmatpush1.xpose.msra.mxu0 0.0
    %1735 = vmatprep.subr.mxu0 0.0
    %1736 = vmatpush1.xpose.msra.mxu0 0.0
    %1737 = vmatprep.subr.mxu0 0.0
    %1738 = vmatpush1.xpose.msra.mxu0 0.0
    %1739 = vmatprep.subr.mxu0 0.0
    %1740 = vmatpush1.xpose.msra.mxu0 0.0
    %1741 = vmatprep.subr.mxu0 0.0
    %1742 = vmatpush1.xpose.msra.mxu0 0.0
    %1743 = vmatprep.subr.mxu0 0.0
    %1744 = vmatpush1.xpose.msra.mxu0 0.0
    %1745 = vmatprep.subr.mxu0 0.0
    %1746 = vmatpush1.xpose.msra.mxu0 0.0
    %1747 = vmatprep.subr.mxu0 0.0
    %1748 = vmatpush1.xpose.msra.mxu0 0.0
    %1749 = vmatprep.subr.mxu0 0.0
    %1750 = vmatpush1.xpose.msra.mxu0 0.0
    %1751 = vmatprep.subr.mxu0 0.0
    %1752 = vmatpush1.xpose.msra.mxu0 0.0
    %1753 = vmatprep.subr.mxu0 0.0
    %1754 = vmatpush1.xpose.msra.mxu0 0.0
    %1755 = vmatprep.subr.mxu0 0.0
    %1756 = vmatpush1.xpose.msra.mxu0 %v1725
    %1757 = vmatprep.subr.mxu0 0.0
    %1758 = vmatpush1.xpose.msra.mxu0 %v1723
    %1759 = vmatprep.subr.mxu0 0.0
    %1760 = vmatpush2.xpose.msra.mxu0 0.0
    %1761 = vmatprep.subr.mxu0 0.0
    %1762 = vmatpush2.xpose.msra.mxu0 0.0
    %1763 = vmatprep.subr.mxu0 0.0
    %1764 = vmatpush2.xpose.msra.mxu0 0.0
    %1765 = vmatprep.subr.mxu0 0.0
    %1766 = vmatpush2.xpose.msra.mxu0 0.0
    %1767 = vmatprep.subr.mxu0 0.0
    %1768 = vmatpush2.xpose.msra.mxu0 0.0
    %1769 = vmatprep.subr.mxu0 0.0
    %1770 = vmatpush2.xpose.msra.mxu0 0.0
    %1771 = vmatprep.subr.mxu0 0.0
    %1772 = vmatpush2.xpose.msra.mxu0 0.0
    %1773 = vmatprep.subr.mxu0 0.0
    %1774 = vmatpush2.xpose.msra.mxu0 0.0
    %1775 = vmatprep.subr.mxu0 0.0
    %1776 = vmatpush2.xpose.msra.mxu0 0.0
    %1777 = vmatprep.subr.mxu0 0.0
    %1778 = vmatpush2.xpose.msra.mxu0 0.0
    %1779 = vmatprep.subr.mxu0 0.0
    %1780 = vmatpush2.xpose.msra.mxu0 0.0
    %1781 = vmatprep.subr.mxu0 0.0
    %1782 = vmatpush2.xpose.msra.mxu0 0.0
    %1783 = vmatprep.subr.mxu0 0.0
    %1784 = vmatpush2.xpose.msra.mxu0 0.0
    %1785 = vmatprep.subr.mxu0 0.0
    %1786 = vmatpush2.xpose.msra.mxu0 0.0
    %1787 = vmatprep.subr.mxu0 0.0
    %1788 = vmatpush2.xpose.msra.mxu0 0.0
    %1789 = vmatprep.subr.mxu0 0.0
    %1790 = vmatpush2.xpose.msra.mxu0 0.0
    %1791 = vmatprep.mubr.f32.mxu0 0.0
    %1792 = vmatmul.mubr.f32.gmra.mxu0 %v1719
    %v1793 = vpop.f32.mrf.mxu0
    %v1794 = vadd.f32 0.0, %v1793
    %v1795 = vpop.f32.mrf.mxu0
    %1796 = vmatprep.mubr.f32.mxu0 0.0
    %1797 = vmatmul.mubr.f32.gmra.mxu0 %v1721
    %v1798 = vpop.f32.mrf.mxu0
    %v1799 = vadd.f32 0.0, %v1798
    %v1800 = vpop.f32.mrf.mxu0
    %1801 = vdwg.mxu0
    %v1802 = vsel %vm475, -1e+30, %v1794
    %v1803 = vsel %vm476, -1e+30, %v1799
    %v1804 = vsel %vm567, %v1802, -inf
    %1805 = vmax.xlane.f32.xlu0 %v1804
    %v1806 = vpop.xlane.xlu0 %1805
    %v1807 = vsel %vm567, %v1803, -inf
    %1808 = vmax.xlane.f32.xlu0 %v1807
    %v1809 = vpop.xlane.xlu0 %1808
    %v1810 = vsub.f32 %v1802, %v1806
    %v1811 = vsub.f32 %v1803, %v1809
    %v1812 = vmul.f32 %v1810, 1.442695
    %v1813 = vpow.pop %v1812
    %v1814 = vmul.f32 %v1811, 1.442695
    %v1815 = vpow.pop %v1814
    %v1816 = vsel %vm567, %v1813, 0.0
    %1817 = vadd.xlane.f32.xlu0 %v1816
    %v1818 = vpop.xlane.xlu0 %1817
    %v1819 = vsel %vm567, %v1815, 0.0
    %1820 = vadd.xlane.f32.xlu0 %v1819
    %v1821 = vpop.xlane.xlu0 %1820
    %v1822 = vrcp.pop %v1818
    %v1823 = vrcp.pop %v1821
    %v1824 = vmul.f32 %v1818, %v1822
    %v1825 = vmul.f32 %v1821, %v1823
    %v1826 = vsub.f32 2.0, %v1824
    %v1827 = vsub.f32 2.0, %v1825
    %v1828 = vmul.f32 %v1822, %v1826
    %v1829 = vmul.f32 %v1823, %v1827
    %v1830 = vmul.f32 %v1813, %v1828
    %v1831 = vmul.f32 %v1815, %v1829
    %1832 = vrot.lane.b32.xlu0 %v452, 32
    %v1833 = vpop.permute.xlu0 %1832
    %1834 = vrot.lane.b32.xlu0 %v457, 32
    %v1835 = vpop.permute.xlu0 %1834
    %v1839 = vsel %vm567, %v1830, 0
    %v1842 = vsel %vm567, %v1831, 0
    %1844 = vmatprep.subr.mxu0 0.0
    %1845 = vmatpush1.msra.mxu0 0.0
    %1846 = vmatprep.subr.mxu0 0.0
    %1847 = vmatpush1.msra.mxu0 0.0
    %1848 = vmatprep.subr.mxu0 0.0
    %1849 = vmatpush1.msra.mxu0 0.0
    %1850 = vmatprep.subr.mxu0 0.0
    %1851 = vmatpush1.msra.mxu0 0.0
    %1852 = vmatprep.subr.mxu0 0.0
    %1853 = vmatpush1.msra.mxu0 0.0
    %1854 = vmatprep.subr.mxu0 0.0
    %1855 = vmatpush1.msra.mxu0 0.0
    %1856 = vmatprep.subr.mxu0 0.0
    %1857 = vmatpush1.msra.mxu0 0.0
    %1858 = vmatprep.subr.mxu0 0.0
    %1859 = vmatpush1.msra.mxu0 0.0
    %1860 = vmatprep.subr.mxu0 0.0
    %1861 = vmatpush1.msra.mxu0 0.0
    %1862 = vmatprep.subr.mxu0 0.0
    %1863 = vmatpush1.msra.mxu0 0.0
    %1864 = vmatprep.subr.mxu0 0.0
    %1865 = vmatpush1.msra.mxu0 0.0
    %1866 = vmatprep.subr.mxu0 0.0
    %1867 = vmatpush1.msra.mxu0 0.0
    %1868 = vmatprep.subr.mxu0 0.0
    %1869 = vmatpush1.msra.mxu0 0.0
    %1870 = vmatprep.subr.mxu0 0.0
    %1871 = vmatpush1.msra.mxu0 0.0
    %1872 = vmatprep.subr.mxu0 0.0
    %1873 = vmatpush1.msra.mxu0 %v1835
    %1874 = vmatprep.subr.mxu0 0.0
    %1875 = vmatpush1.msra.mxu0 %v1833
    %1876 = vmatprep.subr.mxu0 0.0
    %1877 = vmatpush2.msra.mxu0 0.0
    %1878 = vmatprep.subr.mxu0 0.0
    %1879 = vmatpush2.msra.mxu0 0.0
    %1880 = vmatprep.subr.mxu0 0.0
    %1881 = vmatpush2.msra.mxu0 0.0
    %1882 = vmatprep.subr.mxu0 0.0
    %1883 = vmatpush2.msra.mxu0 0.0
    %1884 = vmatprep.subr.mxu0 0.0
    %1885 = vmatpush2.msra.mxu0 0.0
    %1886 = vmatprep.subr.mxu0 0.0
    %1887 = vmatpush2.msra.mxu0 0.0
    %1888 = vmatprep.subr.mxu0 0.0
    %1889 = vmatpush2.msra.mxu0 0.0
    %1890 = vmatprep.subr.mxu0 0.0
    %1891 = vmatpush2.msra.mxu0 0.0
    %1892 = vmatprep.subr.mxu0 0.0
    %1893 = vmatpush2.msra.mxu0 0.0
    %1894 = vmatprep.subr.mxu0 0.0
    %1895 = vmatpush2.msra.mxu0 0.0
    %1896 = vmatprep.subr.mxu0 0.0
    %1897 = vmatpush2.msra.mxu0 0.0
    %1898 = vmatprep.subr.mxu0 0.0
    %1899 = vmatpush2.msra.mxu0 0.0
    %1900 = vmatprep.subr.mxu0 0.0
    %1901 = vmatpush2.msra.mxu0 0.0
    %1902 = vmatprep.subr.mxu0 0.0
    %1903 = vmatpush2.msra.mxu0 0.0
    %1904 = vmatprep.subr.mxu0 0.0
    %1905 = vmatpush2.msra.mxu0 0.0
    %1906 = vmatprep.subr.mxu0 0.0
    %1907 = vmatpush2.msra.mxu0 0.0
    %1908 = vmatprep.mubr.f32.mxu0 0.0
    %1909 = vmatmul.mubr.f32.gmra.mxu0 %v1839
    %v1910 = vpop.f32.mrf.mxu0
    %v1911 = vadd.f32 0.0, %v1910
    %v1912 = vpop.f32.mrf.mxu0
    %1913 = vmatprep.mubr.f32.mxu0 0.0
    %1914 = vmatmul.mubr.f32.gmra.mxu0 %v1842
    %v1915 = vpop.f32.mrf.mxu0
    %v1916 = vadd.f32 0.0, %v1915
    %v1917 = vpop.f32.mrf.mxu0
    %1918 = vdwg.mxu0
    %1919 = vrot.lane.b32.xlu0 %v238, 32
    %v1920 = vpop.permute.xlu0 %1919
    %1921 = vrot.lane.b32.xlu0 %v243, 32
    %v1922 = vpop.permute.xlu0 %1921
    %1923 = vrot.lane.b32.xlu0 %v350, 32
    %v1924 = vpop.permute.xlu0 %1923
    %1925 = vrot.lane.b32.xlu0 %v355, 32
    %v1926 = vpop.permute.xlu0 %1925
    %v1927 = vsel %vm477, %v1920, 0
    %v1929 = vsel %vm477, %v1922, 0
    %v1931 = vsel %vm477, %v1924, 0
    %v1933 = vsel %vm477, %v1926, 0
    %1935 = vmatprep.subr.mxu0 0.0
    %1936 = vmatpush1.xpose.msra.mxu0 0.0
    %1937 = vmatprep.subr.mxu0 0.0
    %1938 = vmatpush1.xpose.msra.mxu0 0.0
    %1939 = vmatprep.subr.mxu0 0.0
    %1940 = vmatpush1.xpose.msra.mxu0 0.0
    %1941 = vmatprep.subr.mxu0 0.0
    %1942 = vmatpush1.xpose.msra.mxu0 0.0
    %1943 = vmatprep.subr.mxu0 0.0
    %1944 = vmatpush1.xpose.msra.mxu0 0.0
    %1945 = vmatprep.subr.mxu0 0.0
    %1946 = vmatpush1.xpose.msra.mxu0 0.0
    %1947 = vmatprep.subr.mxu0 0.0
    %1948 = vmatpush1.xpose.msra.mxu0 0.0
    %1949 = vmatprep.subr.mxu0 0.0
    %1950 = vmatpush1.xpose.msra.mxu0 0.0
    %1951 = vmatprep.subr.mxu0 0.0
    %1952 = vmatpush1.xpose.msra.mxu0 0.0
    %1953 = vmatprep.subr.mxu0 0.0
    %1954 = vmatpush1.xpose.msra.mxu0 0.0
    %1955 = vmatprep.subr.mxu0 0.0
    %1956 = vmatpush1.xpose.msra.mxu0 0.0
    %1957 = vmatprep.subr.mxu0 0.0
    %1958 = vmatpush1.xpose.msra.mxu0 0.0
    %1959 = vmatprep.subr.mxu0 0.0
    %1960 = vmatpush1.xpose.msra.mxu0 0.0
    %1961 = vmatprep.subr.mxu0 0.0
    %1962 = vmatpush1.xpose.msra.mxu0 0.0
    %1963 = vmatprep.subr.mxu0 0.0
    %1964 = vmatpush1.xpose.msra.mxu0 %v1933
    %1965 = vmatprep.subr.mxu0 0.0
    %1966 = vmatpush1.xpose.msra.mxu0 %v1931
    %1967 = vmatprep.subr.mxu0 0.0
    %1968 = vmatpush2.xpose.msra.mxu0 0.0
    %1969 = vmatprep.subr.mxu0 0.0
    %1970 = vmatpush2.xpose.msra.mxu0 0.0
    %1971 = vmatprep.subr.mxu0 0.0
    %1972 = vmatpush2.xpose.msra.mxu0 0.0
    %1973 = vmatprep.subr.mxu0 0.0
    %1974 = vmatpush2.xpose.msra.mxu0 0.0
    %1975 = vmatprep.subr.mxu0 0.0
    %1976 = vmatpush2.xpose.msra.mxu0 0.0
    %1977 = vmatprep.subr.mxu0 0.0
    %1978 = vmatpush2.xpose.msra.mxu0 0.0
    %1979 = vmatprep.subr.mxu0 0.0
    %1980 = vmatpush2.xpose.msra.mxu0 0.0
    %1981 = vmatprep.subr.mxu0 0.0
    %1982 = vmatpush2.xpose.msra.mxu0 0.0
    %1983 = vmatprep.subr.mxu0 0.0
    %1984 = vmatpush2.xpose.msra.mxu0 0.0
    %1985 = vmatprep.subr.mxu0 0.0
    %1986 = vmatpush2.xpose.msra.mxu0 0.0
    %1987 = vmatprep.subr.mxu0 0.0
    %1988 = vmatpush2.xpose.msra.mxu0 0.0
    %1989 = vmatprep.subr.mxu0 0.0
    %1990 = vmatpush2.xpose.msra.mxu0 0.0
    %1991 = vmatprep.subr.mxu0 0.0
    %1992 = vmatpush2.xpose.msra.mxu0 0.0
    %1993 = vmatprep.subr.mxu0 0.0
    %1994 = vmatpush2.xpose.msra.mxu0 0.0
    %1995 = vmatprep.subr.mxu0 0.0
    %1996 = vmatpush2.xpose.msra.mxu0 0.0
    %1997 = vmatprep.subr.mxu0 0.0
    %1998 = vmatpush2.xpose.msra.mxu0 0.0
    %1999 = vmatprep.mubr.f32.mxu0 0.0
    %2000 = vmatmul.mubr.f32.gmra.mxu0 %v1927
    %v2001 = vpop.f32.mrf.mxu0
    %v2002 = vadd.f32 0.0, %v2001
    %v2003 = vpop.f32.mrf.mxu0
    %2004 = vmatprep.mubr.f32.mxu0 0.0
    %2005 = vmatmul.mubr.f32.gmra.mxu0 %v1929
    %v2006 = vpop.f32.mrf.mxu0
    %v2007 = vadd.f32 0.0, %v2006
    %v2008 = vpop.f32.mrf.mxu0
    %2009 = vdwg.mxu0
    %v2010 = vsel %vm475, -1e+30, %v2002
    %v2011 = vsel %vm476, -1e+30, %v2007
    %v2012 = vsel %vm567, %v2010, -inf
    %2013 = vmax.xlane.f32.xlu0 %v2012
    %v2014 = vpop.xlane.xlu0 %2013
    %v2015 = vsel %vm567, %v2011, -inf
    %2016 = vmax.xlane.f32.xlu0 %v2015
    %v2017 = vpop.xlane.xlu0 %2016
    %v2018 = vsub.f32 %v2010, %v2014
    %v2019 = vsub.f32 %v2011, %v2017
    %v2020 = vmul.f32 %v2018, 1.442695
    %v2021 = vpow.pop %v2020
    %v2022 = vmul.f32 %v2019, 1.442695
    %v2023 = vpow.pop %v2022
    %v2024 = vsel %vm567, %v2021, 0.0
    %2025 = vadd.xlane.f32.xlu0 %v2024
    %v2026 = vpop.xlane.xlu0 %2025
    %v2027 = vsel %vm567, %v2023, 0.0
    %2028 = vadd.xlane.f32.xlu0 %v2027
    %v2029 = vpop.xlane.xlu0 %2028
    %v2030 = vrcp.pop %v2026
    %v2031 = vrcp.pop %v2029
    %v2032 = vmul.f32 %v2026, %v2030
    %v2033 = vmul.f32 %v2029, %v2031
    %v2034 = vsub.f32 2.0, %v2032
    %v2035 = vsub.f32 2.0, %v2033
    %v2036 = vmul.f32 %v2030, %v2034
    %v2037 = vmul.f32 %v2031, %v2035
    %v2038 = vmul.f32 %v2021, %v2036
    %v2039 = vmul.f32 %v2023, %v2037
    %2040 = vrot.lane.b32.xlu0 %v462, 32
    %v2041 = vpop.permute.xlu0 %2040
    %2042 = vrot.lane.b32.xlu0 %v467, 32
    %v2043 = vpop.permute.xlu0 %2042
    %v2047 = vsel %vm567, %v2038, 0
    %v2050 = vsel %vm567, %v2039, 0
    %2052 = vmatprep.subr.mxu0 0.0
    %2053 = vmatpush1.msra.mxu0 0.0
    %2054 = vmatprep.subr.mxu0 0.0
    %2055 = vmatpush1.msra.mxu0 0.0
    %2056 = vmatprep.subr.mxu0 0.0
    %2057 = vmatpush1.msra.mxu0 0.0
    %2058 = vmatprep.subr.mxu0 0.0
    %2059 = vmatpush1.msra.mxu0 0.0
    %2060 = vmatprep.subr.mxu0 0.0
    %2061 = vmatpush1.msra.mxu0 0.0
    %2062 = vmatprep.subr.mxu0 0.0
    %2063 = vmatpush1.msra.mxu0 0.0
    %2064 = vmatprep.subr.mxu0 0.0
    %2065 = vmatpush1.msra.mxu0 0.0
    %2066 = vmatprep.subr.mxu0 0.0
    %2067 = vmatpush1.msra.mxu0 0.0
    %2068 = vmatprep.subr.mxu0 0.0
    %2069 = vmatpush1.msra.mxu0 0.0
    %2070 = vmatprep.subr.mxu0 0.0
    %2071 = vmatpush1.msra.mxu0 0.0
    %2072 = vmatprep.subr.mxu0 0.0
    %2073 = vmatpush1.msra.mxu0 0.0
    %2074 = vmatprep.subr.mxu0 0.0
    %2075 = vmatpush1.msra.mxu0 0.0
    %2076 = vmatprep.subr.mxu0 0.0
    %2077 = vmatpush1.msra.mxu0 0.0
    %2078 = vmatprep.subr.mxu0 0.0
    %2079 = vmatpush1.msra.mxu0 0.0
    %2080 = vmatprep.subr.mxu0 0.0
    %2081 = vmatpush1.msra.mxu0 %v2043
    %2082 = vmatprep.subr.mxu0 0.0
    %2083 = vmatpush1.msra.mxu0 %v2041
    %2084 = vmatprep.subr.mxu0 0.0
    %2085 = vmatpush2.msra.mxu0 0.0
    %2086 = vmatprep.subr.mxu0 0.0
    %2087 = vmatpush2.msra.mxu0 0.0
    %2088 = vmatprep.subr.mxu0 0.0
    %2089 = vmatpush2.msra.mxu0 0.0
    %2090 = vmatprep.subr.mxu0 0.0
    %2091 = vmatpush2.msra.mxu0 0.0
    %2092 = vmatprep.subr.mxu0 0.0
    %2093 = vmatpush2.msra.mxu0 0.0
    %2094 = vmatprep.subr.mxu0 0.0
    %2095 = vmatpush2.msra.mxu0 0.0
    %2096 = vmatprep.subr.mxu0 0.0
    %2097 = vmatpush2.msra.mxu0 0.0
    %2098 = vmatprep.subr.mxu0 0.0
    %2099 = vmatpush2.msra.mxu0 0.0
    %2100 = vmatprep.subr.mxu0 0.0
    %2101 = vmatpush2.msra.mxu0 0.0
    %2102 = vmatprep.subr.mxu0 0.0
    %2103 = vmatpush2.msra.mxu0 0.0
    %2104 = vmatprep.subr.mxu0 0.0
    %2105 = vmatpush2.msra.mxu0 0.0
    %2106 = vmatprep.subr.mxu0 0.0
    %2107 = vmatpush2.msra.mxu0 0.0
    %2108 = vmatprep.subr.mxu0 0.0
    %2109 = vmatpush2.msra.mxu0 0.0
    %2110 = vmatprep.subr.mxu0 0.0
    %2111 = vmatpush2.msra.mxu0 0.0
    %2112 = vmatprep.subr.mxu0 0.0
    %2113 = vmatpush2.msra.mxu0 0.0
    %2114 = vmatprep.subr.mxu0 0.0
    %2115 = vmatpush2.msra.mxu0 0.0
    %2116 = vmatprep.mubr.f32.mxu0 0.0
    %2117 = vmatmul.mubr.f32.gmra.mxu0 %v2047
    %v2118 = vpop.f32.mrf.mxu0
    %v2119 = vadd.f32 0.0, %v2118
    %v2120 = vpop.f32.mrf.mxu0
    %2121 = vmatprep.mubr.f32.mxu0 0.0
    %2122 = vmatmul.mubr.f32.gmra.mxu0 %v2050
    %v2123 = vpop.f32.mrf.mxu0
    %v2124 = vadd.f32 0.0, %v2123
    %v2125 = vpop.f32.mrf.mxu0
    %2126 = vdwg.mxu0
    %v2127 = vadd.s32 %v471, 16
    %v2128 = vadd.s32 %v471, 24
    %v2129 = vmul.u32 %v471, 4
    %v2130 = vmul.u32 %v472, 4
    %v2131 = vmul.u32 %v2127, 4
    %v2132 = vmul.u32 %v2128, 4
    %v2133 = vsub.s32 %v474, %v2129
    %v2134 = vsub.s32 %v474, %v2130
    %v2135 = vsub.s32 %v474, %v2131
    %v2136 = vsub.s32 %v474, %v2132
    %vm2137 = vcmp.eq.s32.totalorder %v2133, 0
    %vm2138 = vcmp.eq.s32.totalorder %v2134, 0
    %vm2139 = vcmp.eq.s32.totalorder %v2135, 0
    %vm2140 = vcmp.eq.s32.totalorder %v2136, 0
    %v2141 = vsel %vm2137, 1, 0
    %v2142 = vsel %vm2138, 1, 0
    %v2143 = vsel %vm2139, 1, 0
    %v2144 = vsel %vm2140, 1, 0
    %v2145 = vcvt.s32.f32 %v2141
    %v2146 = vcvt.s32.f32 %v2142
    %v2147 = vcvt.s32.f32 %v2143
    %v2148 = vcvt.s32.f32 %v2144
    %2149 = vmatprep.subr.mxu0 0.0
    %2150 = vmatpush1.msra.mxu0 %v2124
    %2151 = vmatprep.subr.mxu0 0.0
    %2152 = vmatpush1.msra.mxu0 %v2119
    %2153 = vmatprep.subr.mxu0 0.0
    %2154 = vmatpush1.msra.mxu0 %v1916
    %2155 = vmatprep.subr.mxu0 0.0
    %2156 = vmatpush1.msra.mxu0 %v1911
    %2157 = vmatprep.subr.mxu0 0.0
    %2158 = vmatpush1.msra.mxu0 %v1708
    %2159 = vmatprep.subr.mxu0 0.0
    %2160 = vmatpush1.msra.mxu0 %v1703
    %2161 = vmatprep.subr.mxu0 0.0
    %2162 = vmatpush1.msra.mxu0 %v1500
    %2163 = vmatprep.subr.mxu0 0.0
    %2164 = vmatpush1.msra.mxu0 %v1495
    %2165 = vmatprep.subr.mxu0 0.0
    %2166 = vmatpush1.msra.mxu0 %v1292
    %2167 = vmatprep.subr.mxu0 0.0
    %2168 = vmatpush1.msra.mxu0 %v1287
    %2169 = vmatprep.subr.mxu0 0.0
    %2170 = vmatpush1.msra.mxu0 %v1082
    %2171 = vmatprep.subr.mxu0 0.0
    %2172 = vmatpush1.msra.mxu0 %v1077
    %2173 = vmatprep.subr.mxu0 0.0
    %2174 = vmatpush1.msra.mxu0 %v872
    %2175 = vmatprep.subr.mxu0 0.0
    %2176 = vmatpush1.msra.mxu0 %v867
    %2177 = vmatprep.subr.mxu0 0.0
    %2178 = vmatpush1.msra.mxu0 %v674
    %2179 = vmatprep.subr.mxu0 0.0
    %2180 = vmatpush1.msra.mxu0 %v669
    %2181 = vmatprep.subr.mxu0 0.0
    %2182 = vmatpush2.msra.mxu0 0.0
    %2183 = vmatprep.subr.mxu0 0.0
    %2184 = vmatpush2.msra.mxu0 0.0
    %2185 = vmatprep.subr.mxu0 0.0
    %2186 = vmatpush2.msra.mxu0 0.0
    %2187 = vmatprep.subr.mxu0 0.0
    %2188 = vmatpush2.msra.mxu0 0.0
    %2189 = vmatprep.subr.mxu0 0.0
    %2190 = vmatpush2.msra.mxu0 0.0
    %2191 = vmatprep.subr.mxu0 0.0
    %2192 = vmatpush2.msra.mxu0 0.0
    %2193 = vmatprep.subr.mxu0 0.0
    %2194 = vmatpush2.msra.mxu0 0.0
    %2195 = vmatprep.subr.mxu0 0.0
    %2196 = vmatpush2.msra.mxu0 0.0
    %2197 = vmatprep.subr.mxu0 0.0
    %2198 = vmatpush2.msra.mxu0 0.0
    %2199 = vmatprep.subr.mxu0 0.0
    %2200 = vmatpush2.msra.mxu0 0.0
    %2201 = vmatprep.subr.mxu0 0.0
    %2202 = vmatpush2.msra.mxu0 0.0
    %2203 = vmatprep.subr.mxu0 0.0
    %2204 = vmatpush2.msra.mxu0 0.0
    %2205 = vmatprep.subr.mxu0 0.0
    %2206 = vmatpush2.msra.mxu0 0.0
    %2207 = vmatprep.subr.mxu0 0.0
    %2208 = vmatpush2.msra.mxu0 0.0
    %2209 = vmatprep.subr.mxu0 0.0
    %2210 = vmatpush2.msra.mxu0 0.0
    %2211 = vmatprep.subr.mxu0 0.0
    %2212 = vmatpush2.msra.mxu0 0.0
    %2213 = vmatprep.mubr.f32.mxu0 0.0
    %2214 = vmatmul.mubr.f32.gmra.mxu0 %v2145
    %v2215 = vpop.f32.mrf.mxu0
    %v2216 = vadd.f32 0.0, %v2215
    %v2217 = vpop.f32.mrf.mxu0
    %2218 = vmatprep.mubr.f32.mxu0 0.0
    %2219 = vmatmul.mubr.f32.gmra.mxu0 %v2146
    %v2220 = vpop.f32.mrf.mxu0
    %v2221 = vadd.f32 0.0, %v2220
    %v2222 = vpop.f32.mrf.mxu0
    %2223 = vmatprep.mubr.f32.mxu0 0.0
    %2224 = vmatmul.mubr.f32.gmra.mxu0 %v2147
    %v2225 = vpop.f32.mrf.mxu0
    %v2226 = vadd.f32 0.0, %v2225
    %v2227 = vpop.f32.mrf.mxu0
    %2228 = vmatprep.mubr.f32.mxu0 0.0
    %2229 = vmatmul.mubr.f32.gmra.mxu0 %v2148
    %v2230 = vpop.f32.mrf.mxu0
    %v2231 = vadd.f32 0.0, %v2230
    %v2232 = vpop.f32.mrf.mxu0
    %2233 = vdwg.mxu0
    %vm2234 = vcmp.eq.s32.totalorder %v2133, 1
    %vm2235 = vcmp.eq.s32.totalorder %v2134, 1
    %vm2236 = vcmp.eq.s32.totalorder %v2135, 1
    %vm2237 = vcmp.eq.s32.totalorder %v2136, 1
    %v2238 = vsel %vm2234, 1, 0
    %v2239 = vsel %vm2235, 1, 0
    %v2240 = vsel %vm2236, 1, 0
    %v2241 = vsel %vm2237, 1, 0
    %v2242 = vcvt.s32.f32 %v2238
    %v2243 = vcvt.s32.f32 %v2239
    %v2244 = vcvt.s32.f32 %v2240
    %v2245 = vcvt.s32.f32 %v2241
    %2246 = vmatprep.subr.mxu0 0.0
    %2247 = vmatpush1.msra.mxu0 %v2124
    %2248 = vmatprep.subr.mxu0 0.0
    %2249 = vmatpush1.msra.mxu0 %v2119
    %2250 = vmatprep.subr.mxu0 0.0
    %2251 = vmatpush1.msra.mxu0 %v1916
    %2252 = vmatprep.subr.mxu0 0.0
    %2253 = vmatpush1.msra.mxu0 %v1911
    %2254 = vmatprep.subr.mxu0 0.0
    %2255 = vmatpush1.msra.mxu0 %v1708
    %2256 = vmatprep.subr.mxu0 0.0
    %2257 = vmatpush1.msra.mxu0 %v1703
    %2258 = vmatprep.subr.mxu0 0.0
    %2259 = vmatpush1.msra.mxu0 %v1500
    %2260 = vmatprep.subr.mxu0 0.0
    %2261 = vmatpush1.msra.mxu0 %v1495
    %2262 = vmatprep.subr.mxu0 0.0
    %2263 = vmatpush1.msra.mxu0 %v1292
    %2264 = vmatprep.subr.mxu0 0.0
    %2265 = vmatpush1.msra.mxu0 %v1287
    %2266 = vmatprep.subr.mxu0 0.0
    %2267 = vmatpush1.msra.mxu0 %v1082
    %2268 = vmatprep.subr.mxu0 0.0
    %2269 = vmatpush1.msra.mxu0 %v1077
    %2270 = vmatprep.subr.mxu0 0.0
    %2271 = vmatpush1.msra.mxu0 %v872
    %2272 = vmatprep.subr.mxu0 0.0
    %2273 = vmatpush1.msra.mxu0 %v867
    %2274 = vmatprep.subr.mxu0 0.0
    %2275 = vmatpush1.msra.mxu0 %v674
    %2276 = vmatprep.subr.mxu0 0.0
    %2277 = vmatpush1.msra.mxu0 %v669
    %2278 = vmatprep.subr.mxu0 0.0
    %2279 = vmatpush2.msra.mxu0 0.0
    %2280 = vmatprep.subr.mxu0 0.0
    %2281 = vmatpush2.msra.mxu0 0.0
    %2282 = vmatprep.subr.mxu0 0.0
    %2283 = vmatpush2.msra.mxu0 0.0
    %2284 = vmatprep.subr.mxu0 0.0
    %2285 = vmatpush2.msra.mxu0 0.0
    %2286 = vmatprep.subr.mxu0 0.0
    %2287 = vmatpush2.msra.mxu0 0.0
    %2288 = vmatprep.subr.mxu0 0.0
    %2289 = vmatpush2.msra.mxu0 0.0
    %2290 = vmatprep.subr.mxu0 0.0
    %2291 = vmatpush2.msra.mxu0 0.0
    %2292 = vmatprep.subr.mxu0 0.0
    %2293 = vmatpush2.msra.mxu0 0.0
    %2294 = vmatprep.subr.mxu0 0.0
    %2295 = vmatpush2.msra.mxu0 0.0
    %2296 = vmatprep.subr.mxu0 0.0
    %2297 = vmatpush2.msra.mxu0 0.0
    %2298 = vmatprep.subr.mxu0 0.0
    %2299 = vmatpush2.msra.mxu0 0.0
    %2300 = vmatprep.subr.mxu0 0.0
    %2301 = vmatpush2.msra.mxu0 0.0
    %2302 = vmatprep.subr.mxu0 0.0
    %2303 = vmatpush2.msra.mxu0 0.0
    %2304 = vmatprep.subr.mxu0 0.0
    %2305 = vmatpush2.msra.mxu0 0.0
    %2306 = vmatprep.subr.mxu0 0.0
    %2307 = vmatpush2.msra.mxu0 0.0
    %2308 = vmatprep.subr.mxu0 0.0
    %2309 = vmatpush2.msra.mxu0 0.0
    %2310 = vmatprep.mubr.f32.mxu0 0.0
    %2311 = vmatmul.mubr.f32.gmra.mxu0 %v2242
    %v2312 = vpop.f32.mrf.mxu0
    %v2313 = vadd.f32 0.0, %v2312
    %v2314 = vpop.f32.mrf.mxu0
    %2315 = vmatprep.mubr.f32.mxu0 0.0
    %2316 = vmatmul.mubr.f32.gmra.mxu0 %v2243
    %v2317 = vpop.f32.mrf.mxu0
    %v2318 = vadd.f32 0.0, %v2317
    %v2319 = vpop.f32.mrf.mxu0
    %2320 = vmatprep.mubr.f32.mxu0 0.0
    %2321 = vmatmul.mubr.f32.gmra.mxu0 %v2244
    %v2322 = vpop.f32.mrf.mxu0
    %v2323 = vadd.f32 0.0, %v2322
    %v2324 = vpop.f32.mrf.mxu0
    %2325 = vmatprep.mubr.f32.mxu0 0.0
    %2326 = vmatmul.mubr.f32.gmra.mxu0 %v2245
    %v2327 = vpop.f32.mrf.mxu0
    %v2328 = vadd.f32 0.0, %v2327
    %v2329 = vpop.f32.mrf.mxu0
    %2330 = vdwg.mxu0
    %vm2331 = vcmp.eq.s32.totalorder %v2133, 2
    %vm2332 = vcmp.eq.s32.totalorder %v2134, 2
    %vm2333 = vcmp.eq.s32.totalorder %v2135, 2
    %vm2334 = vcmp.eq.s32.totalorder %v2136, 2
    %v2335 = vsel %vm2331, 1, 0
    %v2336 = vsel %vm2332, 1, 0
    %v2337 = vsel %vm2333, 1, 0
    %v2338 = vsel %vm2334, 1, 0
    %v2339 = vcvt.s32.f32 %v2335
    %v2340 = vcvt.s32.f32 %v2336
    %v2341 = vcvt.s32.f32 %v2337
    %v2342 = vcvt.s32.f32 %v2338
    %2343 = vmatprep.subr.mxu0 0.0
    %2344 = vmatpush1.msra.mxu0 %v2124
    %2345 = vmatprep.subr.mxu0 0.0
    %2346 = vmatpush1.msra.mxu0 %v2119
    %2347 = vmatprep.subr.mxu0 0.0
    %2348 = vmatpush1.msra.mxu0 %v1916
    %2349 = vmatprep.subr.mxu0 0.0
    %2350 = vmatpush1.msra.mxu0 %v1911
    %2351 = vmatprep.subr.mxu0 0.0
    %2352 = vmatpush1.msra.mxu0 %v1708
    %2353 = vmatprep.subr.mxu0 0.0
    %2354 = vmatpush1.msra.mxu0 %v1703
    %2355 = vmatprep.subr.mxu0 0.0
    %2356 = vmatpush1.msra.mxu0 %v1500
    %2357 = vmatprep.subr.mxu0 0.0
    %2358 = vmatpush1.msra.mxu0 %v1495
    %2359 = vmatprep.subr.mxu0 0.0
    %2360 = vmatpush1.msra.mxu0 %v1292
    %2361 = vmatprep.subr.mxu0 0.0
    %2362 = vmatpush1.msra.mxu0 %v1287
    %2363 = vmatprep.subr.mxu0 0.0
    %2364 = vmatpush1.msra.mxu0 %v1082
    %2365 = vmatprep.subr.mxu0 0.0
    %2366 = vmatpush1.msra.mxu0 %v1077
    %2367 = vmatprep.subr.mxu0 0.0
    %2368 = vmatpush1.msra.mxu0 %v872
    %2369 = vmatprep.subr.mxu0 0.0
    %2370 = vmatpush1.msra.mxu0 %v867
    %2371 = vmatprep.subr.mxu0 0.0
    %2372 = vmatpush1.msra.mxu0 %v674
    %2373 = vmatprep.subr.mxu0 0.0
    %2374 = vmatpush1.msra.mxu0 %v669
    %2375 = vmatprep.subr.mxu0 0.0
    %2376 = vmatpush2.msra.mxu0 0.0
    %2377 = vmatprep.subr.mxu0 0.0
    %2378 = vmatpush2.msra.mxu0 0.0
    %2379 = vmatprep.subr.mxu0 0.0
    %2380 = vmatpush2.msra.mxu0 0.0
    %2381 = vmatprep.subr.mxu0 0.0
    %2382 = vmatpush2.msra.mxu0 0.0
    %2383 = vmatprep.subr.mxu0 0.0
    %2384 = vmatpush2.msra.mxu0 0.0
    %2385 = vmatprep.subr.mxu0 0.0
    %2386 = vmatpush2.msra.mxu0 0.0
    %2387 = vmatprep.subr.mxu0 0.0
    %2388 = vmatpush2.msra.mxu0 0.0
    %2389 = vmatprep.subr.mxu0 0.0
    %2390 = vmatpush2.msra.mxu0 0.0
    %2391 = vmatprep.subr.mxu0 0.0
    %2392 = vmatpush2.msra.mxu0 0.0
    %2393 = vmatprep.subr.mxu0 0.0
    %2394 = vmatpush2.msra.mxu0 0.0
    %2395 = vmatprep.subr.mxu0 0.0
    %2396 = vmatpush2.msra.mxu0 0.0
    %2397 = vmatprep.subr.mxu0 0.0
    %2398 = vmatpush2.msra.mxu0 0.0
    %2399 = vmatprep.subr.mxu0 0.0
    %2400 = vmatpush2.msra.mxu0 0.0
    %2401 = vmatprep.subr.mxu0 0.0
    %2402 = vmatpush2.msra.mxu0 0.0
    %2403 = vmatprep.subr.mxu0 0.0
    %2404 = vmatpush2.msra.mxu0 0.0
    %2405 = vmatprep.subr.mxu0 0.0
    %2406 = vmatpush2.msra.mxu0 0.0
    %2407 = vmatprep.mubr.f32.mxu0 0.0
    %2408 = vmatmul.mubr.f32.gmra.mxu0 %v2339
    %v2409 = vpop.f32.mrf.mxu0
    %v2410 = vadd.f32 0.0, %v2409
    %v2411 = vpop.f32.mrf.mxu0
    %2412 = vmatprep.mubr.f32.mxu0 0.0
    %2413 = vmatmul.mubr.f32.gmra.mxu0 %v2340
    %v2414 = vpop.f32.mrf.mxu0
    %v2415 = vadd.f32 0.0, %v2414
    %v2416 = vpop.f32.mrf.mxu0
    %2417 = vmatprep.mubr.f32.mxu0 0.0
    %2418 = vmatmul.mubr.f32.gmra.mxu0 %v2341
    %v2419 = vpop.f32.mrf.mxu0
    %v2420 = vadd.f32 0.0, %v2419
    %v2421 = vpop.f32.mrf.mxu0
    %2422 = vmatprep.mubr.f32.mxu0 0.0
    %2423 = vmatmul.mubr.f32.gmra.mxu0 %v2342
    %v2424 = vpop.f32.mrf.mxu0
    %v2425 = vadd.f32 0.0, %v2424
    %v2426 = vpop.f32.mrf.mxu0
    %2427 = vdwg.mxu0
    %vm2428 = vcmp.eq.s32.totalorder %v2133, 3
    %vm2429 = vcmp.eq.s32.totalorder %v2134, 3
    %vm2430 = vcmp.eq.s32.totalorder %v2135, 3
    %vm2431 = vcmp.eq.s32.totalorder %v2136, 3
    %v2432 = vsel %vm2428, 1, 0
    %v2433 = vsel %vm2429, 1, 0
    %v2434 = vsel %vm2430, 1, 0
    %v2435 = vsel %vm2431, 1, 0
    %v2436 = vcvt.s32.f32 %v2432
    %v2437 = vcvt.s32.f32 %v2433
    %v2438 = vcvt.s32.f32 %v2434
    %v2439 = vcvt.s32.f32 %v2435
    %2440 = vmatprep.subr.mxu0 0.0
    %2441 = vmatpush1.msra.mxu0 %v2124
    %2442 = vmatprep.subr.mxu0 0.0
    %2443 = vmatpush1.msra.mxu0 %v2119
    %2444 = vmatprep.subr.mxu0 0.0
    %2445 = vmatpush1.msra.mxu0 %v1916
    %2446 = vmatprep.subr.mxu0 0.0
    %2447 = vmatpush1.msra.mxu0 %v1911
    %2448 = vmatprep.subr.mxu0 0.0
    %2449 = vmatpush1.msra.mxu0 %v1708
    %2450 = vmatprep.subr.mxu0 0.0
    %2451 = vmatpush1.msra.mxu0 %v1703
    %2452 = vmatprep.subr.mxu0 0.0
    %2453 = vmatpush1.msra.mxu0 %v1500
    %2454 = vmatprep.subr.mxu0 0.0
    %2455 = vmatpush1.msra.mxu0 %v1495
    %2456 = vmatprep.subr.mxu0 0.0
    %2457 = vmatpush1.msra.mxu0 %v1292
    %2458 = vmatprep.subr.mxu0 0.0
    %2459 = vmatpush1.msra.mxu0 %v1287
    %2460 = vmatprep.subr.mxu0 0.0
    %2461 = vmatpush1.msra.mxu0 %v1082
    %2462 = vmatprep.subr.mxu0 0.0
    %2463 = vmatpush1.msra.mxu0 %v1077
    %2464 = vmatprep.subr.mxu0 0.0
    %2465 = vmatpush1.msra.mxu0 %v872
    %2466 = vmatprep.subr.mxu0 0.0
    %2467 = vmatpush1.msra.mxu0 %v867
    %2468 = vmatprep.subr.mxu0 0.0
    %2469 = vmatpush1.msra.mxu0 %v674
    %2470 = vmatprep.subr.mxu0 0.0
    %2471 = vmatpush1.msra.mxu0 %v669
    %2472 = vmatprep.subr.mxu0 0.0
    %2473 = vmatpush2.msra.mxu0 0.0
    %2474 = vmatprep.subr.mxu0 0.0
    %2475 = vmatpush2.msra.mxu0 0.0
    %2476 = vmatprep.subr.mxu0 0.0
    %2477 = vmatpush2.msra.mxu0 0.0
    %2478 = vmatprep.subr.mxu0 0.0
    %2479 = vmatpush2.msra.mxu0 0.0
    %2480 = vmatprep.subr.mxu0 0.0
    %2481 = vmatpush2.msra.mxu0 0.0
    %2482 = vmatprep.subr.mxu0 0.0
    %2483 = vmatpush2.msra.mxu0 0.0
    %2484 = vmatprep.subr.mxu0 0.0
    %2485 = vmatpush2.msra.mxu0 0.0
    %2486 = vmatprep.subr.mxu0 0.0
    %2487 = vmatpush2.msra.mxu0 0.0
    %2488 = vmatprep.subr.mxu0 0.0
    %2489 = vmatpush2.msra.mxu0 0.0
    %2490 = vmatprep.subr.mxu0 0.0
    %2491 = vmatpush2.msra.mxu0 0.0
    %2492 = vmatprep.subr.mxu0 0.0
    %2493 = vmatpush2.msra.mxu0 0.0
    %2494 = vmatprep.subr.mxu0 0.0
    %2495 = vmatpush2.msra.mxu0 0.0
    %2496 = vmatprep.subr.mxu0 0.0
    %2497 = vmatpush2.msra.mxu0 0.0
    %2498 = vmatprep.subr.mxu0 0.0
    %2499 = vmatpush2.msra.mxu0 0.0
    %2500 = vmatprep.subr.mxu0 0.0
    %2501 = vmatpush2.msra.mxu0 0.0
    %2502 = vmatprep.subr.mxu0 0.0
    %2503 = vmatpush2.msra.mxu0 0.0
    %2504 = vmatprep.mubr.f32.mxu0 0.0
    %2505 = vmatmul.mubr.f32.gmra.mxu0 %v2436
    %v2506 = vpop.f32.mrf.mxu0
    %v2507 = vadd.f32 0.0, %v2506
    %v2508 = vpop.f32.mrf.mxu0
    %2509 = vmatprep.mubr.f32.mxu0 0.0
    %2510 = vmatmul.mubr.f32.gmra.mxu0 %v2437
    %v2511 = vpop.f32.mrf.mxu0
    %v2512 = vadd.f32 0.0, %v2511
    %v2513 = vpop.f32.mrf.mxu0
    %2514 = vmatprep.mubr.f32.mxu0 0.0
    %2515 = vmatmul.mubr.f32.gmra.mxu0 %v2438
    %v2516 = vpop.f32.mrf.mxu0
    %v2517 = vadd.f32 0.0, %v2516
    %v2518 = vpop.f32.mrf.mxu0
    %2519 = vmatprep.mubr.f32.mxu0 0.0
    %2520 = vmatmul.mubr.f32.gmra.mxu0 %v2439
    %v2521 = vpop.f32.mrf.mxu0
    %v2522 = vadd.f32 0.0, %v2521
    %v2523 = vpop.f32.mrf.mxu0
    %2524 = vdwg.mxu0
    %2529 = vrot.lane.b32.xlu0 %v2313, 32
    %v2530 = vpop.permute.xlu0 %2529
    %2531 = vrot.lane.b32.xlu0 %v2318, 32
    %v2532 = vpop.permute.xlu0 %2531
    %2533 = vrot.lane.b32.xlu0 %v2323, 32
    %v2534 = vpop.permute.xlu0 %2533
    %2535 = vrot.lane.b32.xlu0 %v2328, 32
    %v2536 = vpop.permute.xlu0 %2535
    %2545 = vrot.lane.b32.xlu0 %v2410, 64
    %v2546 = vpop.permute.xlu0 %2545
    %2547 = vrot.lane.b32.xlu0 %v2415, 64
    %v2548 = vpop.permute.xlu0 %2547
    %2549 = vrot.lane.b32.xlu0 %v2420, 64
    %v2550 = vpop.permute.xlu0 %2549
    %2551 = vrot.lane.b32.xlu0 %v2425, 64
    %v2552 = vpop.permute.xlu0 %2551
    %2561 = vrot.lane.b32.xlu0 %v2507, 96
    %v2562 = vpop.permute.xlu0 %2561
    %2563 = vrot.lane.b32.xlu0 %v2512, 96
    %v2564 = vpop.permute.xlu0 %2563
    %2565 = vrot.lane.b32.xlu0 %v2517, 96
    %v2566 = vpop.permute.xlu0 %2565
    %2567 = vrot.lane.b32.xlu0 %v2522, 96
    %v2568 = vpop.permute.xlu0 %2567
    %v2573 = vsel %vm477, %v2216, %v2530
    %v2574 = vsel %vm477, %v2221, %v2532
    %v2575 = vsel %vm477, %v2226, %v2534
    %v2576 = vsel %vm477, %v2231, %v2536
    %vm2577 = vcmask 523264
    %v2578 = vsel %vm2577, %v2573, %v2546
    %v2579 = vsel %vm2577, %v2574, %v2548
    %v2580 = vsel %vm2577, %v2575, %v2550
    %v2581 = vsel %vm2577, %v2576, %v2552
    %vm2582 = vcmask 785408
    %v2583 = vsel %vm2582, %v2578, %v2562
    %v2584 = vsel %vm2582, %v2579, %v2564
    %v2585 = vsel %vm2582, %v2580, %v2566
    %v2586 = vsel %vm2582, %v2581, %v2568
    %v2587 = vld [vmem:[#allocation13] sm:$0xff]
    %v2588 = vld [vmem:[#allocation13 + $0x8] sm:$0xff]
    %v2589 = vld [vmem:[#allocation13 + $0x10] sm:$0xff]
    %v2590 = vld [vmem:[#allocation13 + $0x18] sm:$0xff]
    %v2591 = vld [vmem:[#allocation13 + $0x20] sm:$0xff]
    %v2592 = vld [vmem:[#allocation13 + $0x28] sm:$0xff]
    %v2593 = vld [vmem:[#allocation13 + $0x30] sm:$0xff]
    %v2594 = vld [vmem:[#allocation13 + $0x38] sm:$0xff]
    %v2595 = vld [vmem:[#allocation13 + $0x40] sm:$0xff]
    %v2596 = vld [vmem:[#allocation13 + $0x48] sm:$0xff]
    %v2597 = vld [vmem:[#allocation13 + $0x50] sm:$0xff]
    %v2598 = vld [vmem:[#allocation13 + $0x58] sm:$0xff]
    %v2599 = vld [vmem:[#allocation13 + $0x60] sm:$0xff]
    %v2600 = vld [vmem:[#allocation13 + $0x68] sm:$0xff]
    %v2601 = vld [vmem:[#allocation13 + $0x70] sm:$0xff]
    %v2602 = vld [vmem:[#allocation13 + $0x78] sm:$0xff]
    %v2603 = vld [vmem:[%s10] sm:$0x1]
    %v2605 = vlaneseq
    %v2606 = vshrl.u32 %v2605, 7
    %v2607 = vsub.s32 0, %v2606
    %v2608 = vrot.slane %v2603, %v2607
    %2610 = vmatprep.subr.mxu0 0.0
    %2611 = vmatpush1.xpose.msra.mxu0 %v2602
    %2612 = vmatprep.subr.mxu0 0.0
    %2613 = vmatpush1.xpose.msra.mxu0 %v2601
    %2614 = vmatprep.subr.mxu0 0.0
    %2615 = vmatpush1.xpose.msra.mxu0 %v2600
    %2616 = vmatprep.subr.mxu0 0.0
    %2617 = vmatpush1.xpose.msra.mxu0 %v2599
    %2618 = vmatprep.subr.mxu0 0.0
    %2619 = vmatpush1.xpose.msra.mxu0 %v2598
    %2620 = vmatprep.subr.mxu0 0.0
    %2621 = vmatpush1.xpose.msra.mxu0 %v2597
    %2622 = vmatprep.subr.mxu0 0.0
    %2623 = vmatpush1.xpose.msra.mxu0 %v2596
    %2624 = vmatprep.subr.mxu0 0.0
    %2625 = vmatpush1.xpose.msra.mxu0 %v2595
    %2626 = vmatprep.subr.mxu0 0.0
    %2627 = vmatpush1.xpose.msra.mxu0 %v2594
    %2628 = vmatprep.subr.mxu0 0.0
    %2629 = vmatpush1.xpose.msra.mxu0 %v2593
    %2630 = vmatprep.subr.mxu0 0.0
    %2631 = vmatpush1.xpose.msra.mxu0 %v2592
    %2632 = vmatprep.subr.mxu0 0.0
    %2633 = vmatpush1.xpose.msra.mxu0 %v2591
    %2634 = vmatprep.subr.mxu0 0.0
    %2635 = vmatpush1.xpose.msra.mxu0 %v2590
    %2636 = vmatprep.subr.mxu0 0.0
    %2637 = vmatpush1.xpose.msra.mxu0 %v2589
    %2638 = vmatprep.subr.mxu0 0.0
    %2639 = vmatpush1.xpose.msra.mxu0 %v2588
    %2640 = vmatprep.subr.mxu0 0.0
    %2641 = vmatpush1.xpose.msra.mxu0 %v2587
    %2642 = vmatprep.subr.mxu0 0.0
    %2643 = vmatpush2.xpose.msra.mxu0 0.0
    %2644 = vmatprep.subr.mxu0 0.0
    %2645 = vmatpush2.xpose.msra.mxu0 0.0
    %2646 = vmatprep.subr.mxu0 0.0
    %2647 = vmatpush2.xpose.msra.mxu0 0.0
    %2648 = vmatprep.subr.mxu0 0.0
    %2649 = vmatpush2.xpose.msra.mxu0 0.0
    %2650 = vmatprep.subr.mxu0 0.0
    %2651 = vmatpush2.xpose.msra.mxu0 0.0
    %2652 = vmatprep.subr.mxu0 0.0
    %2653 = vmatpush2.xpose.msra.mxu0 0.0
    %2654 = vmatprep.subr.mxu0 0.0
    %2655 = vmatpush2.xpose.msra.mxu0 0.0
    %2656 = vmatprep.subr.mxu0 0.0
    %2657 = vmatpush2.xpose.msra.mxu0 0.0
    %2658 = vmatprep.subr.mxu0 0.0
    %2659 = vmatpush2.xpose.msra.mxu0 0.0
    %2660 = vmatprep.subr.mxu0 0.0
    %2661 = vmatpush2.xpose.msra.mxu0 0.0
    %2662 = vmatprep.subr.mxu0 0.0
    %2663 = vmatpush2.xpose.msra.mxu0 0.0
    %2664 = vmatprep.subr.mxu0 0.0
    %2665 = vmatpush2.xpose.msra.mxu0 0.0
    %2666 = vmatprep.subr.mxu0 0.0
    %2667 = vmatpush2.xpose.msra.mxu0 0.0
    %2668 = vmatprep.subr.mxu0 0.0
    %2669 = vmatpush2.xpose.msra.mxu0 0.0
    %2670 = vmatprep.subr.mxu0 0.0
    %2671 = vmatpush2.xpose.msra.mxu0 0.0
    %2672 = vmatprep.subr.mxu0 0.0
    %2673 = vmatpush2.xpose.msra.mxu0 0.0
    %2674 = vmatprep.mubr.f32.mxu0 0.0
    %2675 = vmatmul.mubr.f32.gmra.mxu0 %v2583
    %v2676 = vpop.f32.mrf.mxu0
    %v2677 = vadd.f32 %v2608, %v2676
    %v2678 = vpop.f32.mrf.mxu0
    %2679 = vmatprep.mubr.f32.mxu0 0.0
    %2680 = vmatmul.mubr.f32.gmra.mxu0 %v2584
    %v2681 = vpop.f32.mrf.mxu0
    %v2682 = vadd.f32 %v2608, %v2681
    %v2683 = vpop.f32.mrf.mxu0
    %2684 = vmatprep.mubr.f32.mxu0 0.0
    %2685 = vmatmul.mubr.f32.gmra.mxu0 %v2585
    %v2686 = vpop.f32.mrf.mxu0
    %v2687 = vadd.f32 %v2608, %v2686
    %v2688 = vpop.f32.mrf.mxu0
    %2689 = vmatprep.mubr.f32.mxu0 0.0
    %2690 = vmatmul.mubr.f32.gmra.mxu0 %v2586
    %v2691 = vpop.f32.mrf.mxu0
    %v2692 = vadd.f32 %v2608, %v2691
    %v2693 = vpop.f32.mrf.mxu0
    %2694 = vdwg.mxu0
    %2695 = vst [vmem:[#allocation14] sm:$0xff] %v2677
    %2696 = vst [vmem:[#allocation14 + $0x8] sm:$0xff] %v2682
    %2697 = vst [vmem:[#allocation14 + $0x10] sm:$0xff] %v2687
    %2698 = vst [vmem:[#allocation14 + $0x18] sm:$0xff] %v2692
    // Predicated region
    $region74: #{masked_mha_forward.1} parent=1 // pred_check
      _
    $region75: #{masked_mha_forward.1} parent=1 // pred_check_branch
      %2700 = sbr.rel (0) target = $region77
    $region76: #{masked_mha_forward.1} parent=1 // pred_region
      %s2702 = ssub.s32 512, 512
      %2703 = vsyncadd [#allocation4], %s2702
      %s2704 = sshll.u32 [#allocation14], 4
      %s2705 = int_to_ptr.vmem [resolvable:$true] %s2704
      %2710 = dma.vmem_to_hbm [thread:$0]  %s2705, 512, %s11, [#allocation4], 128, 128, 8
    $region77: #{masked_mha_forward.1} parent=1 // pred_fallthru
      _
    // Predicated region
    $region78: #{masked_mha_forward.1} parent=1 // pred_check
      _
    $region79: #{masked_mha_forward.1} parent=1 // pred_check_branch
      %2712 = sbr.rel (0) target = $region81
    $region80: #{masked_mha_forward.1} parent=1 // pred_region
      %2713 = dma.done [#allocation4], 512
    $region81: #{masked_mha_forward.1} parent=1 // pred_fallthru
      _
    %2714 = vsyncpa [#allocation3], 1
    %2715 = vsyncpa [#allocation6], 1
    %2716 = vsyncpa [#allocation9], 1
    %2717 = vsyncpa [#allocation12], 1
    %2718 = vsyncpa [#allocation4], 1

</llo_original>
